<compile_context>
chip_gen: v7x
topology: tpu7x:2x2x1
jax: 0.10.0
libtpu: 0.0.40
codegen_flags: <defaults>
</compile_context>

<pallas_src>
import math
import jax
import jax.numpy as jnp
from jax.experimental import pallas as pl
from jax.experimental.pallas import tpu as pltpu

# Small, lane-dense BERT-style config (output_dim == H).
B, L, H = 2, 8, 128
NUM_HEADS = 4
HEAD_DIM = H // NUM_HEADS          # 32
INTERMEDIATE = 4 * H               # 512
NUM_LAYERS = 2
VOCAB = 100
MAX_POS = 64
EPS = 1e-12
MM_DTYPE = jnp.bfloat16            # MXU operand dtype; accumulation stays f32


def _layernorm(x, g, b):
    mu = jnp.mean(x, axis=-1, keepdims=True)
    var = jnp.mean(jnp.square(x - mu), axis=-1, keepdims=True)
    return (x - mu) * jax.lax.rsqrt(var + EPS) * g + b


# ----------------------------- Pallas kernel -------------------------------

def fused_encoder_kernel(emb_ref, bias_ref, eg_ref, eb_ref,
                         wq_ref, bq_ref, wk_ref, bk_ref, wv_ref, bv_ref,
                         wo_ref, bo_ref, ln1_g_ref, ln1_b_ref,
                         w1_ref, b1_ref, w2_ref, b2_ref, ln2_g_ref, ln2_b_ref,
                         o_ref, x_state):
    layer = pl.program_id(0)

    # Embedding layer-norm, only on the first layer iteration.
    @pl.when(layer == 0)
    def _():
        x_state[...] = _layernorm(emb_ref[...], eg_ref[...], eb_ref[...])

    x = x_state[...]               # [B*L, H] f32 (resident across layers)
    bias_all = bias_ref[...]       # [B, L]   f32 additive key mask bias

    wq = wq_ref[0]                 # [NH, H, HD]  bf16 (head-major layout)
    wk = wk_ref[0]
    wv = wv_ref[0]
    wo = wo_ref[0]                 # [NH, HD, H]  bf16
    bq = bq_ref[0]                 # [NH, 1, HD]  f32
    bk = bk_ref[0]
    bv = bv_ref[0]

    scale = 1.0 / math.sqrt(HEAD_DIM)

    # Attention: static loop over batch (B == 2); all heads batched in one
    # dot_general per projection (batch-leading, contract-last patterns only,
    # so no in-kernel transposes / lane shuffles).
    per_batch = []
    for b in range(B):
        xb = x[b * L:(b + 1) * L, :]                                 # [L, H]
        xb_bc = jnp.broadcast_to(xb.astype(MM_DTYPE)[None],
                                 (NUM_HEADS, L, H))                  # [NH, L, H]

        qh = jnp.einsum('nlh,nhd->nld', xb_bc, wq,
                        preferred_element_type=jnp.float32) + bq     # [NH, L, HD]
        kh = jnp.einsum('nlh,nhd->nld', xb_bc, wk,
                        preferred_element_type=jnp.float32) + bk
        vh = jnp.einsum('nlh,nhd->nld', xb_bc, wv,
                        preferred_element_type=jnp.float32) + bv

        s = jnp.einsum('nld,nmd->nlm', qh.astype(MM_DTYPE), kh.astype(MM_DTYPE),
                       preferred_element_type=jnp.float32) * scale   # [NH, L, L]
        s = s + bias_all[b:b + 1, :][None, :, :]                     # mask keys
        s = s - jnp.max(s, axis=-1, keepdims=True)
        e = jnp.exp(s)
        p = e * pl.reciprocal(jnp.sum(e, axis=-1, keepdims=True), approx=True)

        ctx = jnp.einsum('nlm,nmd->nld', p.astype(MM_DTYPE), vh.astype(MM_DTYPE),
                         preferred_element_type=jnp.float32)         # [NH, L, HD]
        ob = jnp.einsum('nld,ndk->nlk', ctx.astype(MM_DTYPE), wo,
                        preferred_element_type=jnp.float32)          # [NH, L, H]
        per_batch.append(jnp.sum(ob, axis=0))                        # [L, H]

    attn = jnp.concatenate(per_batch, axis=0) + bo_ref[0]            # [B*L, H]
    h1 = _layernorm(x + attn, ln1_g_ref[0], ln1_b_ref[0])

    ff = jnp.dot(h1.astype(MM_DTYPE), w1_ref[0],
                 preferred_element_type=jnp.float32) + b1_ref[0]     # [B*L, 4H]
    # TODO(synk): HF BERT uses exact erf-GELU; tanh approximation used here.
    ff = jax.nn.gelu(ff, approximate=True)
    ff = jnp.dot(ff.astype(MM_DTYPE), w2_ref[0],
                 preferred_element_type=jnp.float32) + b2_ref[0]     # [B*L, H]

    out = _layernorm(h1 + ff, ln2_g_ref[0], ln2_b_ref[0])
    x_state[...] = out                                               # carry

    @pl.when(layer == pl.num_programs(0) - 1)
    def _():
        o_ref[...] = out


# ------------------------------ JAX wrappers --------------------------------

def _full_spec(shape):
    nd = len(shape)
    return pl.BlockSpec(shape, lambda l, _n=nd: (0,) * _n)


def _stack_spec(arr):
    nd = arr.ndim
    block = (1,) + arr.shape[1:]
    return pl.BlockSpec(block, lambda l, _n=nd: (l,) + (0,) * (_n - 1))


def document_encoder_pallas(emb_flat, bias, params):
    stacked = params["stacked"]
    args = [emb_flat, bias, params["emb_ln_g"], params["emb_ln_b"], *stacked]
    in_specs = ([_full_spec(emb_flat.shape), _full_spec(bias.shape),
                 _full_spec(params["emb_ln_g"].shape),
                 _full_spec(params["emb_ln_b"].shape)]
                + [_stack_spec(a) for a in stacked])
    out = pl.pallas_call(
        fused_encoder_kernel,
        out_shape=jax.ShapeDtypeStruct((B * L, H), jnp.float32),
        grid=(NUM_LAYERS,),
        in_specs=in_specs,
        out_specs=_full_spec((B * L, H)),
        scratch_shapes=[pltpu.VMEM((B * L, H), jnp.float32)],  # carried x state
        compiler_params=pltpu.CompilerParams(
            dimension_semantics=("arbitrary",),
            vmem_limit_bytes=32 * 1024 * 1024),
    )(*args)
    return out.reshape(B, L, H)


def init_params(key):
    def w(k, shape, scale=0.02):
        return (scale * jax.random.normal(k, shape)).astype(jnp.float32)

    keys = jax.random.split(key, 3 + NUM_LAYERS)
    params = {
        "word_emb": w(keys[0], (VOCAB, H)),
        "pos_emb": w(keys[1], (MAX_POS, H)),
        "ttype_emb": w(keys[2], (2, H)),
        "emb_ln_g": jnp.ones((1, H), jnp.float32),
        "emb_ln_b": jnp.zeros((1, H), jnp.float32),
    }

    wq_l, bq_l, wk_l, bk_l, wv_l, bv_l = [], [], [], [], [], []
    wo_l, bo_l, ln1g_l, ln1b_l = [], [], [], []
    w1_l, b1_l, w2_l, b2_l, ln2g_l, ln2b_l = [], [], [], [], [], []

    for li in range(NUM_LAYERS):
        lk = jax.random.split(keys[3 + li], 6)
        wq = w(lk[0], (H, H)); wk = w(lk[1], (H, H))
        wv = w(lk[2], (H, H)); wo = w(lk[3], (H, H))
        # Head-major weight layouts so the kernel can batch heads in one dot.
        wq_l.append(wq.reshape(H, NUM_HEADS, HEAD_DIM).transpose(1, 0, 2))
        wk_l.append(wk.reshape(H, NUM_HEADS, HEAD_DIM).transpose(1, 0, 2))
        wv_l.append(wv.reshape(H, NUM_HEADS, HEAD_DIM).transpose(1, 0, 2))
        wo_l.append(wo.reshape(NUM_HEADS, HEAD_DIM, H))
        zero_hd = jnp.zeros((NUM_HEADS, 1, HEAD_DIM), jnp.float32)
        bq_l.append(zero_hd); bk_l.append(zero_hd); bv_l.append(zero_hd)
        bo_l.append(jnp.zeros((1, H), jnp.float32))
        ln1g_l.append(jnp.ones((1, H), jnp.float32))
        ln1b_l.append(jnp.zeros((1, H), jnp.float32))
        w1_l.append(w(lk[4], (H, INTERMEDIATE)))
        b1_l.append(jnp.zeros((1, INTERMEDIATE), jnp.float32))
        w2_l.append(w(lk[5], (INTERMEDIATE, H)))
        b2_l.append(jnp.zeros((1, H), jnp.float32))
        ln2g_l.append(jnp.ones((1, H), jnp.float32))
        ln2b_l.append(jnp.zeros((1, H), jnp.float32))

    def stack(lst, dtype=jnp.float32):
        return jnp.stack(lst, axis=0).astype(dtype)

    params["stacked"] = (
        stack(wq_l, MM_DTYPE), stack(bq_l),
        stack(wk_l, MM_DTYPE), stack(bk_l),
        stack(wv_l, MM_DTYPE), stack(bv_l),
        stack(wo_l, MM_DTYPE), stack(bo_l),
        stack(ln1g_l), stack(ln1b_l),
        stack(w1_l, MM_DTYPE), stack(b1_l),
        stack(w2_l, MM_DTYPE), stack(b2_l),
        stack(ln2g_l), stack(ln2b_l),
    )
    return params


def document_encoder_forward(input_ids, attention_mask, params):
    """Returns sequence_output of shape [B, L, H] (== output_dim)."""
    # Embedding gathers are plain-JAX glue; token_type_ids assumed all-zero.
    emb = (params["word_emb"][input_ids]
           + params["pos_emb"][: input_ids.shape[1]][None, :, :]
           + params["ttype_emb"][0][None, None, :]).astype(jnp.float32)
    emb_flat = emb.reshape(B * L, H)
    # Additive attention bias: 0 where attended, -1e9 where masked.  [B, L]
    bias = (1.0 - attention_mask.astype(jnp.float32)) * -1e9
    return document_encoder_pallas(emb_flat, bias, params)


if __name__ == "__main__":
    key = jax.random.PRNGKey(0)
    pkey, dkey = jax.random.split(key)
    params = init_params(pkey)

    input_ids = jax.random.randint(dkey, (B, L), 0, VOCAB, dtype=jnp.int32)
    attention_mask = jnp.ones((B, L), dtype=jnp.float32)

    out = document_encoder_forward(input_ids, attention_mask, params)
    out = jax.block_until_ready(out)
    assert out.shape == (B, L, H) and out.dtype == jnp.float32
    assert bool(jnp.all(jnp.isfinite(out)))
    print("KERNEL_OK")
</pallas_src>

<mosaic_0001>
module attributes {stable_mosaic.version = 11 : i64} {
  func.func @fused_encoder_kernel(%arg0: i32, %arg1: memref<16x128xf32, #tpu.memory_space<vmem>>, %arg2: memref<2x8xf32, #tpu.memory_space<vmem>>, %arg3: memref<1x128xf32, #tpu.memory_space<vmem>>, %arg4: memref<1x128xf32, #tpu.memory_space<vmem>>, %arg5: memref<1x4x128x32xbf16, #tpu.memory_space<vmem>>, %arg6: memref<1x4x1x32xf32, #tpu.memory_space<vmem>>, %arg7: memref<1x4x128x32xbf16, #tpu.memory_space<vmem>>, %arg8: memref<1x4x1x32xf32, #tpu.memory_space<vmem>>, %arg9: memref<1x4x128x32xbf16, #tpu.memory_space<vmem>>, %arg10: memref<1x4x1x32xf32, #tpu.memory_space<vmem>>, %arg11: memref<1x4x32x128xbf16, #tpu.memory_space<vmem>>, %arg12: memref<1x1x128xf32, #tpu.memory_space<vmem>>, %arg13: memref<1x1x128xf32, #tpu.memory_space<vmem>>, %arg14: memref<1x1x128xf32, #tpu.memory_space<vmem>>, %arg15: memref<1x128x512xbf16, #tpu.memory_space<vmem>>, %arg16: memref<1x1x512xf32, #tpu.memory_space<vmem>>, %arg17: memref<1x512x128xbf16, #tpu.memory_space<vmem>>, %arg18: memref<1x1x128xf32, #tpu.memory_space<vmem>>, %arg19: memref<1x1x128xf32, #tpu.memory_space<vmem>>, %arg20: memref<1x1x128xf32, #tpu.memory_space<vmem>>, %arg21: memref<16x128xf32, #tpu.memory_space<vmem>>, %arg22: memref<16x128xf32, #tpu.memory_space<vmem>>) attributes {dimension_semantics = [#tpu.dimension_semantics<arbitrary>], iteration_bounds = array<i64: 2>, scalar_prefetch = 0 : i64, scratch_operands = 1 : i64, tpu.core_type = #tpu.core_type<tc>, window_params = [{pipeline_mode = #tpu.pipeline_mode<synchronous>, transform_indices = @transform_0, window_bounds = array<i64: 16, 128>}, {pipeline_mode = #tpu.pipeline_mode<synchronous>, transform_indices = @transform_1, window_bounds = array<i64: 2, 8>}, {pipeline_mode = #tpu.pipeline_mode<synchronous>, transform_indices = @transform_2, window_bounds = array<i64: 1, 128>}, {pipeline_mode = #tpu.pipeline_mode<synchronous>, transform_indices = @transform_3, window_bounds = array<i64: 1, 128>}, {transform_indices = @transform_4, window_bounds = array<i64: 1, 4, 128, 32>}, {transform_indices = @transform_5, window_bounds = array<i64: 1, 4, 1, 32>}, {transform_indices = @transform_6, window_bounds = array<i64: 1, 4, 128, 32>}, {transform_indices = @transform_7, window_bounds = array<i64: 1, 4, 1, 32>}, {transform_indices = @transform_8, window_bounds = array<i64: 1, 4, 128, 32>}, {transform_indices = @transform_9, window_bounds = array<i64: 1, 4, 1, 32>}, {transform_indices = @transform_10, window_bounds = array<i64: 1, 4, 32, 128>}, {transform_indices = @transform_11, window_bounds = array<i64: 1, 1, 128>}, {transform_indices = @transform_12, window_bounds = array<i64: 1, 1, 128>}, {transform_indices = @transform_13, window_bounds = array<i64: 1, 1, 128>}, {transform_indices = @transform_14, window_bounds = array<i64: 1, 128, 512>}, {transform_indices = @transform_15, window_bounds = array<i64: 1, 1, 512>}, {transform_indices = @transform_16, window_bounds = array<i64: 1, 512, 128>}, {transform_indices = @transform_17, window_bounds = array<i64: 1, 1, 128>}, {transform_indices = @transform_18, window_bounds = array<i64: 1, 1, 128>}, {transform_indices = @transform_19, window_bounds = array<i64: 1, 1, 128>}, {pipeline_mode = #tpu.pipeline_mode<synchronous>, transform_indices = @transform_20, window_bounds = array<i64: 16, 128>}]} {
    %c0_i32 = arith.constant 0 : i32
    %0 = arith.cmpi eq, %arg0, %c0_i32 : i32
    %1 = arith.extui %0 : i1 to i32
    %c0_i32_0 = arith.constant 0 : i32
    %2 = arith.cmpi ne, %1, %c0_i32_0 : i32
    scf.if %2 {
      %c0_97 = arith.constant 0 : index
      %c0_98 = arith.constant 0 : index
      %189 = vector.load %arg1[%c0_97, %c0_98] : memref<16x128xf32, #tpu.memory_space<vmem>>, vector<16x128xf32>
      %c0_99 = arith.constant 0 : index
      %c0_100 = arith.constant 0 : index
      %190 = vector.load %arg3[%c0_99, %c0_100] : memref<1x128xf32, #tpu.memory_space<vmem>>, vector<1x128xf32>
      %c0_101 = arith.constant 0 : index
      %c0_102 = arith.constant 0 : index
      %191 = vector.load %arg4[%c0_101, %c0_102] : memref<1x128xf32, #tpu.memory_space<vmem>>, vector<1x128xf32>
      %cst_103 = arith.constant dense<0.000000e+00> : vector<16xf32>
      %192 = vector.multi_reduction <add>, %189, %cst_103 [1] : vector<16x128xf32> to vector<16xf32>
      %193 = vector.shape_cast %192 : vector<16xf32> to vector<16x1xf32>
      %cst_104 = arith.constant 1.280000e+02 : f32
      %194 = vector.broadcast %cst_104 : f32 to vector<16x1xf32>
      %195 = arith.divf %193, %194 : vector<16x1xf32>
      %196 = vector.broadcast %195 : vector<16x1xf32> to vector<16x128xf32>
      %197 = arith.subf %189, %196 : vector<16x128xf32>
      %198 = arith.mulf %197, %197 : vector<16x128xf32>
      %cst_105 = arith.constant dense<0.000000e+00> : vector<16xf32>
      %199 = vector.multi_reduction <add>, %198, %cst_105 [1] : vector<16x128xf32> to vector<16xf32>
      %200 = vector.shape_cast %199 : vector<16xf32> to vector<16x1xf32>
      %cst_106 = arith.constant 1.280000e+02 : f32
      %201 = vector.broadcast %cst_106 : f32 to vector<16x1xf32>
      %202 = arith.divf %200, %201 : vector<16x1xf32>
      %203 = vector.broadcast %195 : vector<16x1xf32> to vector<16x128xf32>
      %204 = arith.subf %189, %203 : vector<16x128xf32>
      %cst_107 = arith.constant 9.99999996E-13 : f32
      %205 = vector.broadcast %cst_107 : f32 to vector<16x1xf32>
      %206 = arith.addf %202, %205 : vector<16x1xf32>
      %207 = math.rsqrt %206 : vector<16x1xf32>
      %208 = vector.broadcast %207 : vector<16x1xf32> to vector<16x128xf32>
      %209 = arith.mulf %204, %208 : vector<16x128xf32>
      %210 = vector.broadcast %190 : vector<1x128xf32> to vector<16x128xf32>
      %211 = arith.mulf %209, %210 : vector<16x128xf32>
      %212 = vector.broadcast %191 : vector<1x128xf32> to vector<16x128xf32>
      %213 = arith.addf %211, %212 : vector<16x128xf32>
      %c0_108 = arith.constant 0 : index
      %c0_109 = arith.constant 0 : index
      %214 = vector.load %arg22[%c0_108, %c0_109] : memref<16x128xf32, #tpu.memory_space<vmem>>, vector<16x128xf32>
      tpu.vector_store %arg22[%c0_108, %c0_109], %213 {strides = array<i32>} : memref<16x128xf32, #tpu.memory_space<vmem>>, vector<16x128xf32>,
    } else {
    }
    %c0 = arith.constant 0 : index
    %c0_1 = arith.constant 0 : index
    %3 = vector.load %arg22[%c0, %c0_1] : memref<16x128xf32, #tpu.memory_space<vmem>>, vector<16x128xf32>
    %c0_2 = arith.constant 0 : index
    %c0_3 = arith.constant 0 : index
    %4 = vector.load %arg2[%c0_2, %c0_3] : memref<2x8xf32, #tpu.memory_space<vmem>>, vector<2x8xf32>
    %c0_4 = arith.constant 0 : index
    %c0_5 = arith.constant 0 : index
    %c0_6 = arith.constant 0 : index
    %c0_7 = arith.constant 0 : index
    %5 = vector.load %arg5[%c0_4, %c0_5, %c0_6, %c0_7] : memref<1x4x128x32xbf16, #tpu.memory_space<vmem>>, vector<1x4x128x32xbf16>
    %6 = vector.shape_cast %5 : vector<1x4x128x32xbf16> to vector<4x128x32xbf16>
    %c0_8 = arith.constant 0 : index
    %c0_9 = arith.constant 0 : index
    %c0_10 = arith.constant 0 : index
    %c0_11 = arith.constant 0 : index
    %7 = vector.load %arg7[%c0_8, %c0_9, %c0_10, %c0_11] : memref<1x4x128x32xbf16, #tpu.memory_space<vmem>>, vector<1x4x128x32xbf16>
    %8 = vector.shape_cast %7 : vector<1x4x128x32xbf16> to vector<4x128x32xbf16>
    %c0_12 = arith.constant 0 : index
    %c0_13 = arith.constant 0 : index
    %c0_14 = arith.constant 0 : index
    %c0_15 = arith.constant 0 : index
    %9 = vector.load %arg9[%c0_12, %c0_13, %c0_14, %c0_15] : memref<1x4x128x32xbf16, #tpu.memory_space<vmem>>, vector<1x4x128x32xbf16>
    %10 = vector.shape_cast %9 : vector<1x4x128x32xbf16> to vector<4x128x32xbf16>
    %c0_16 = arith.constant 0 : index
    %c0_17 = arith.constant 0 : index
    %c0_18 = arith.constant 0 : index
    %c0_19 = arith.constant 0 : index
    %11 = vector.load %arg11[%c0_16, %c0_17, %c0_18, %c0_19] : memref<1x4x32x128xbf16, #tpu.memory_space<vmem>>, vector<1x4x32x128xbf16>
    %12 = vector.shape_cast %11 : vector<1x4x32x128xbf16> to vector<4x32x128xbf16>
    %c0_20 = arith.constant 0 : index
    %c0_21 = arith.constant 0 : index
    %c0_22 = arith.constant 0 : index
    %c0_23 = arith.constant 0 : index
    %13 = vector.load %arg6[%c0_20, %c0_21, %c0_22, %c0_23] : memref<1x4x1x32xf32, #tpu.memory_space<vmem>>, vector<1x4x1x32xf32>
    %14 = vector.shape_cast %13 : vector<1x4x1x32xf32> to vector<4x1x32xf32>
    %c0_24 = arith.constant 0 : index
    %c0_25 = arith.constant 0 : index
    %c0_26 = arith.constant 0 : index
    %c0_27 = arith.constant 0 : index
    %15 = vector.load %arg8[%c0_24, %c0_25, %c0_26, %c0_27] : memref<1x4x1x32xf32, #tpu.memory_space<vmem>>, vector<1x4x1x32xf32>
    %16 = vector.shape_cast %15 : vector<1x4x1x32xf32> to vector<4x1x32xf32>
    %c0_28 = arith.constant 0 : index
    %c0_29 = arith.constant 0 : index
    %c0_30 = arith.constant 0 : index
    %c0_31 = arith.constant 0 : index
    %17 = vector.load %arg10[%c0_28, %c0_29, %c0_30, %c0_31] : memref<1x4x1x32xf32, #tpu.memory_space<vmem>>, vector<1x4x1x32xf32>
    %18 = vector.shape_cast %17 : vector<1x4x1x32xf32> to vector<4x1x32xf32>
    %19 = vector.extract_strided_slice %3 {offsets = [0, 0], sizes = [8, 128], strides = [1, 1]} : vector<16x128xf32> to vector<8x128xf32>
    %20 = arith.truncf %19 : vector<8x128xf32> to vector<8x128xbf16>
    %21 = vector.shape_cast %20 : vector<8x128xbf16> to vector<1x8x128xbf16>
    %22 = vector.shape_cast %21 : vector<1x8x128xbf16> to vector<1x8x128xbf16>
    %23 = vector.broadcast %22 : vector<1x8x128xbf16> to vector<4x8x128xbf16>
    "tpu.trace_start"() <{level = 10 : i32, message = "nlh,nhd->nld"}> : () -> ()
    %cst = arith.constant dense<0.000000e+00> : vector<4x8x32xf32>
    %24 = tpu.matmul %23, %6, %cst {dimension_numbers = #tpu.dot_dimension_numbers<[2], [1], [1], [2], [0, 0, 0, 1, 1, 2], [0], [0]>} : vector<4x8x128xbf16>, vector<4x128x32xbf16>, vector<4x8x32xf32> -> vector<4x8x32xf32>
    "tpu.trace_stop"() : () -> ()
    %25 = vector.broadcast %14 : vector<4x1x32xf32> to vector<4x8x32xf32>
    %26 = arith.addf %24, %25 : vector<4x8x32xf32>
    "tpu.trace_start"() <{level = 10 : i32, message = "nlh,nhd->nld"}> : () -> ()
    %cst_32 = arith.constant dense<0.000000e+00> : vector<4x8x32xf32>
    %27 = tpu.matmul %23, %8, %cst_32 {dimension_numbers = #tpu.dot_dimension_numbers<[2], [1], [1], [2], [0, 0, 0, 1, 1, 2], [0], [0]>} : vector<4x8x128xbf16>, vector<4x128x32xbf16>, vector<4x8x32xf32> -> vector<4x8x32xf32>
    "tpu.trace_stop"() : () -> ()
    %28 = vector.broadcast %16 : vector<4x1x32xf32> to vector<4x8x32xf32>
    %29 = arith.addf %27, %28 : vector<4x8x32xf32>
    "tpu.trace_start"() <{level = 10 : i32, message = "nlh,nhd->nld"}> : () -> ()
    %cst_33 = arith.constant dense<0.000000e+00> : vector<4x8x32xf32>
    %30 = tpu.matmul %23, %10, %cst_33 {dimension_numbers = #tpu.dot_dimension_numbers<[2], [1], [1], [2], [0, 0, 0, 1, 1, 2], [0], [0]>} : vector<4x8x128xbf16>, vector<4x128x32xbf16>, vector<4x8x32xf32> -> vector<4x8x32xf32>
    "tpu.trace_stop"() : () -> ()
    %31 = vector.broadcast %18 : vector<4x1x32xf32> to vector<4x8x32xf32>
    %32 = arith.addf %30, %31 : vector<4x8x32xf32>
    %33 = arith.truncf %26 : vector<4x8x32xf32> to vector<4x8x32xbf16>
    %34 = arith.truncf %29 : vector<4x8x32xf32> to vector<4x8x32xbf16>
    "tpu.trace_start"() <{level = 10 : i32, message = "nld,nmd->nlm"}> : () -> ()
    %cst_34 = arith.constant dense<0.000000e+00> : vector<4x8x8xf32>
    %35 = tpu.matmul %33, %34, %cst_34 {dimension_numbers = #tpu.dot_dimension_numbers<[2], [2], [1], [1], [0, 0, 0, 1, 1, 1], [0], [0]>} : vector<4x8x32xbf16>, vector<4x8x32xbf16>, vector<4x8x8xf32> -> vector<4x8x8xf32>
    "tpu.trace_stop"() : () -> ()
    %cst_35 = arith.constant 0.176776692 : f32
    %36 = vector.broadcast %cst_35 : f32 to vector<4x8x8xf32>
    %37 = arith.mulf %35, %36 : vector<4x8x8xf32>
    %38 = vector.extract_strided_slice %4 {offsets = [0, 0], sizes = [1, 8], strides = [1, 1]} : vector<2x8xf32> to vector<1x8xf32>
    %39 = vector.shape_cast %38 : vector<1x8xf32> to vector<1x1x8xf32>
    %40 = vector.broadcast %39 : vector<1x1x8xf32> to vector<4x8x8xf32>
    %41 = arith.addf %37, %40 : vector<4x8x8xf32>
    %cst_36 = arith.constant dense<0xFF800000> : vector<4x8xf32>
    %42 = vector.multi_reduction <maximumf>, %41, %cst_36 [2] : vector<4x8x8xf32> to vector<4x8xf32>
    %43 = vector.shape_cast %42 : vector<4x8xf32> to vector<4x8x1xf32>
    %44 = vector.broadcast %43 : vector<4x8x1xf32> to vector<4x8x8xf32>
    %45 = arith.subf %41, %44 : vector<4x8x8xf32>
    %46 = math.exp %45 : vector<4x8x8xf32>
    %cst_37 = arith.constant dense<0.000000e+00> : vector<4x8xf32>
    %47 = vector.multi_reduction <add>, %46, %cst_37 [2] : vector<4x8x8xf32> to vector<4x8xf32>
    %48 = vector.shape_cast %47 : vector<4x8xf32> to vector<4x8x1xf32>
    %49 = tpu.reciprocal %48 {approx = true} : vector<4x8x1xf32> -> vector<4x8x1xf32>
    %50 = vector.broadcast %49 : vector<4x8x1xf32> to vector<4x8x8xf32>
    %51 = arith.mulf %46, %50 : vector<4x8x8xf32>
    %52 = arith.truncf %51 : vector<4x8x8xf32> to vector<4x8x8xbf16>
    %53 = arith.truncf %32 : vector<4x8x32xf32> to vector<4x8x32xbf16>
    "tpu.trace_start"() <{level = 10 : i32, message = "nlm,nmd->nld"}> : () -> ()
    %cst_38 = arith.constant dense<0.000000e+00> : vector<4x8x32xf32>
    %54 = tpu.matmul %52, %53, %cst_38 {dimension_numbers = #tpu.dot_dimension_numbers<[2], [1], [1], [2], [0, 0, 0, 1, 1, 2], [0], [0]>} : vector<4x8x8xbf16>, vector<4x8x32xbf16>, vector<4x8x32xf32> -> vector<4x8x32xf32>
    "tpu.trace_stop"() : () -> ()
    %55 = arith.truncf %54 : vector<4x8x32xf32> to vector<4x8x32xbf16>
    "tpu.trace_start"() <{level = 10 : i32, message = "nld,ndk->nlk"}> : () -> ()
    %cst_39 = arith.constant dense<0.000000e+00> : vector<4x8x128xf32>
    %56 = tpu.matmul %55, %12, %cst_39 {dimension_numbers = #tpu.dot_dimension_numbers<[2], [1], [1], [2], [0, 0, 0, 1, 1, 2], [0], [0]>} : vector<4x8x32xbf16>, vector<4x32x128xbf16>, vector<4x8x128xf32> -> vector<4x8x128xf32>
    "tpu.trace_stop"() : () -> ()
    %cst_40 = arith.constant dense<0.000000e+00> : vector<8x128xf32>
    %57 = vector.multi_reduction <add>, %56, %cst_40 [0] : vector<4x8x128xf32> to vector<8x128xf32>
    %58 = vector.extract_strided_slice %3 {offsets = [8, 0], sizes = [8, 128], strides = [1, 1]} : vector<16x128xf32> to vector<8x128xf32>
    %59 = arith.truncf %58 : vector<8x128xf32> to vector<8x128xbf16>
    %60 = vector.shape_cast %59 : vector<8x128xbf16> to vector<1x8x128xbf16>
    %61 = vector.shape_cast %60 : vector<1x8x128xbf16> to vector<1x8x128xbf16>
    %62 = vector.broadcast %61 : vector<1x8x128xbf16> to vector<4x8x128xbf16>
    "tpu.trace_start"() <{level = 10 : i32, message = "nlh,nhd->nld"}> : () -> ()
    %cst_41 = arith.constant dense<0.000000e+00> : vector<4x8x32xf32>
    %63 = tpu.matmul %62, %6, %cst_41 {dimension_numbers = #tpu.dot_dimension_numbers<[2], [1], [1], [2], [0, 0, 0, 1, 1, 2], [0], [0]>} : vector<4x8x128xbf16>, vector<4x128x32xbf16>, vector<4x8x32xf32> -> vector<4x8x32xf32>
    "tpu.trace_stop"() : () -> ()
    %64 = vector.broadcast %14 : vector<4x1x32xf32> to vector<4x8x32xf32>
    %65 = arith.addf %63, %64 : vector<4x8x32xf32>
    "tpu.trace_start"() <{level = 10 : i32, message = "nlh,nhd->nld"}> : () -> ()
    %cst_42 = arith.constant dense<0.000000e+00> : vector<4x8x32xf32>
    %66 = tpu.matmul %62, %8, %cst_42 {dimension_numbers = #tpu.dot_dimension_numbers<[2], [1], [1], [2], [0, 0, 0, 1, 1, 2], [0], [0]>} : vector<4x8x128xbf16>, vector<4x128x32xbf16>, vector<4x8x32xf32> -> vector<4x8x32xf32>
    "tpu.trace_stop"() : () -> ()
    %67 = vector.broadcast %16 : vector<4x1x32xf32> to vector<4x8x32xf32>
    %68 = arith.addf %66, %67 : vector<4x8x32xf32>
    "tpu.trace_start"() <{level = 10 : i32, message = "nlh,nhd->nld"}> : () -> ()
    %cst_43 = arith.constant dense<0.000000e+00> : vector<4x8x32xf32>
    %69 = tpu.matmul %62, %10, %cst_43 {dimension_numbers = #tpu.dot_dimension_numbers<[2], [1], [1], [2], [0, 0, 0, 1, 1, 2], [0], [0]>} : vector<4x8x128xbf16>, vector<4x128x32xbf16>, vector<4x8x32xf32> -> vector<4x8x32xf32>
    "tpu.trace_stop"() : () -> ()
    %70 = vector.broadcast %18 : vector<4x1x32xf32> to vector<4x8x32xf32>
    %71 = arith.addf %69, %70 : vector<4x8x32xf32>
    %72 = arith.truncf %65 : vector<4x8x32xf32> to vector<4x8x32xbf16>
    %73 = arith.truncf %68 : vector<4x8x32xf32> to vector<4x8x32xbf16>
    "tpu.trace_start"() <{level = 10 : i32, message = "nld,nmd->nlm"}> : () -> ()
    %cst_44 = arith.constant dense<0.000000e+00> : vector<4x8x8xf32>
    %74 = tpu.matmul %72, %73, %cst_44 {dimension_numbers = #tpu.dot_dimension_numbers<[2], [2], [1], [1], [0, 0, 0, 1, 1, 1], [0], [0]>} : vector<4x8x32xbf16>, vector<4x8x32xbf16>, vector<4x8x8xf32> -> vector<4x8x8xf32>
    "tpu.trace_stop"() : () -> ()
    %cst_45 = arith.constant 0.176776692 : f32
    %75 = vector.broadcast %cst_45 : f32 to vector<4x8x8xf32>
    %76 = arith.mulf %74, %75 : vector<4x8x8xf32>
    %77 = vector.extract_strided_slice %4 {offsets = [1, 0], sizes = [1, 8], strides = [1, 1]} : vector<2x8xf32> to vector<1x8xf32>
    %78 = vector.shape_cast %77 : vector<1x8xf32> to vector<1x1x8xf32>
    %79 = vector.broadcast %78 : vector<1x1x8xf32> to vector<4x8x8xf32>
    %80 = arith.addf %76, %79 : vector<4x8x8xf32>
    %cst_46 = arith.constant dense<0xFF800000> : vector<4x8xf32>
    %81 = vector.multi_reduction <maximumf>, %80, %cst_46 [2] : vector<4x8x8xf32> to vector<4x8xf32>
    %82 = vector.shape_cast %81 : vector<4x8xf32> to vector<4x8x1xf32>
    %83 = vector.broadcast %82 : vector<4x8x1xf32> to vector<4x8x8xf32>
    %84 = arith.subf %80, %83 : vector<4x8x8xf32>
    %85 = math.exp %84 : vector<4x8x8xf32>
    %cst_47 = arith.constant dense<0.000000e+00> : vector<4x8xf32>
    %86 = vector.multi_reduction <add>, %85, %cst_47 [2] : vector<4x8x8xf32> to vector<4x8xf32>
    %87 = vector.shape_cast %86 : vector<4x8xf32> to vector<4x8x1xf32>
    %88 = tpu.reciprocal %87 {approx = true} : vector<4x8x1xf32> -> vector<4x8x1xf32>
    %89 = vector.broadcast %88 : vector<4x8x1xf32> to vector<4x8x8xf32>
    %90 = arith.mulf %85, %89 : vector<4x8x8xf32>
    %91 = arith.truncf %90 : vector<4x8x8xf32> to vector<4x8x8xbf16>
    %92 = arith.truncf %71 : vector<4x8x32xf32> to vector<4x8x32xbf16>
    "tpu.trace_start"() <{level = 10 : i32, message = "nlm,nmd->nld"}> : () -> ()
    %cst_48 = arith.constant dense<0.000000e+00> : vector<4x8x32xf32>
    %93 = tpu.matmul %91, %92, %cst_48 {dimension_numbers = #tpu.dot_dimension_numbers<[2], [1], [1], [2], [0, 0, 0, 1, 1, 2], [0], [0]>} : vector<4x8x8xbf16>, vector<4x8x32xbf16>, vector<4x8x32xf32> -> vector<4x8x32xf32>
    "tpu.trace_stop"() : () -> ()
    %94 = arith.truncf %93 : vector<4x8x32xf32> to vector<4x8x32xbf16>
    "tpu.trace_start"() <{level = 10 : i32, message = "nld,ndk->nlk"}> : () -> ()
    %cst_49 = arith.constant dense<0.000000e+00> : vector<4x8x128xf32>
    %95 = tpu.matmul %94, %12, %cst_49 {dimension_numbers = #tpu.dot_dimension_numbers<[2], [1], [1], [2], [0, 0, 0, 1, 1, 2], [0], [0]>} : vector<4x8x32xbf16>, vector<4x32x128xbf16>, vector<4x8x128xf32> -> vector<4x8x128xf32>
    "tpu.trace_stop"() : () -> ()
    %cst_50 = arith.constant dense<0.000000e+00> : vector<8x128xf32>
    %96 = vector.multi_reduction <add>, %95, %cst_50 [0] : vector<4x8x128xf32> to vector<8x128xf32>
    %97 = tpu.concatenate %57, %96 in 0 : vector<8x128xf32>, vector<8x128xf32> -> vector<16x128xf32>
    %c0_51 = arith.constant 0 : index
    %c0_52 = arith.constant 0 : index
    %c0_53 = arith.constant 0 : index
    %98 = vector.load %arg12[%c0_51, %c0_52, %c0_53] : memref<1x1x128xf32, #tpu.memory_space<vmem>>, vector<1x1x128xf32>
    %99 = vector.shape_cast %98 : vector<1x1x128xf32> to vector<1x128xf32>
    %100 = vector.broadcast %99 : vector<1x128xf32> to vector<16x128xf32>
    %101 = arith.addf %97, %100 : vector<16x128xf32>
    %102 = arith.addf %3, %101 : vector<16x128xf32>
    %c0_54 = arith.constant 0 : index
    %c0_55 = arith.constant 0 : index
    %c0_56 = arith.constant 0 : index
    %103 = vector.load %arg13[%c0_54, %c0_55, %c0_56] : memref<1x1x128xf32, #tpu.memory_space<vmem>>, vector<1x1x128xf32>
    %104 = vector.shape_cast %103 : vector<1x1x128xf32> to vector<1x128xf32>
    %c0_57 = arith.constant 0 : index
    %c0_58 = arith.constant 0 : index
    %c0_59 = arith.constant 0 : index
    %105 = vector.load %arg14[%c0_57, %c0_58, %c0_59] : memref<1x1x128xf32, #tpu.memory_space<vmem>>, vector<1x1x128xf32>
    %106 = vector.shape_cast %105 : vector<1x1x128xf32> to vector<1x128xf32>
    %cst_60 = arith.constant dense<0.000000e+00> : vector<16xf32>
    %107 = vector.multi_reduction <add>, %102, %cst_60 [1] : vector<16x128xf32> to vector<16xf32>
    %108 = vector.shape_cast %107 : vector<16xf32> to vector<16x1xf32>
    %cst_61 = arith.constant 1.280000e+02 : f32
    %109 = vector.broadcast %cst_61 : f32 to vector<16x1xf32>
    %110 = arith.divf %108, %109 : vector<16x1xf32>
    %111 = vector.broadcast %110 : vector<16x1xf32> to vector<16x128xf32>
    %112 = arith.subf %102, %111 : vector<16x128xf32>
    %113 = arith.mulf %112, %112 : vector<16x128xf32>
    %cst_62 = arith.constant dense<0.000000e+00> : vector<16xf32>
    %114 = vector.multi_reduction <add>, %113, %cst_62 [1] : vector<16x128xf32> to vector<16xf32>
    %115 = vector.shape_cast %114 : vector<16xf32> to vector<16x1xf32>
    %cst_63 = arith.constant 1.280000e+02 : f32
    %116 = vector.broadcast %cst_63 : f32 to vector<16x1xf32>
    %117 = arith.divf %115, %116 : vector<16x1xf32>
    %118 = vector.broadcast %110 : vector<16x1xf32> to vector<16x128xf32>
    %119 = arith.subf %102, %118 : vector<16x128xf32>
    %cst_64 = arith.constant 9.99999996E-13 : f32
    %120 = vector.broadcast %cst_64 : f32 to vector<16x1xf32>
    %121 = arith.addf %117, %120 : vector<16x1xf32>
    %122 = math.rsqrt %121 : vector<16x1xf32>
    %123 = vector.broadcast %122 : vector<16x1xf32> to vector<16x128xf32>
    %124 = arith.mulf %119, %123 : vector<16x128xf32>
    %125 = vector.broadcast %104 : vector<1x128xf32> to vector<16x128xf32>
    %126 = arith.mulf %124, %125 : vector<16x128xf32>
    %127 = vector.broadcast %106 : vector<1x128xf32> to vector<16x128xf32>
    %128 = arith.addf %126, %127 : vector<16x128xf32>
    %129 = arith.truncf %128 : vector<16x128xf32> to vector<16x128xbf16>
    %c0_65 = arith.constant 0 : index
    %c0_66 = arith.constant 0 : index
    %c0_67 = arith.constant 0 : index
    %130 = vector.load %arg15[%c0_65, %c0_66, %c0_67] : memref<1x128x512xbf16, #tpu.memory_space<vmem>>, vector<1x128x512xbf16>
    %131 = vector.shape_cast %130 : vector<1x128x512xbf16> to vector<128x512xbf16>
    %cst_68 = arith.constant dense<0.000000e+00> : vector<16x512xf32>
    %132 = tpu.matmul %129, %131, %cst_68 {dimension_numbers = #tpu.dot_dimension_numbers<[1], [0], [0], [1], [0, 0, 1, 1], [], []>} : vector<16x128xbf16>, vector<128x512xbf16>, vector<16x512xf32> -> vector<16x512xf32>
    %c0_69 = arith.constant 0 : index
    %c0_70 = arith.constant 0 : index
    %c0_71 = arith.constant 0 : index
    %133 = vector.load %arg16[%c0_69, %c0_70, %c0_71] : memref<1x1x512xf32, #tpu.memory_space<vmem>>, vector<1x1x512xf32>
    %134 = vector.shape_cast %133 : vector<1x1x512xf32> to vector<1x512xf32>
    %135 = vector.broadcast %134 : vector<1x512xf32> to vector<16x512xf32>
    %136 = arith.addf %132, %135 : vector<16x512xf32>
    %137 = arith.mulf %136, %136 : vector<16x512xf32>
    %138 = arith.mulf %136, %137 : vector<16x512xf32>
    %cst_72 = arith.constant 4.471500e-02 : f32
    %139 = vector.broadcast %cst_72 : f32 to vector<16x512xf32>
    %140 = arith.mulf %139, %138 : vector<16x512xf32>
    %141 = arith.addf %136, %140 : vector<16x512xf32>
    %cst_73 = arith.constant 0.797884583 : f32
    %142 = vector.broadcast %cst_73 : f32 to vector<16x512xf32>
    %143 = arith.mulf %142, %141 : vector<16x512xf32>
    %144 = math.tanh %143 : vector<16x512xf32>
    %cst_74 = arith.constant 1.000000e+00 : f32
    %145 = vector.broadcast %cst_74 : f32 to vector<16x512xf32>
    %146 = arith.addf %145, %144 : vector<16x512xf32>
    %cst_75 = arith.constant 5.000000e-01 : f32
    %147 = vector.broadcast %cst_75 : f32 to vector<16x512xf32>
    %148 = arith.mulf %147, %146 : vector<16x512xf32>
    %149 = arith.mulf %136, %148 : vector<16x512xf32>
    %150 = arith.truncf %149 : vector<16x512xf32> to vector<16x512xbf16>
    %c0_76 = arith.constant 0 : index
    %c0_77 = arith.constant 0 : index
    %c0_78 = arith.constant 0 : index
    %151 = vector.load %arg17[%c0_76, %c0_77, %c0_78] : memref<1x512x128xbf16, #tpu.memory_space<vmem>>, vector<1x512x128xbf16>
    %152 = vector.shape_cast %151 : vector<1x512x128xbf16> to vector<512x128xbf16>
    %cst_79 = arith.constant dense<0.000000e+00> : vector<16x128xf32>
    %153 = tpu.matmul %150, %152, %cst_79 {dimension_numbers = #tpu.dot_dimension_numbers<[1], [0], [0], [1], [0, 0, 1, 1], [], []>} : vector<16x512xbf16>, vector<512x128xbf16>, vector<16x128xf32> -> vector<16x128xf32>
    %c0_80 = arith.constant 0 : index
    %c0_81 = arith.constant 0 : index
    %c0_82 = arith.constant 0 : index
    %154 = vector.load %arg18[%c0_80, %c0_81, %c0_82] : memref<1x1x128xf32, #tpu.memory_space<vmem>>, vector<1x1x128xf32>
    %155 = vector.shape_cast %154 : vector<1x1x128xf32> to vector<1x128xf32>
    %156 = vector.broadcast %155 : vector<1x128xf32> to vector<16x128xf32>
    %157 = arith.addf %153, %156 : vector<16x128xf32>
    %158 = arith.addf %128, %157 : vector<16x128xf32>
    %c0_83 = arith.constant 0 : index
    %c0_84 = arith.constant 0 : index
    %c0_85 = arith.constant 0 : index
    %159 = vector.load %arg19[%c0_83, %c0_84, %c0_85] : memref<1x1x128xf32, #tpu.memory_space<vmem>>, vector<1x1x128xf32>
    %160 = vector.shape_cast %159 : vector<1x1x128xf32> to vector<1x128xf32>
    %c0_86 = arith.constant 0 : index
    %c0_87 = arith.constant 0 : index
    %c0_88 = arith.constant 0 : index
    %161 = vector.load %arg20[%c0_86, %c0_87, %c0_88] : memref<1x1x128xf32, #tpu.memory_space<vmem>>, vector<1x1x128xf32>
    %162 = vector.shape_cast %161 : vector<1x1x128xf32> to vector<1x128xf32>
    %cst_89 = arith.constant dense<0.000000e+00> : vector<16xf32>
    %163 = vector.multi_reduction <add>, %158, %cst_89 [1] : vector<16x128xf32> to vector<16xf32>
    %164 = vector.shape_cast %163 : vector<16xf32> to vector<16x1xf32>
    %cst_90 = arith.constant 1.280000e+02 : f32
    %165 = vector.broadcast %cst_90 : f32 to vector<16x1xf32>
    %166 = arith.divf %164, %165 : vector<16x1xf32>
    %167 = vector.broadcast %166 : vector<16x1xf32> to vector<16x128xf32>
    %168 = arith.subf %158, %167 : vector<16x128xf32>
    %169 = arith.mulf %168, %168 : vector<16x128xf32>
    %cst_91 = arith.constant dense<0.000000e+00> : vector<16xf32>
    %170 = vector.multi_reduction <add>, %169, %cst_91 [1] : vector<16x128xf32> to vector<16xf32>
    %171 = vector.shape_cast %170 : vector<16xf32> to vector<16x1xf32>
    %cst_92 = arith.constant 1.280000e+02 : f32
    %172 = vector.broadcast %cst_92 : f32 to vector<16x1xf32>
    %173 = arith.divf %171, %172 : vector<16x1xf32>
    %174 = vector.broadcast %166 : vector<16x1xf32> to vector<16x128xf32>
    %175 = arith.subf %158, %174 : vector<16x128xf32>
    %cst_93 = arith.constant 9.99999996E-13 : f32
    %176 = vector.broadcast %cst_93 : f32 to vector<16x1xf32>
    %177 = arith.addf %173, %176 : vector<16x1xf32>
    %178 = math.rsqrt %177 : vector<16x1xf32>
    %179 = vector.broadcast %178 : vector<16x1xf32> to vector<16x128xf32>
    %180 = arith.mulf %175, %179 : vector<16x128xf32>
    %181 = vector.broadcast %160 : vector<1x128xf32> to vector<16x128xf32>
    %182 = arith.mulf %180, %181 : vector<16x128xf32>
    %183 = vector.broadcast %162 : vector<1x128xf32> to vector<16x128xf32>
    %184 = arith.addf %182, %183 : vector<16x128xf32>
    %c0_94 = arith.constant 0 : index
    %c0_95 = arith.constant 0 : index
    %185 = vector.load %arg22[%c0_94, %c0_95] : memref<16x128xf32, #tpu.memory_space<vmem>>, vector<16x128xf32>
    tpu.vector_store %arg22[%c0_94, %c0_95], %184 {strides = array<i32>} : memref<16x128xf32, #tpu.memory_space<vmem>>, vector<16x128xf32>,
    %c1_i32 = arith.constant 1 : i32
    %186 = arith.cmpi eq, %arg0, %c1_i32 : i32
    %187 = arith.extui %186 : i1 to i32
    %c0_i32_96 = arith.constant 0 : i32
    %188 = arith.cmpi ne, %187, %c0_i32_96 : i32
    scf.if %188 {
      %c0_97 = arith.constant 0 : index
      %c0_98 = arith.constant 0 : index
      %189 = vector.load %arg21[%c0_97, %c0_98] : memref<16x128xf32, #tpu.memory_space<vmem>>, vector<16x128xf32>
      tpu.vector_store %arg21[%c0_97, %c0_98], %184 {strides = array<i32>} : memref<16x128xf32, #tpu.memory_space<vmem>>, vector<16x128xf32>,
    } else {
    }
    return
  }
  func.func @transform_0(%arg0: i32) -> (i32, i32) {
    %c0_i32 = arith.constant 0 : i32
    %c0_i32_0 = arith.constant 0 : i32
    %c0_i32_1 = arith.constant 0 : i32
    return %c0_i32, %c0_i32_0 : i32, i32
  }
  func.func @transform_1(%arg0: i32) -> (i32, i32) {
    %c0_i32 = arith.constant 0 : i32
    %c0_i32_0 = arith.constant 0 : i32
    %c0_i32_1 = arith.constant 0 : i32
    return %c0_i32, %c0_i32_0 : i32, i32
  }
  func.func @transform_2(%arg0: i32) -> (i32, i32) {
    %c0_i32 = arith.constant 0 : i32
    %c0_i32_0 = arith.constant 0 : i32
    %c0_i32_1 = arith.constant 0 : i32
    return %c0_i32, %c0_i32_0 : i32, i32
  }
  func.func @transform_3(%arg0: i32) -> (i32, i32) {
    %c0_i32 = arith.constant 0 : i32
    %c0_i32_0 = arith.constant 0 : i32
    %c0_i32_1 = arith.constant 0 : i32
    return %c0_i32, %c0_i32_0 : i32, i32
  }
  func.func @transform_4(%arg0: i32) -> (i32, i32, i32, i32) {
    %c0_i32 = arith.constant 0 : i32
    %c0_i32_0 = arith.constant 0 : i32
    %c0_i32_1 = arith.constant 0 : i32
    %c0_i32_2 = arith.constant 0 : i32
    return %arg0, %c0_i32, %c0_i32_0, %c0_i32_1 : i32, i32, i32, i32
  }
  func.func @transform_5(%arg0: i32) -> (i32, i32, i32, i32) {
    %c0_i32 = arith.constant 0 : i32
    %c0_i32_0 = arith.constant 0 : i32
    %c0_i32_1 = arith.constant 0 : i32
    %c0_i32_2 = arith.constant 0 : i32
    return %arg0, %c0_i32, %c0_i32_0, %c0_i32_1 : i32, i32, i32, i32
  }
  func.func @transform_6(%arg0: i32) -> (i32, i32, i32, i32) {
    %c0_i32 = arith.constant 0 : i32
    %c0_i32_0 = arith.constant 0 : i32
    %c0_i32_1 = arith.constant 0 : i32
    %c0_i32_2 = arith.constant 0 : i32
    return %arg0, %c0_i32, %c0_i32_0, %c0_i32_1 : i32, i32, i32, i32
  }
  func.func @transform_7(%arg0: i32) -> (i32, i32, i32, i32) {
    %c0_i32 = arith.constant 0 : i32
    %c0_i32_0 = arith.constant 0 : i32
    %c0_i32_1 = arith.constant 0 : i32
    %c0_i32_2 = arith.constant 0 : i32
    return %arg0, %c0_i32, %c0_i32_0, %c0_i32_1 : i32, i32, i32, i32
  }
  func.func @transform_8(%arg0: i32) -> (i32, i32, i32, i32) {
    %c0_i32 = arith.constant 0 : i32
    %c0_i32_0 = arith.constant 0 : i32
    %c0_i32_1 = arith.constant 0 : i32
    %c0_i32_2 = arith.constant 0 : i32
    return %arg0, %c0_i32, %c0_i32_0, %c0_i32_1 : i32, i32, i32, i32
  }
  func.func @transform_9(%arg0: i32) -> (i32, i32, i32, i32) {
    %c0_i32 = arith.constant 0 : i32
    %c0_i32_0 = arith.constant 0 : i32
    %c0_i32_1 = arith.constant 0 : i32
    %c0_i32_2 = arith.constant 0 : i32
    return %arg0, %c0_i32, %c0_i32_0, %c0_i32_1 : i32, i32, i32, i32
  }
  func.func @transform_10(%arg0: i32) -> (i32, i32, i32, i32) {
    %c0_i32 = arith.constant 0 : i32
    %c0_i32_0 = arith.constant 0 : i32
    %c0_i32_1 = arith.constant 0 : i32
    %c0_i32_2 = arith.constant 0 : i32
    return %arg0, %c0_i32, %c0_i32_0, %c0_i32_1 : i32, i32, i32, i32
  }
  func.func @transform_11(%arg0: i32) -> (i32, i32, i32) {
    %c0_i32 = arith.constant 0 : i32
    %c0_i32_0 = arith.constant 0 : i32
    %c0_i32_1 = arith.constant 0 : i32
    return %arg0, %c0_i32, %c0_i32_0 : i32, i32, i32
  }
  func.func @transform_12(%arg0: i32) -> (i32, i32, i32) {
    %c0_i32 = arith.constant 0 : i32
    %c0_i32_0 = arith.constant 0 : i32
    %c0_i32_1 = arith.constant 0 : i32
    return %arg0, %c0_i32, %c0_i32_0 : i32, i32, i32
  }
  func.func @transform_13(%arg0: i32) -> (i32, i32, i32) {
    %c0_i32 = arith.constant 0 : i32
    %c0_i32_0 = arith.constant 0 : i32
    %c0_i32_1 = arith.constant 0 : i32
    return %arg0, %c0_i32, %c0_i32_0 : i32, i32, i32
  }
  func.func @transform_14(%arg0: i32) -> (i32, i32, i32) {
    %c0_i32 = arith.constant 0 : i32
    %c0_i32_0 = arith.constant 0 : i32
    %c0_i32_1 = arith.constant 0 : i32
    return %arg0, %c0_i32, %c0_i32_0 : i32, i32, i32
  }
  func.func @transform_15(%arg0: i32) -> (i32, i32, i32) {
    %c0_i32 = arith.constant 0 : i32
    %c0_i32_0 = arith.constant 0 : i32
    %c0_i32_1 = arith.constant 0 : i32
    return %arg0, %c0_i32, %c0_i32_0 : i32, i32, i32
  }
  func.func @transform_16(%arg0: i32) -> (i32, i32, i32) {
    %c0_i32 = arith.constant 0 : i32
    %c0_i32_0 = arith.constant 0 : i32
    %c0_i32_1 = arith.constant 0 : i32
    return %arg0, %c0_i32, %c0_i32_0 : i32, i32, i32
  }
  func.func @transform_17(%arg0: i32) -> (i32, i32, i32) {
    %c0_i32 = arith.constant 0 : i32
    %c0_i32_0 = arith.constant 0 : i32
    %c0_i32_1 = arith.constant 0 : i32
    return %arg0, %c0_i32, %c0_i32_0 : i32, i32, i32
  }
  func.func @transform_18(%arg0: i32) -> (i32, i32, i32) {
    %c0_i32 = arith.constant 0 : i32
    %c0_i32_0 = arith.constant 0 : i32
    %c0_i32_1 = arith.constant 0 : i32
    return %arg0, %c0_i32, %c0_i32_0 : i32, i32, i32
  }
  func.func @transform_19(%arg0: i32) -> (i32, i32, i32) {
    %c0_i32 = arith.constant 0 : i32
    %c0_i32_0 = arith.constant 0 : i32
    %c0_i32_1 = arith.constant 0 : i32
    return %arg0, %c0_i32, %c0_i32_0 : i32, i32, i32
  }
  func.func @transform_20(%arg0: i32) -> (i32, i32) {
    %c0_i32 = arith.constant 0 : i32
    %c0_i32_0 = arith.constant 0 : i32
    %c0_i32_1 = arith.constant 0 : i32
    return %c0_i32, %c0_i32_0 : i32, i32
  }
}

</mosaic_0001>

<llo_original>
// kernel: tpu_custom_call.1
$region0: #{tpu_custom_call.1}
  #allocation0 [shape = 'u32[]', space=smem, size = 0x4, offset = 0x4, fixed_abs, tag = 'smem constant byte address 0x4 - core index']
  #allocation1 [shape = 'u32[144,128]{1,0:T(1,128)}', space=vmem, size = 0x12000, scoped, tag = 'internal scratch']
  #allocation2 [shape = 'f32[16,128]{1,0:T(8,128)}', space=vmem, size = 0x2000, scoped, tag = 'scratch operand']
  %s0 = inlined_call_operand.vmem [shape: f32[16,128], index: 0, kind: input, shape index: {}]
  %s1 = inlined_call_operand.vmem [shape: f32[2,8], index: 1, kind: input, shape index: {}]
  %s2 = inlined_call_operand.vmem [shape: f32[1,128], index: 2, kind: input, shape index: {}]
  %s3 = inlined_call_operand.vmem [shape: f32[1,128], index: 3, kind: input, shape index: {}]
  %s4 = inlined_call_operand.vmem [shape: bf16[2,4,128,32], index: 4, kind: input, shape index: {}]
  %s5 = inlined_call_operand.vmem [shape: f32[2,4,1,32], index: 5, kind: input, shape index: {}]
  %s6 = inlined_call_operand.vmem [shape: bf16[2,4,128,32], index: 6, kind: input, shape index: {}]
  %s7 = inlined_call_operand.vmem [shape: f32[2,4,1,32], index: 7, kind: input, shape index: {}]
  %s8 = inlined_call_operand.vmem [shape: bf16[2,4,128,32], index: 8, kind: input, shape index: {}]
  %s9 = inlined_call_operand.vmem [shape: f32[2,4,1,32], index: 9, kind: input, shape index: {}]
  %s10 = inlined_call_operand.vmem [shape: bf16[2,4,32,128], index: 10, kind: input, shape index: {}]
  %s11 = inlined_call_operand.vmem [shape: f32[2,1,128], index: 11, kind: input, shape index: {}]
  %s12 = inlined_call_operand.vmem [shape: f32[2,1,128], index: 12, kind: input, shape index: {}]
  %s13 = inlined_call_operand.vmem [shape: f32[2,1,128], index: 13, kind: input, shape index: {}]
  %s14 = inlined_call_operand.vmem [shape: bf16[2,128,512], index: 14, kind: input, shape index: {}]
  %s15 = inlined_call_operand.vmem [shape: f32[2,1,512], index: 15, kind: input, shape index: {}]
  %s16 = inlined_call_operand.vmem [shape: bf16[2,512,128], index: 16, kind: input, shape index: {}]
  %s17 = inlined_call_operand.vmem [shape: f32[2,1,128], index: 17, kind: input, shape index: {}]
  %s18 = inlined_call_operand.vmem [shape: f32[2,1,128], index: 18, kind: input, shape index: {}]
  %s19 = inlined_call_operand.vmem [shape: f32[2,1,128], index: 19, kind: input, shape index: {}]
  %s20 = inlined_call_operand.hbm [shape: f32[16,128], index: 20, kind: output, shape index: {}]
  %s21 = sld [smem:[#allocation0]]
  $region121: #{tpu_custom_call.1} parent=0
    _
  %s23 = ssub.s32 1, %s21
  %s24 = scalar_select 0, %s23, %s21
  $region1: #{tpu_custom_call.1} parent=0
    #allocation3 [shape = 'u8[8192]{0}', space=vmem, size = 0x2000, scoped, tag = 'output window, operand 0, single buffered']
    #allocation4 [shape = 's32[2]{0}', space=sflag, size = 0x8, scoped, tag = 'scoped memory for tpu_custom_call.1']
    %25 = vsyncpa [#allocation4], 0
    loop: start=0, step=1, limit=4
    $region2: #{tpu_custom_call.1} parent=1 // loop_pre_header
      _
    $region3: #{tpu_custom_call.1} parent=1 // loop_header
      %s27 = sphi 0, %s31
      %p28 = scmp.ge.s32.totalorder %s27, 4
      %s35 = sphi 0, %s35
      %s37 = sphi 0, %s35
      %s38 = sphi 0, %s37
      %s52 = sphi 0, %s38
      %s56 = sphi 0, %s56
      %s58 = sphi 0, %s56
      %s59 = sphi 0, %s58
      %s73 = sphi 0, %s59
      %s77 = sphi 0, %s77
      %s79 = sphi 0, %s77
      %s80 = sphi 0, %s79
      %s94 = sphi 0, %s80
      %s98 = sphi 0, %s98
      %s100 = sphi 0, %s98
      %s101 = sphi 0, %s100
      %s115 = sphi 0, %s101
      %s121 = sphi 0, %s123
      %s124 = sphi 0, %s121
      %s125 = sphi 0, %s124
      %s141 = sphi 0, %s125
      %s147 = sphi 0, %s149
      %s150 = sphi 0, %s147
      %s151 = sphi 0, %s150
      %s167 = sphi 0, %s151
      %s173 = sphi 0, %s175
      %s176 = sphi 0, %s173
      %s177 = sphi 0, %s176
      %s193 = sphi 0, %s177
      %s199 = sphi 0, %s201
      %s202 = sphi 0, %s199
      %s203 = sphi 0, %s202
      %s219 = sphi 0, %s203
      %s225 = sphi 0, %s227
      %s228 = sphi 0, %s225
      %s229 = sphi 0, %s228
      %s245 = sphi 0, %s229
      %s251 = sphi 0, %s253
      %s254 = sphi 0, %s251
      %s255 = sphi 0, %s254
      %s271 = sphi 0, %s255
      %s277 = sphi 0, %s279
      %s280 = sphi 0, %s277
      %s281 = sphi 0, %s280
      %s297 = sphi 0, %s281
      %s303 = sphi 0, %s305
      %s306 = sphi 0, %s303
      %s307 = sphi 0, %s306
      %s323 = sphi 0, %s307
      %s329 = sphi 0, %s331
      %s332 = sphi 0, %s329
      %s333 = sphi 0, %s332
      %s349 = sphi 0, %s333
      %s355 = sphi 0, %s357
      %s358 = sphi 0, %s355
      %s359 = sphi 0, %s358
      %s375 = sphi 0, %s359
      %s381 = sphi 0, %s383
      %s384 = sphi 0, %s381
      %s385 = sphi 0, %s384
      %s401 = sphi 0, %s385
      %s407 = sphi 0, %s409
      %s410 = sphi 0, %s407
      %s411 = sphi 0, %s410
      %s427 = sphi 0, %s411
      %s433 = sphi 0, %s435
      %s436 = sphi 0, %s433
      %s437 = sphi 0, %s436
      %s453 = sphi 0, %s437
      %s459 = sphi 0, %s461
      %s462 = sphi 0, %s459
      %s463 = sphi 0, %s462
      %s479 = sphi 0, %s463
      %s485 = sphi 0, %s487
      %s488 = sphi 0, %s485
      %s489 = sphi 0, %s488
      %s505 = sphi 0, %s489
      %s511 = sphi 0, %s513
      %s514 = sphi 0, %s511
      %s515 = sphi 0, %s514
      %s531 = sphi 0, %s515
      %s535 = sphi 0, %s535
      %s537 = sphi 0, %s535
      %s538 = sphi 0, %s537
      %s552 = sphi 0, %s538
    $region4: #{tpu_custom_call.1} parent=1 // loop_header_branch
      %30 = sbr.rel (%p28) target = $region8
    $region5: #{tpu_custom_call.1} parent=1 // loop_body
      %s32 = ssub.s32 %s27, 1
      %s33 = ssub.s32 %s27, 2
      %s34 = sadd.s32 %s27, 1
      %s36 = sadd.s32 %s35, 1
      %p39 = scmp.eq.s32.totalorder %s27, 1
      %p40 = scmp.ne.s32.totalorder %s35, %s37
      %p41 = scmp.eq.s32.totalorder %s27, 0
      %p42 = por %p40, %p41
      %p43 = scmp.ne.s32.totalorder %s35, %s37
      %p44 = scmp.eq.s32.totalorder %s32, 1
      %p45 = por %p43, %p44
      %p46 = scmp.ne.s32.totalorder %s37, %s38
      %p47 = scmp.eq.s32.totalorder %s32, 0
      %p48 = por %p46, %p47
      %p49 = scmp.ne.s32.totalorder %s37, %s38
      %p50 = scmp.eq.s32.totalorder %s33, 1
      %p51 = por %p49, %p50
      %p53 = scmp.ne.s32.totalorder %s38, %s52
      %p54 = scmp.eq.s32.totalorder %s33, 0
      %p55 = por %p53, %p54
      %s57 = sadd.s32 %s56, 1
      %p60 = scmp.eq.s32.totalorder %s27, 1
      %p61 = scmp.ne.s32.totalorder %s56, %s58
      %p62 = scmp.eq.s32.totalorder %s27, 0
      %p63 = por %p61, %p62
      %p64 = scmp.ne.s32.totalorder %s56, %s58
      %p65 = scmp.eq.s32.totalorder %s32, 1
      %p66 = por %p64, %p65
      %p67 = scmp.ne.s32.totalorder %s58, %s59
      %p68 = scmp.eq.s32.totalorder %s32, 0
      %p69 = por %p67, %p68
      %p70 = scmp.ne.s32.totalorder %s58, %s59
      %p71 = scmp.eq.s32.totalorder %s33, 1
      %p72 = por %p70, %p71
      %p74 = scmp.ne.s32.totalorder %s59, %s73
      %p75 = scmp.eq.s32.totalorder %s33, 0
      %p76 = por %p74, %p75
      %s78 = sadd.s32 %s77, 1
      %p81 = scmp.eq.s32.totalorder %s27, 1
      %p82 = scmp.ne.s32.totalorder %s77, %s79
      %p83 = scmp.eq.s32.totalorder %s27, 0
      %p84 = por %p82, %p83
      %p85 = scmp.ne.s32.totalorder %s77, %s79
      %p86 = scmp.eq.s32.totalorder %s32, 1
      %p87 = por %p85, %p86
      %p88 = scmp.ne.s32.totalorder %s79, %s80
      %p89 = scmp.eq.s32.totalorder %s32, 0
      %p90 = por %p88, %p89
      %p91 = scmp.ne.s32.totalorder %s79, %s80
      %p92 = scmp.eq.s32.totalorder %s33, 1
      %p93 = por %p91, %p92
      %p95 = scmp.ne.s32.totalorder %s80, %s94
      %p96 = scmp.eq.s32.totalorder %s33, 0
      %p97 = por %p95, %p96
      %s99 = sadd.s32 %s98, 1
      %p102 = scmp.eq.s32.totalorder %s27, 1
      %p103 = scmp.ne.s32.totalorder %s98, %s100
      %p104 = scmp.eq.s32.totalorder %s27, 0
      %p105 = por %p103, %p104
      %p106 = scmp.ne.s32.totalorder %s98, %s100
      %p107 = scmp.eq.s32.totalorder %s32, 1
      %p108 = por %p106, %p107
      %p109 = scmp.ne.s32.totalorder %s100, %s101
      %p110 = scmp.eq.s32.totalorder %s32, 0
      %p111 = por %p109, %p110
      %p112 = scmp.ne.s32.totalorder %s100, %s101
      %p113 = scmp.eq.s32.totalorder %s33, 1
      %p114 = por %p112, %p113
      %p116 = scmp.ne.s32.totalorder %s101, %s115
      %p117 = scmp.eq.s32.totalorder %s33, 0
      %p118 = por %p116, %p117
      %s119 = ssub.s32 %s27, %s34
      %p120 = scmp.eq.s32.totalorder %s119, 0
      %s122 = sadd.s32 %s121, 1
      %s123 = scalar_select %p120, %s121, %s122
      %p126 = pneg %p120
      %p127 = scmp.eq.s32.totalorder %s27, 1
      %p128 = por %p126, %p127
      %p129 = scmp.ne.s32.totalorder %s121, %s124
      %p130 = scmp.eq.s32.totalorder %s27, 0
      %p131 = por %p129, %p130
      %p132 = scmp.ne.s32.totalorder %s121, %s124
      %p133 = scmp.eq.s32.totalorder %s32, 1
      %p134 = por %p132, %p133
      %p135 = scmp.ne.s32.totalorder %s124, %s125
      %p136 = scmp.eq.s32.totalorder %s32, 0
      %p137 = por %p135, %p136
      %p138 = scmp.ne.s32.totalorder %s124, %s125
      %p139 = scmp.eq.s32.totalorder %s33, 1
      %p140 = por %p138, %p139
      %p142 = scmp.ne.s32.totalorder %s125, %s141
      %p143 = scmp.eq.s32.totalorder %s33, 0
      %p144 = por %p142, %p143
      %s145 = ssub.s32 %s27, %s34
      %p146 = scmp.eq.s32.totalorder %s145, 0
      %s148 = sadd.s32 %s147, 1
      %s149 = scalar_select %p146, %s147, %s148
      %p152 = pneg %p146
      %p153 = scmp.eq.s32.totalorder %s27, 1
      %p154 = por %p152, %p153
      %p155 = scmp.ne.s32.totalorder %s147, %s150
      %p156 = scmp.eq.s32.totalorder %s27, 0
      %p157 = por %p155, %p156
      %p158 = scmp.ne.s32.totalorder %s147, %s150
      %p159 = scmp.eq.s32.totalorder %s32, 1
      %p160 = por %p158, %p159
      %p161 = scmp.ne.s32.totalorder %s150, %s151
      %p162 = scmp.eq.s32.totalorder %s32, 0
      %p163 = por %p161, %p162
      %p164 = scmp.ne.s32.totalorder %s150, %s151
      %p165 = scmp.eq.s32.totalorder %s33, 1
      %p166 = por %p164, %p165
      %p168 = scmp.ne.s32.totalorder %s151, %s167
      %p169 = scmp.eq.s32.totalorder %s33, 0
      %p170 = por %p168, %p169
      %s171 = ssub.s32 %s27, %s34
      %p172 = scmp.eq.s32.totalorder %s171, 0
      %s174 = sadd.s32 %s173, 1
      %s175 = scalar_select %p172, %s173, %s174
      %p178 = pneg %p172
      %p179 = scmp.eq.s32.totalorder %s27, 1
      %p180 = por %p178, %p179
      %p181 = scmp.ne.s32.totalorder %s173, %s176
      %p182 = scmp.eq.s32.totalorder %s27, 0
      %p183 = por %p181, %p182
      %p184 = scmp.ne.s32.totalorder %s173, %s176
      %p185 = scmp.eq.s32.totalorder %s32, 1
      %p186 = por %p184, %p185
      %p187 = scmp.ne.s32.totalorder %s176, %s177
      %p188 = scmp.eq.s32.totalorder %s32, 0
      %p189 = por %p187, %p188
      %p190 = scmp.ne.s32.totalorder %s176, %s177
      %p191 = scmp.eq.s32.totalorder %s33, 1
      %p192 = por %p190, %p191
      %p194 = scmp.ne.s32.totalorder %s177, %s193
      %p195 = scmp.eq.s32.totalorder %s33, 0
      %p196 = por %p194, %p195
      %s197 = ssub.s32 %s27, %s34
      %p198 = scmp.eq.s32.totalorder %s197, 0
      %s200 = sadd.s32 %s199, 1
      %s201 = scalar_select %p198, %s199, %s200
      %p204 = pneg %p198
      %p205 = scmp.eq.s32.totalorder %s27, 1
      %p206 = por %p204, %p205
      %p207 = scmp.ne.s32.totalorder %s199, %s202
      %p208 = scmp.eq.s32.totalorder %s27, 0
      %p209 = por %p207, %p208
      %p210 = scmp.ne.s32.totalorder %s199, %s202
      %p211 = scmp.eq.s32.totalorder %s32, 1
      %p212 = por %p210, %p211
      %p213 = scmp.ne.s32.totalorder %s202, %s203
      %p214 = scmp.eq.s32.totalorder %s32, 0
      %p215 = por %p213, %p214
      %p216 = scmp.ne.s32.totalorder %s202, %s203
      %p217 = scmp.eq.s32.totalorder %s33, 1
      %p218 = por %p216, %p217
      %p220 = scmp.ne.s32.totalorder %s203, %s219
      %p221 = scmp.eq.s32.totalorder %s33, 0
      %p222 = por %p220, %p221
      %s223 = ssub.s32 %s27, %s34
      %p224 = scmp.eq.s32.totalorder %s223, 0
      %s226 = sadd.s32 %s225, 1
      %s227 = scalar_select %p224, %s225, %s226
      %p230 = pneg %p224
      %p231 = scmp.eq.s32.totalorder %s27, 1
      %p232 = por %p230, %p231
      %p233 = scmp.ne.s32.totalorder %s225, %s228
      %p234 = scmp.eq.s32.totalorder %s27, 0
      %p235 = por %p233, %p234
      %p236 = scmp.ne.s32.totalorder %s225, %s228
      %p237 = scmp.eq.s32.totalorder %s32, 1
      %p238 = por %p236, %p237
      %p239 = scmp.ne.s32.totalorder %s228, %s229
      %p240 = scmp.eq.s32.totalorder %s32, 0
      %p241 = por %p239, %p240
      %p242 = scmp.ne.s32.totalorder %s228, %s229
      %p243 = scmp.eq.s32.totalorder %s33, 1
      %p244 = por %p242, %p243
      %p246 = scmp.ne.s32.totalorder %s229, %s245
      %p247 = scmp.eq.s32.totalorder %s33, 0
      %p248 = por %p246, %p247
      %s249 = ssub.s32 %s27, %s34
      %p250 = scmp.eq.s32.totalorder %s249, 0
      %s252 = sadd.s32 %s251, 1
      %s253 = scalar_select %p250, %s251, %s252
      %p256 = pneg %p250
      %p257 = scmp.eq.s32.totalorder %s27, 1
      %p258 = por %p256, %p257
      %p259 = scmp.ne.s32.totalorder %s251, %s254
      %p260 = scmp.eq.s32.totalorder %s27, 0
      %p261 = por %p259, %p260
      %p262 = scmp.ne.s32.totalorder %s251, %s254
      %p263 = scmp.eq.s32.totalorder %s32, 1
      %p264 = por %p262, %p263
      %p265 = scmp.ne.s32.totalorder %s254, %s255
      %p266 = scmp.eq.s32.totalorder %s32, 0
      %p267 = por %p265, %p266
      %p268 = scmp.ne.s32.totalorder %s254, %s255
      %p269 = scmp.eq.s32.totalorder %s33, 1
      %p270 = por %p268, %p269
      %p272 = scmp.ne.s32.totalorder %s255, %s271
      %p273 = scmp.eq.s32.totalorder %s33, 0
      %p274 = por %p272, %p273
      %s275 = ssub.s32 %s27, %s34
      %p276 = scmp.eq.s32.totalorder %s275, 0
      %s278 = sadd.s32 %s277, 1
      %s279 = scalar_select %p276, %s277, %s278
      %p282 = pneg %p276
      %p283 = scmp.eq.s32.totalorder %s27, 1
      %p284 = por %p282, %p283
      %p285 = scmp.ne.s32.totalorder %s277, %s280
      %p286 = scmp.eq.s32.totalorder %s27, 0
      %p287 = por %p285, %p286
      %p288 = scmp.ne.s32.totalorder %s277, %s280
      %p289 = scmp.eq.s32.totalorder %s32, 1
      %p290 = por %p288, %p289
      %p291 = scmp.ne.s32.totalorder %s280, %s281
      %p292 = scmp.eq.s32.totalorder %s32, 0
      %p293 = por %p291, %p292
      %p294 = scmp.ne.s32.totalorder %s280, %s281
      %p295 = scmp.eq.s32.totalorder %s33, 1
      %p296 = por %p294, %p295
      %p298 = scmp.ne.s32.totalorder %s281, %s297
      %p299 = scmp.eq.s32.totalorder %s33, 0
      %p300 = por %p298, %p299
      %s301 = ssub.s32 %s27, %s34
      %p302 = scmp.eq.s32.totalorder %s301, 0
      %s304 = sadd.s32 %s303, 1
      %s305 = scalar_select %p302, %s303, %s304
      %p308 = pneg %p302
      %p309 = scmp.eq.s32.totalorder %s27, 1
      %p310 = por %p308, %p309
      %p311 = scmp.ne.s32.totalorder %s303, %s306
      %p312 = scmp.eq.s32.totalorder %s27, 0
      %p313 = por %p311, %p312
      %p314 = scmp.ne.s32.totalorder %s303, %s306
      %p315 = scmp.eq.s32.totalorder %s32, 1
      %p316 = por %p314, %p315
      %p317 = scmp.ne.s32.totalorder %s306, %s307
      %p318 = scmp.eq.s32.totalorder %s32, 0
      %p319 = por %p317, %p318
      %p320 = scmp.ne.s32.totalorder %s306, %s307
      %p321 = scmp.eq.s32.totalorder %s33, 1
      %p322 = por %p320, %p321
      %p324 = scmp.ne.s32.totalorder %s307, %s323
      %p325 = scmp.eq.s32.totalorder %s33, 0
      %p326 = por %p324, %p325
      %s327 = ssub.s32 %s27, %s34
      %p328 = scmp.eq.s32.totalorder %s327, 0
      %s330 = sadd.s32 %s329, 1
      %s331 = scalar_select %p328, %s329, %s330
      %p334 = pneg %p328
      %p335 = scmp.eq.s32.totalorder %s27, 1
      %p336 = por %p334, %p335
      %p337 = scmp.ne.s32.totalorder %s329, %s332
      %p338 = scmp.eq.s32.totalorder %s27, 0
      %p339 = por %p337, %p338
      %p340 = scmp.ne.s32.totalorder %s329, %s332
      %p341 = scmp.eq.s32.totalorder %s32, 1
      %p342 = por %p340, %p341
      %p343 = scmp.ne.s32.totalorder %s332, %s333
      %p344 = scmp.eq.s32.totalorder %s32, 0
      %p345 = por %p343, %p344
      %p346 = scmp.ne.s32.totalorder %s332, %s333
      %p347 = scmp.eq.s32.totalorder %s33, 1
      %p348 = por %p346, %p347
      %p350 = scmp.ne.s32.totalorder %s333, %s349
      %p351 = scmp.eq.s32.totalorder %s33, 0
      %p352 = por %p350, %p351
      %s353 = ssub.s32 %s27, %s34
      %p354 = scmp.eq.s32.totalorder %s353, 0
      %s356 = sadd.s32 %s355, 1
      %s357 = scalar_select %p354, %s355, %s356
      %p360 = pneg %p354
      %p361 = scmp.eq.s32.totalorder %s27, 1
      %p362 = por %p360, %p361
      %p363 = scmp.ne.s32.totalorder %s355, %s358
      %p364 = scmp.eq.s32.totalorder %s27, 0
      %p365 = por %p363, %p364
      %p366 = scmp.ne.s32.totalorder %s355, %s358
      %p367 = scmp.eq.s32.totalorder %s32, 1
      %p368 = por %p366, %p367
      %p369 = scmp.ne.s32.totalorder %s358, %s359
      %p370 = scmp.eq.s32.totalorder %s32, 0
      %p371 = por %p369, %p370
      %p372 = scmp.ne.s32.totalorder %s358, %s359
      %p373 = scmp.eq.s32.totalorder %s33, 1
      %p374 = por %p372, %p373
      %p376 = scmp.ne.s32.totalorder %s359, %s375
      %p377 = scmp.eq.s32.totalorder %s33, 0
      %p378 = por %p376, %p377
      %s379 = ssub.s32 %s27, %s34
      %p380 = scmp.eq.s32.totalorder %s379, 0
      %s382 = sadd.s32 %s381, 1
      %s383 = scalar_select %p380, %s381, %s382
      %p386 = pneg %p380
      %p387 = scmp.eq.s32.totalorder %s27, 1
      %p388 = por %p386, %p387
      %p389 = scmp.ne.s32.totalorder %s381, %s384
      %p390 = scmp.eq.s32.totalorder %s27, 0
      %p391 = por %p389, %p390
      %p392 = scmp.ne.s32.totalorder %s381, %s384
      %p393 = scmp.eq.s32.totalorder %s32, 1
      %p394 = por %p392, %p393
      %p395 = scmp.ne.s32.totalorder %s384, %s385
      %p396 = scmp.eq.s32.totalorder %s32, 0
      %p397 = por %p395, %p396
      %p398 = scmp.ne.s32.totalorder %s384, %s385
      %p399 = scmp.eq.s32.totalorder %s33, 1
      %p400 = por %p398, %p399
      %p402 = scmp.ne.s32.totalorder %s385, %s401
      %p403 = scmp.eq.s32.totalorder %s33, 0
      %p404 = por %p402, %p403
      %s405 = ssub.s32 %s27, %s34
      %p406 = scmp.eq.s32.totalorder %s405, 0
      %s408 = sadd.s32 %s407, 1
      %s409 = scalar_select %p406, %s407, %s408
      %p412 = pneg %p406
      %p413 = scmp.eq.s32.totalorder %s27, 1
      %p414 = por %p412, %p413
      %p415 = scmp.ne.s32.totalorder %s407, %s410
      %p416 = scmp.eq.s32.totalorder %s27, 0
      %p417 = por %p415, %p416
      %p418 = scmp.ne.s32.totalorder %s407, %s410
      %p419 = scmp.eq.s32.totalorder %s32, 1
      %p420 = por %p418, %p419
      %p421 = scmp.ne.s32.totalorder %s410, %s411
      %p422 = scmp.eq.s32.totalorder %s32, 0
      %p423 = por %p421, %p422
      %p424 = scmp.ne.s32.totalorder %s410, %s411
      %p425 = scmp.eq.s32.totalorder %s33, 1
      %p426 = por %p424, %p425
      %p428 = scmp.ne.s32.totalorder %s411, %s427
      %p429 = scmp.eq.s32.totalorder %s33, 0
      %p430 = por %p428, %p429
      %s431 = ssub.s32 %s27, %s34
      %p432 = scmp.eq.s32.totalorder %s431, 0
      %s434 = sadd.s32 %s433, 1
      %s435 = scalar_select %p432, %s433, %s434
      %p438 = pneg %p432
      %p439 = scmp.eq.s32.totalorder %s27, 1
      %p440 = por %p438, %p439
      %p441 = scmp.ne.s32.totalorder %s433, %s436
      %p442 = scmp.eq.s32.totalorder %s27, 0
      %p443 = por %p441, %p442
      %p444 = scmp.ne.s32.totalorder %s433, %s436
      %p445 = scmp.eq.s32.totalorder %s32, 1
      %p446 = por %p444, %p445
      %p447 = scmp.ne.s32.totalorder %s436, %s437
      %p448 = scmp.eq.s32.totalorder %s32, 0
      %p449 = por %p447, %p448
      %p450 = scmp.ne.s32.totalorder %s436, %s437
      %p451 = scmp.eq.s32.totalorder %s33, 1
      %p452 = por %p450, %p451
      %p454 = scmp.ne.s32.totalorder %s437, %s453
      %p455 = scmp.eq.s32.totalorder %s33, 0
      %p456 = por %p454, %p455
      %s457 = ssub.s32 %s27, %s34
      %p458 = scmp.eq.s32.totalorder %s457, 0
      %s460 = sadd.s32 %s459, 1
      %s461 = scalar_select %p458, %s459, %s460
      %p464 = pneg %p458
      %p465 = scmp.eq.s32.totalorder %s27, 1
      %p466 = por %p464, %p465
      %p467 = scmp.ne.s32.totalorder %s459, %s462
      %p468 = scmp.eq.s32.totalorder %s27, 0
      %p469 = por %p467, %p468
      %p470 = scmp.ne.s32.totalorder %s459, %s462
      %p471 = scmp.eq.s32.totalorder %s32, 1
      %p472 = por %p470, %p471
      %p473 = scmp.ne.s32.totalorder %s462, %s463
      %p474 = scmp.eq.s32.totalorder %s32, 0
      %p475 = por %p473, %p474
      %p476 = scmp.ne.s32.totalorder %s462, %s463
      %p477 = scmp.eq.s32.totalorder %s33, 1
      %p478 = por %p476, %p477
      %p480 = scmp.ne.s32.totalorder %s463, %s479
      %p481 = scmp.eq.s32.totalorder %s33, 0
      %p482 = por %p480, %p481
      %s483 = ssub.s32 %s27, %s34
      %p484 = scmp.eq.s32.totalorder %s483, 0
      %s486 = sadd.s32 %s485, 1
      %s487 = scalar_select %p484, %s485, %s486
      %p490 = pneg %p484
      %p491 = scmp.eq.s32.totalorder %s27, 1
      %p492 = por %p490, %p491
      %p493 = scmp.ne.s32.totalorder %s485, %s488
      %p494 = scmp.eq.s32.totalorder %s27, 0
      %p495 = por %p493, %p494
      %p496 = scmp.ne.s32.totalorder %s485, %s488
      %p497 = scmp.eq.s32.totalorder %s32, 1
      %p498 = por %p496, %p497
      %p499 = scmp.ne.s32.totalorder %s488, %s489
      %p500 = scmp.eq.s32.totalorder %s32, 0
      %p501 = por %p499, %p500
      %p502 = scmp.ne.s32.totalorder %s488, %s489
      %p503 = scmp.eq.s32.totalorder %s33, 1
      %p504 = por %p502, %p503
      %p506 = scmp.ne.s32.totalorder %s489, %s505
      %p507 = scmp.eq.s32.totalorder %s33, 0
      %p508 = por %p506, %p507
      %s509 = ssub.s32 %s27, %s34
      %p510 = scmp.eq.s32.totalorder %s509, 0
      %s512 = sadd.s32 %s511, 1
      %s513 = scalar_select %p510, %s511, %s512
      %p516 = pneg %p510
      %p517 = scmp.eq.s32.totalorder %s27, 1
      %p518 = por %p516, %p517
      %p519 = scmp.ne.s32.totalorder %s511, %s514
      %p520 = scmp.eq.s32.totalorder %s27, 0
      %p521 = por %p519, %p520
      %p522 = scmp.ne.s32.totalorder %s511, %s514
      %p523 = scmp.eq.s32.totalorder %s32, 1
      %p524 = por %p522, %p523
      %p525 = scmp.ne.s32.totalorder %s514, %s515
      %p526 = scmp.eq.s32.totalorder %s32, 0
      %p527 = por %p525, %p526
      %p528 = scmp.ne.s32.totalorder %s514, %s515
      %p529 = scmp.eq.s32.totalorder %s33, 1
      %p530 = por %p528, %p529
      %p532 = scmp.ne.s32.totalorder %s515, %s531
      %p533 = scmp.eq.s32.totalorder %s33, 0
      %p534 = por %p532, %p533
      %s536 = sadd.s32 %s535, 1
      %p539 = scmp.eq.s32.totalorder %s27, 1
      %p540 = scmp.ne.s32.totalorder %s535, %s537
      %p541 = scmp.eq.s32.totalorder %s27, 0
      %p542 = por %p540, %p541
      %p543 = scmp.ne.s32.totalorder %s535, %s537
      %p544 = scmp.eq.s32.totalorder %s32, 1
      %p545 = por %p543, %p544
      %p546 = scmp.ne.s32.totalorder %s537, %s538
      %p547 = scmp.eq.s32.totalorder %s32, 0
      %p548 = por %p546, %p547
      %p549 = scmp.ne.s32.totalorder %s537, %s538
      %p550 = scmp.eq.s32.totalorder %s33, 1
      %p551 = por %p549, %p550
      %p553 = scmp.ne.s32.totalorder %s538, %s552
      %p554 = scmp.eq.s32.totalorder %s33, 0
      %p555 = por %p553, %p554
      %p556 = scmp.le.s32.totalorder 1, %s27
      %p557 = scmp.lt.s32.totalorder %s27, 3
      %p558 = pnand %p556, %p557
      %p559 = pneg %p558
      // Predicated region
      $region9: #{tpu_custom_call.1} parent=5 // pred_check
        _
      $region10: #{tpu_custom_call.1} parent=5 // pred_check_branch
        %561 = sbr.rel (%p558) target = $region12
      $region11: #{tpu_custom_call.1} parent=5 // pred_region
        %s562 = ssub.s32 %s27, 1
        // Predicated region
        $region13: #{tpu_custom_call.1} parent=11 // pred_check
          %p563 = pneg %p48
        $region14: #{tpu_custom_call.1} parent=11 // pred_check_branch
          %565 = sbr.rel (%p563) target = $region16
        $region15: #{tpu_custom_call.1} parent=11 // pred_region
          _
        $region16: #{tpu_custom_call.1} parent=11 // pred_fallthru
          _
        // Predicated region
        $region17: #{tpu_custom_call.1} parent=11 // pred_check
          %p566 = pneg %p69
        $region18: #{tpu_custom_call.1} parent=11 // pred_check_branch
          %568 = sbr.rel (%p566) target = $region20
        $region19: #{tpu_custom_call.1} parent=11 // pred_region
          _
        $region20: #{tpu_custom_call.1} parent=11 // pred_fallthru
          _
        // Predicated region
        $region21: #{tpu_custom_call.1} parent=11 // pred_check
          %p569 = pneg %p90
        $region22: #{tpu_custom_call.1} parent=11 // pred_check_branch
          %571 = sbr.rel (%p569) target = $region24
        $region23: #{tpu_custom_call.1} parent=11 // pred_region
          _
        $region24: #{tpu_custom_call.1} parent=11 // pred_fallthru
          _
        // Predicated region
        $region25: #{tpu_custom_call.1} parent=11 // pred_check
          %p572 = pneg %p111
        $region26: #{tpu_custom_call.1} parent=11 // pred_check_branch
          %574 = sbr.rel (%p572) target = $region28
        $region27: #{tpu_custom_call.1} parent=11 // pred_region
          _
        $region28: #{tpu_custom_call.1} parent=11 // pred_fallthru
          _
      $region12: #{tpu_custom_call.1} parent=5 // pred_fallthru
        _
      %p575 = scmp.lt.s32.totalorder %s27, 2
      // Predicated region
      $region29: #{tpu_custom_call.1} parent=5 // pred_check
        %p576 = pneg %p575
      $region30: #{tpu_custom_call.1} parent=5 // pred_check_branch
        %578 = sbr.rel (%p576) target = $region32
      $region31: #{tpu_custom_call.1} parent=5 // pred_region
        // Predicated region
        $region33: #{tpu_custom_call.1} parent=31 // pred_check
          %p579 = pneg %p131
        $region34: #{tpu_custom_call.1} parent=31 // pred_check_branch
          %581 = sbr.rel (%p579) target = $region36
        $region35: #{tpu_custom_call.1} parent=31 // pred_region
          %p582 = scmp.lt.s32.totalorder %s27, 1
          %s583 = scalar_select %p582, %s27, 1
          %s584 = smul.addr %s583, 64
          %s585 = smul.addr %s584, 4
          %s586 = scalar_lea.vmem %s4, %s585
        $region36: #{tpu_custom_call.1} parent=31 // pred_fallthru
          _
        // Predicated region
        $region37: #{tpu_custom_call.1} parent=31 // pred_check
          %p587 = pneg %p157
        $region38: #{tpu_custom_call.1} parent=31 // pred_check_branch
          %589 = sbr.rel (%p587) target = $region40
        $region39: #{tpu_custom_call.1} parent=31 // pred_region
          %p590 = scmp.lt.s32.totalorder %s27, 1
          %s591 = scalar_select %p590, %s27, 1
          %s592 = smul.addr %s591, 4
          %s593 = scalar_lea.vmem %s5, %s592
        $region40: #{tpu_custom_call.1} parent=31 // pred_fallthru
          _
        // Predicated region
        $region41: #{tpu_custom_call.1} parent=31 // pred_check
          %p594 = pneg %p183
        $region42: #{tpu_custom_call.1} parent=31 // pred_check_branch
          %596 = sbr.rel (%p594) target = $region44
        $region43: #{tpu_custom_call.1} parent=31 // pred_region
          %p597 = scmp.lt.s32.totalorder %s27, 1
          %s598 = scalar_select %p597, %s27, 1
          %s599 = smul.addr %s598, 64
          %s600 = smul.addr %s599, 4
          %s601 = scalar_lea.vmem %s6, %s600
        $region44: #{tpu_custom_call.1} parent=31 // pred_fallthru
          _
        // Predicated region
        $region45: #{tpu_custom_call.1} parent=31 // pred_check
          %p602 = pneg %p209
        $region46: #{tpu_custom_call.1} parent=31 // pred_check_branch
          %604 = sbr.rel (%p602) target = $region48
        $region47: #{tpu_custom_call.1} parent=31 // pred_region
          %p605 = scmp.lt.s32.totalorder %s27, 1
          %s606 = scalar_select %p605, %s27, 1
          %s607 = smul.addr %s606, 4
          %s608 = scalar_lea.vmem %s7, %s607
        $region48: #{tpu_custom_call.1} parent=31 // pred_fallthru
          _
        // Predicated region
        $region49: #{tpu_custom_call.1} parent=31 // pred_check
          %p609 = pneg %p235
        $region50: #{tpu_custom_call.1} parent=31 // pred_check_branch
          %611 = sbr.rel (%p609) target = $region52
        $region51: #{tpu_custom_call.1} parent=31 // pred_region
          %p612 = scmp.lt.s32.totalorder %s27, 1
          %s613 = scalar_select %p612, %s27, 1
          %s614 = smul.addr %s613, 64
          %s615 = smul.addr %s614, 4
          %s616 = scalar_lea.vmem %s8, %s615
        $region52: #{tpu_custom_call.1} parent=31 // pred_fallthru
          _
        // Predicated region
        $region53: #{tpu_custom_call.1} parent=31 // pred_check
          %p617 = pneg %p261
        $region54: #{tpu_custom_call.1} parent=31 // pred_check_branch
          %619 = sbr.rel (%p617) target = $region56
        $region55: #{tpu_custom_call.1} parent=31 // pred_region
          %p620 = scmp.lt.s32.totalorder %s27, 1
          %s621 = scalar_select %p620, %s27, 1
          %s622 = smul.addr %s621, 4
          %s623 = scalar_lea.vmem %s9, %s622
        $region56: #{tpu_custom_call.1} parent=31 // pred_fallthru
          _
        // Predicated region
        $region57: #{tpu_custom_call.1} parent=31 // pred_check
          %p624 = pneg %p287
        $region58: #{tpu_custom_call.1} parent=31 // pred_check_branch
          %626 = sbr.rel (%p624) target = $region60
        $region59: #{tpu_custom_call.1} parent=31 // pred_region
          %p627 = scmp.lt.s32.totalorder %s27, 1
          %s628 = scalar_select %p627, %s27, 1
          %s629 = smul.addr %s628, 16
          %s630 = smul.addr %s629, 4
          %s631 = scalar_lea.vmem %s10, %s630
        $region60: #{tpu_custom_call.1} parent=31 // pred_fallthru
          _
        // Predicated region
        $region61: #{tpu_custom_call.1} parent=31 // pred_check
          %p632 = pneg %p313
        $region62: #{tpu_custom_call.1} parent=31 // pred_check_branch
          %634 = sbr.rel (%p632) target = $region64
        $region63: #{tpu_custom_call.1} parent=31 // pred_region
          %p635 = scmp.lt.s32.totalorder %s27, 1
          %s636 = scalar_select %p635, %s27, 1
          %s637 = scalar_lea.vmem %s11, %s636
        $region64: #{tpu_custom_call.1} parent=31 // pred_fallthru
          _
        // Predicated region
        $region65: #{tpu_custom_call.1} parent=31 // pred_check
          %p638 = pneg %p339
        $region66: #{tpu_custom_call.1} parent=31 // pred_check_branch
          %640 = sbr.rel (%p638) target = $region68
        $region67: #{tpu_custom_call.1} parent=31 // pred_region
          %p641 = scmp.lt.s32.totalorder %s27, 1
          %s642 = scalar_select %p641, %s27, 1
          %s643 = scalar_lea.vmem %s12, %s642
        $region68: #{tpu_custom_call.1} parent=31 // pred_fallthru
          _
        // Predicated region
        $region69: #{tpu_custom_call.1} parent=31 // pred_check
          %p644 = pneg %p365
        $region70: #{tpu_custom_call.1} parent=31 // pred_check_branch
          %646 = sbr.rel (%p644) target = $region72
        $region71: #{tpu_custom_call.1} parent=31 // pred_region
          %p647 = scmp.lt.s32.totalorder %s27, 1
          %s648 = scalar_select %p647, %s27, 1
          %s649 = scalar_lea.vmem %s13, %s648
        $region72: #{tpu_custom_call.1} parent=31 // pred_fallthru
          _
        // Predicated region
        $region73: #{tpu_custom_call.1} parent=31 // pred_check
          %p650 = pneg %p391
        $region74: #{tpu_custom_call.1} parent=31 // pred_check_branch
          %652 = sbr.rel (%p650) target = $region76
        $region75: #{tpu_custom_call.1} parent=31 // pred_region
          %p653 = scmp.lt.s32.totalorder %s27, 1
          %s654 = scalar_select %p653, %s27, 1
          %s655 = smul.addr %s654, 64
          %s656 = smul.addr %s655, 4
          %s657 = scalar_lea.vmem %s14, %s656
        $region76: #{tpu_custom_call.1} parent=31 // pred_fallthru
          _
        // Predicated region
        $region77: #{tpu_custom_call.1} parent=31 // pred_check
          %p658 = pneg %p417
        $region78: #{tpu_custom_call.1} parent=31 // pred_check_branch
          %660 = sbr.rel (%p658) target = $region80
        $region79: #{tpu_custom_call.1} parent=31 // pred_region
          %p661 = scmp.lt.s32.totalorder %s27, 1
          %s662 = scalar_select %p661, %s27, 1
          %s663 = smul.addr %s662, 4
          %s664 = scalar_lea.vmem %s15, %s663
        $region80: #{tpu_custom_call.1} parent=31 // pred_fallthru
          _
        // Predicated region
        $region81: #{tpu_custom_call.1} parent=31 // pred_check
          %p665 = pneg %p443
        $region82: #{tpu_custom_call.1} parent=31 // pred_check_branch
          %667 = sbr.rel (%p665) target = $region84
        $region83: #{tpu_custom_call.1} parent=31 // pred_region
          %p668 = scmp.lt.s32.totalorder %s27, 1
          %s669 = scalar_select %p668, %s27, 1
          %s670 = smul.addr %s669, 64
          %s671 = smul.addr %s670, 4
          %s672 = scalar_lea.vmem %s16, %s671
        $region84: #{tpu_custom_call.1} parent=31 // pred_fallthru
          _
        // Predicated region
        $region85: #{tpu_custom_call.1} parent=31 // pred_check
          %p673 = pneg %p469
        $region86: #{tpu_custom_call.1} parent=31 // pred_check_branch
          %675 = sbr.rel (%p673) target = $region88
        $region87: #{tpu_custom_call.1} parent=31 // pred_region
          %p676 = scmp.lt.s32.totalorder %s27, 1
          %s677 = scalar_select %p676, %s27, 1
          %s678 = scalar_lea.vmem %s17, %s677
        $region88: #{tpu_custom_call.1} parent=31 // pred_fallthru
          _
        // Predicated region
        $region89: #{tpu_custom_call.1} parent=31 // pred_check
          %p679 = pneg %p495
        $region90: #{tpu_custom_call.1} parent=31 // pred_check_branch
          %681 = sbr.rel (%p679) target = $region92
        $region91: #{tpu_custom_call.1} parent=31 // pred_region
          %p682 = scmp.lt.s32.totalorder %s27, 1
          %s683 = scalar_select %p682, %s27, 1
          %s684 = scalar_lea.vmem %s18, %s683
        $region92: #{tpu_custom_call.1} parent=31 // pred_fallthru
          _
        // Predicated region
        $region93: #{tpu_custom_call.1} parent=31 // pred_check
          %p685 = pneg %p521
        $region94: #{tpu_custom_call.1} parent=31 // pred_check_branch
          %687 = sbr.rel (%p685) target = $region96
        $region95: #{tpu_custom_call.1} parent=31 // pred_region
          %p688 = scmp.lt.s32.totalorder %s27, 1
          %s689 = scalar_select %p688, %s27, 1
          %s690 = scalar_lea.vmem %s19, %s689
        $region96: #{tpu_custom_call.1} parent=31 // pred_fallthru
          _
      $region32: #{tpu_custom_call.1} parent=5 // pred_fallthru
        _
      %p691 = scmp.le.s32.totalorder 1, %s27
      %p692 = scmp.lt.s32.totalorder %s27, 3
      %p693 = pnand %p691, %p692
      %p694 = pneg %p693
      // Predicated region
      $region97: #{tpu_custom_call.1} parent=5 // pred_check
        _
      $region98: #{tpu_custom_call.1} parent=5 // pred_check_branch
        %696 = sbr.rel (%p693) target = $region100
      $region99: #{tpu_custom_call.1} parent=5 // pred_region
        %s697 = ssub.s32 %s27, 1
        %p698 = pneg %p48
        %p699 = pneg %p45
        %p700 = pneg %p69
        %p701 = pneg %p66
        %p702 = pneg %p90
        %p703 = pneg %p87
        %p704 = pneg %p111
        %p705 = pneg %p108
        %p706 = scmp.lt.s32.totalorder %s32, 1
        %s707 = scalar_select %p706, %s32, 1
        %s708 = smul.addr %s707, 64
        %s709 = smul.addr %s708, 4
        %s710 = scalar_lea.vmem %s4, %s709
        %p711 = pneg %p137
        %p712 = pneg %p134
        %p713 = scmp.lt.s32.totalorder %s32, 1
        %s714 = scalar_select %p713, %s32, 1
        %s715 = smul.addr %s714, 4
        %s716 = scalar_lea.vmem %s5, %s715
        %p717 = pneg %p163
        %p718 = pneg %p160
        %p719 = scmp.lt.s32.totalorder %s32, 1
        %s720 = scalar_select %p719, %s32, 1
        %s721 = smul.addr %s720, 64
        %s722 = smul.addr %s721, 4
        %s723 = scalar_lea.vmem %s6, %s722
        %p724 = pneg %p189
        %p725 = pneg %p186
        %p726 = scmp.lt.s32.totalorder %s32, 1
        %s727 = scalar_select %p726, %s32, 1
        %s728 = smul.addr %s727, 4
        %s729 = scalar_lea.vmem %s7, %s728
        %p730 = pneg %p215
        %p731 = pneg %p212
        %p732 = scmp.lt.s32.totalorder %s32, 1
        %s733 = scalar_select %p732, %s32, 1
        %s734 = smul.addr %s733, 64
        %s735 = smul.addr %s734, 4
        %s736 = scalar_lea.vmem %s8, %s735
        %p737 = pneg %p241
        %p738 = pneg %p238
        %p739 = scmp.lt.s32.totalorder %s32, 1
        %s740 = scalar_select %p739, %s32, 1
        %s741 = smul.addr %s740, 4
        %s742 = scalar_lea.vmem %s9, %s741
        %p743 = pneg %p267
        %p744 = pneg %p264
        %p745 = scmp.lt.s32.totalorder %s32, 1
        %s746 = scalar_select %p745, %s32, 1
        %s747 = smul.addr %s746, 16
        %s748 = smul.addr %s747, 4
        %s749 = scalar_lea.vmem %s10, %s748
        %p750 = pneg %p293
        %p751 = pneg %p290
        %p752 = scmp.lt.s32.totalorder %s32, 1
        %s753 = scalar_select %p752, %s32, 1
        %s754 = scalar_lea.vmem %s11, %s753
        %p755 = pneg %p319
        %p756 = pneg %p316
        %p757 = scmp.lt.s32.totalorder %s32, 1
        %s758 = scalar_select %p757, %s32, 1
        %s759 = scalar_lea.vmem %s12, %s758
        %p760 = pneg %p345
        %p761 = pneg %p342
        %p762 = scmp.lt.s32.totalorder %s32, 1
        %s763 = scalar_select %p762, %s32, 1
        %s764 = scalar_lea.vmem %s13, %s763
        %p765 = pneg %p371
        %p766 = pneg %p368
        %p767 = scmp.lt.s32.totalorder %s32, 1
        %s768 = scalar_select %p767, %s32, 1
        %s769 = smul.addr %s768, 64
        %s770 = smul.addr %s769, 4
        %s771 = scalar_lea.vmem %s14, %s770
        %p772 = pneg %p397
        %p773 = pneg %p394
        %p774 = scmp.lt.s32.totalorder %s32, 1
        %s775 = scalar_select %p774, %s32, 1
        %s776 = smul.addr %s775, 4
        %s777 = scalar_lea.vmem %s15, %s776
        %p778 = pneg %p423
        %p779 = pneg %p420
        %p780 = scmp.lt.s32.totalorder %s32, 1
        %s781 = scalar_select %p780, %s32, 1
        %s782 = smul.addr %s781, 64
        %s783 = smul.addr %s782, 4
        %s784 = scalar_lea.vmem %s16, %s783
        %p785 = pneg %p449
        %p786 = pneg %p446
        %p787 = scmp.lt.s32.totalorder %s32, 1
        %s788 = scalar_select %p787, %s32, 1
        %s789 = scalar_lea.vmem %s17, %s788
        %p790 = pneg %p475
        %p791 = pneg %p472
        %p792 = scmp.lt.s32.totalorder %s32, 1
        %s793 = scalar_select %p792, %s32, 1
        %s794 = scalar_lea.vmem %s18, %s793
        %p795 = pneg %p501
        %p796 = pneg %p498
        %p797 = scmp.lt.s32.totalorder %s32, 1
        %s798 = scalar_select %p797, %s32, 1
        %s799 = scalar_lea.vmem %s19, %s798
        %p800 = pneg %p527
        %p801 = pneg %p524
        %p802 = pneg %p548
        %p803 = pneg %p545
        %p804 = scmp.lt.s32.totalorder %s32, 1
        %s805 = scalar_select %p804, %s32, 1
        %s806 = smul.addr %s805, 64
        %s807 = smul.addr %s806, 4
        %s808 = scalar_lea.vmem %s4, %s807
        %p809 = scmp.lt.s32.totalorder %s32, 1
        %s810 = scalar_select %p809, %s32, 1
        %s811 = smul.addr %s810, 4
        %s812 = scalar_lea.vmem %s5, %s811
        %p813 = scmp.lt.s32.totalorder %s32, 1
        %s814 = scalar_select %p813, %s32, 1
        %s815 = smul.addr %s814, 64
        %s816 = smul.addr %s815, 4
        %s817 = scalar_lea.vmem %s6, %s816
        %p818 = scmp.lt.s32.totalorder %s32, 1
        %s819 = scalar_select %p818, %s32, 1
        %s820 = smul.addr %s819, 4
        %s821 = scalar_lea.vmem %s7, %s820
        %p822 = scmp.lt.s32.totalorder %s32, 1
        %s823 = scalar_select %p822, %s32, 1
        %s824 = smul.addr %s823, 64
        %s825 = smul.addr %s824, 4
        %s826 = scalar_lea.vmem %s8, %s825
        %p827 = scmp.lt.s32.totalorder %s32, 1
        %s828 = scalar_select %p827, %s32, 1
        %s829 = smul.addr %s828, 4
        %s830 = scalar_lea.vmem %s9, %s829
        %p831 = scmp.lt.s32.totalorder %s32, 1
        %s832 = scalar_select %p831, %s32, 1
        %s833 = smul.addr %s832, 16
        %s834 = smul.addr %s833, 4
        %s835 = scalar_lea.vmem %s10, %s834
        %p836 = scmp.lt.s32.totalorder %s32, 1
        %s837 = scalar_select %p836, %s32, 1
        %s838 = scalar_lea.vmem %s11, %s837
        %p839 = scmp.lt.s32.totalorder %s32, 1
        %s840 = scalar_select %p839, %s32, 1
        %s841 = scalar_lea.vmem %s12, %s840
        %p842 = scmp.lt.s32.totalorder %s32, 1
        %s843 = scalar_select %p842, %s32, 1
        %s844 = scalar_lea.vmem %s13, %s843
        %p845 = scmp.lt.s32.totalorder %s32, 1
        %s846 = scalar_select %p845, %s32, 1
        %s847 = smul.addr %s846, 64
        %s848 = smul.addr %s847, 4
        %s849 = scalar_lea.vmem %s14, %s848
        %p850 = scmp.lt.s32.totalorder %s32, 1
        %s851 = scalar_select %p850, %s32, 1
        %s852 = smul.addr %s851, 4
        %s853 = scalar_lea.vmem %s15, %s852
        %p854 = scmp.lt.s32.totalorder %s32, 1
        %s855 = scalar_select %p854, %s32, 1
        %s856 = smul.addr %s855, 64
        %s857 = smul.addr %s856, 4
        %s858 = scalar_lea.vmem %s16, %s857
        %p859 = scmp.lt.s32.totalorder %s32, 1
        %s860 = scalar_select %p859, %s32, 1
        %s861 = scalar_lea.vmem %s17, %s860
        %p862 = scmp.lt.s32.totalorder %s32, 1
        %s863 = scalar_select %p862, %s32, 1
        %s864 = scalar_lea.vmem %s18, %s863
        %p865 = scmp.lt.s32.totalorder %s32, 1
        %s866 = scalar_select %p865, %s32, 1
        %s867 = scalar_lea.vmem %s19, %s866
        %p869 = scmp.eq.s32.totalorder %s32, 0
        // Predicated region
        $region101: #{tpu_custom_call.1} parent=99 // pred_check
          %p870 = pneg %p869
        $region102: #{tpu_custom_call.1} parent=99 // pred_check_branch
          %872 = sbr.rel (%p870) target = $region104
        $region103: #{tpu_custom_call.1} parent=99 // pred_region
          %v873 = vld [vmem:[%s0] sm:$0xff]
          %v874 = vld [vmem:[%s0 + $0x8] sm:$0xff]
          %v875 = vld [vmem:[%s2] sm:$0x1]
          %v876 = vld [vmem:[%s3] sm:$0x1]
          %877 = vadd.xlane.f32.xlu0 %v873
          %v878 = vpop.xlane.xlu0 %877
          %879 = vadd.xlane.f32.xlu0 %v874
          %v880 = vpop.xlane.xlu0 %879
          %v881 = vrcp.pop 128.0
          %v882 = vmul.f32 %v878, %v881
          %v883 = vmul.f32 %v880, %v881
          %v884 = vsub.f32 %v873, %v882
          %v885 = vsub.f32 %v874, %v883
          %v886 = vmul.f32 %v884, %v884
          %v887 = vmul.f32 %v885, %v885
          %888 = vadd.xlane.f32.xlu0 %v886
          %v889 = vpop.xlane.xlu0 %888
          %890 = vadd.xlane.f32.xlu0 %v887
          %v891 = vpop.xlane.xlu0 %890
          %v892 = vmul.f32 %v889, %v881
          %v893 = vmul.f32 %v891, %v881
          %v894 = vadd.f32 %v892, 1e-12
          %v895 = vadd.f32 %v893, 1e-12
          %v896 = vrsqrt.pop %v894
          %v897 = vrsqrt.pop %v895
          %v898 = vmul.f32 %v884, %v896
          %v899 = vmul.f32 %v885, %v897
          %v901 = vlaneseq
          %v902 = vshrl.u32 %v901, 7
          %v903 = vsub.s32 0, %v902
          %v904 = vrot.slane %v875, %v903
          %v906 = vmul.f32 %v898, %v904
          %v907 = vmul.f32 %v899, %v904
          %v909 = vlaneseq
          %v910 = vshrl.u32 %v909, 7
          %v911 = vsub.s32 0, %v910
          %v912 = vrot.slane %v876, %v911
          %v914 = vadd.f32 %v906, %v912
          %v915 = vadd.f32 %v907, %v912
          %916 = vst [vmem:[#allocation2] sm:$0xff] %v914
          %917 = vst [vmem:[#allocation2 + $0x8] sm:$0xff] %v915
        $region104: #{tpu_custom_call.1} parent=99 // pred_fallthru
          _
        %v918 = vld [vmem:[#allocation2] sm:$0xff]
        %v919 = vld [vmem:[#allocation2 + $0x8] sm:$0xff]
        %v920 = vld [vmem:[%s1] sm:$0x3]
        %v921 = vld [vmem:[%s808] sm:$0xf]
        %v922 = vld [vmem:[%s808 + $0x4] sm:$0xf]
        %v923 = vld [vmem:[%s808 + $0x8] sm:$0xf]
        %v924 = vld [vmem:[%s808 + $0xc] sm:$0xf]
        %v925 = vld [vmem:[%s808 + $0x10] sm:$0xf]
        %v926 = vld [vmem:[%s808 + $0x14] sm:$0xf]
        %v927 = vld [vmem:[%s808 + $0x18] sm:$0xf]
        %v928 = vld [vmem:[%s808 + $0x1c] sm:$0xf]
        %v929 = vld [vmem:[%s808 + $0x20] sm:$0xf]
        %v930 = vld [vmem:[%s808 + $0x24] sm:$0xf]
        %v931 = vld [vmem:[%s808 + $0x28] sm:$0xf]
        %v932 = vld [vmem:[%s808 + $0x2c] sm:$0xf]
        %v933 = vld [vmem:[%s808 + $0x30] sm:$0xf]
        %v934 = vld [vmem:[%s808 + $0x34] sm:$0xf]
        %v935 = vld [vmem:[%s808 + $0x38] sm:$0xf]
        %v936 = vld [vmem:[%s808 + $0x3c] sm:$0xf]
        %v937 = vld [vmem:[%s808 + $0x40] sm:$0xf]
        %v938 = vld [vmem:[%s808 + $0x44] sm:$0xf]
        %v939 = vld [vmem:[%s808 + $0x48] sm:$0xf]
        %v940 = vld [vmem:[%s808 + $0x4c] sm:$0xf]
        %v941 = vld [vmem:[%s808 + $0x50] sm:$0xf]
        %v942 = vld [vmem:[%s808 + $0x54] sm:$0xf]
        %v943 = vld [vmem:[%s808 + $0x58] sm:$0xf]
        %v944 = vld [vmem:[%s808 + $0x5c] sm:$0xf]
        %v945 = vld [vmem:[%s808 + $0x60] sm:$0xf]
        %v946 = vld [vmem:[%s808 + $0x64] sm:$0xf]
        %v947 = vld [vmem:[%s808 + $0x68] sm:$0xf]
        %v948 = vld [vmem:[%s808 + $0x6c] sm:$0xf]
        %v949 = vld [vmem:[%s808 + $0x70] sm:$0xf]
        %v950 = vld [vmem:[%s808 + $0x74] sm:$0xf]
        %v951 = vld [vmem:[%s808 + $0x78] sm:$0xf]
        %v952 = vld [vmem:[%s808 + $0x7c] sm:$0xf]
        %v953 = vld [vmem:[%s808 + $0x80] sm:$0xf]
        %v954 = vld [vmem:[%s808 + $0x84] sm:$0xf]
        %v955 = vld [vmem:[%s808 + $0x88] sm:$0xf]
        %v956 = vld [vmem:[%s808 + $0x8c] sm:$0xf]
        %v957 = vld [vmem:[%s808 + $0x90] sm:$0xf]
        %v958 = vld [vmem:[%s808 + $0x94] sm:$0xf]
        %v959 = vld [vmem:[%s808 + $0x98] sm:$0xf]
        %v960 = vld [vmem:[%s808 + $0x9c] sm:$0xf]
        %v961 = vld [vmem:[%s808 + $0xa0] sm:$0xf]
        %v962 = vld [vmem:[%s808 + $0xa4] sm:$0xf]
        %v963 = vld [vmem:[%s808 + $0xa8] sm:$0xf]
        %v964 = vld [vmem:[%s808 + $0xac] sm:$0xf]
        %v965 = vld [vmem:[%s808 + $0xb0] sm:$0xf]
        %v966 = vld [vmem:[%s808 + $0xb4] sm:$0xf]
        %v967 = vld [vmem:[%s808 + $0xb8] sm:$0xf]
        %v968 = vld [vmem:[%s808 + $0xbc] sm:$0xf]
        %v969 = vld [vmem:[%s808 + $0xc0] sm:$0xf]
        %v970 = vld [vmem:[%s808 + $0xc4] sm:$0xf]
        %v971 = vld [vmem:[%s808 + $0xc8] sm:$0xf]
        %v972 = vld [vmem:[%s808 + $0xcc] sm:$0xf]
        %v973 = vld [vmem:[%s808 + $0xd0] sm:$0xf]
        %v974 = vld [vmem:[%s808 + $0xd4] sm:$0xf]
        %v975 = vld [vmem:[%s808 + $0xd8] sm:$0xf]
        %v976 = vld [vmem:[%s808 + $0xdc] sm:$0xf]
        %v977 = vld [vmem:[%s808 + $0xe0] sm:$0xf]
        %v978 = vld [vmem:[%s808 + $0xe4] sm:$0xf]
        %v979 = vld [vmem:[%s808 + $0xe8] sm:$0xf]
        %v980 = vld [vmem:[%s808 + $0xec] sm:$0xf]
        %v981 = vld [vmem:[%s808 + $0xf0] sm:$0xf]
        %v982 = vld [vmem:[%s808 + $0xf4] sm:$0xf]
        %v983 = vld [vmem:[%s808 + $0xf8] sm:$0xf]
        %v984 = vld [vmem:[%s808 + $0xfc] sm:$0xf]
        %v985 = vld [vmem:[%s817] sm:$0xf]
        %v986 = vld [vmem:[%s817 + $0x4] sm:$0xf]
        %v987 = vld [vmem:[%s817 + $0x8] sm:$0xf]
        %v988 = vld [vmem:[%s817 + $0xc] sm:$0xf]
        %v989 = vld [vmem:[%s817 + $0x10] sm:$0xf]
        %v990 = vld [vmem:[%s817 + $0x14] sm:$0xf]
        %v991 = vld [vmem:[%s817 + $0x18] sm:$0xf]
        %v992 = vld [vmem:[%s817 + $0x1c] sm:$0xf]
        %v993 = vld [vmem:[%s817 + $0x20] sm:$0xf]
        %v994 = vld [vmem:[%s817 + $0x24] sm:$0xf]
        %v995 = vld [vmem:[%s817 + $0x28] sm:$0xf]
        %v996 = vld [vmem:[%s817 + $0x2c] sm:$0xf]
        %v997 = vld [vmem:[%s817 + $0x30] sm:$0xf]
        %v998 = vld [vmem:[%s817 + $0x34] sm:$0xf]
        %v999 = vld [vmem:[%s817 + $0x38] sm:$0xf]
        %v1000 = vld [vmem:[%s817 + $0x3c] sm:$0xf]
        %v1001 = vld [vmem:[%s817 + $0x40] sm:$0xf]
        %v1002 = vld [vmem:[%s817 + $0x44] sm:$0xf]
        %v1003 = vld [vmem:[%s817 + $0x48] sm:$0xf]
        %v1004 = vld [vmem:[%s817 + $0x4c] sm:$0xf]
        %v1005 = vld [vmem:[%s817 + $0x50] sm:$0xf]
        %v1006 = vld [vmem:[%s817 + $0x54] sm:$0xf]
        %v1007 = vld [vmem:[%s817 + $0x58] sm:$0xf]
        %v1008 = vld [vmem:[%s817 + $0x5c] sm:$0xf]
        %v1009 = vld [vmem:[%s817 + $0x60] sm:$0xf]
        %v1010 = vld [vmem:[%s817 + $0x64] sm:$0xf]
        %v1011 = vld [vmem:[%s817 + $0x68] sm:$0xf]
        %v1012 = vld [vmem:[%s817 + $0x6c] sm:$0xf]
        %v1013 = vld [vmem:[%s817 + $0x70] sm:$0xf]
        %v1014 = vld [vmem:[%s817 + $0x74] sm:$0xf]
        %v1015 = vld [vmem:[%s817 + $0x78] sm:$0xf]
        %v1016 = vld [vmem:[%s817 + $0x7c] sm:$0xf]
        %v1017 = vld [vmem:[%s817 + $0x80] sm:$0xf]
        %v1018 = vld [vmem:[%s817 + $0x84] sm:$0xf]
        %v1019 = vld [vmem:[%s817 + $0x88] sm:$0xf]
        %v1020 = vld [vmem:[%s817 + $0x8c] sm:$0xf]
        %v1021 = vld [vmem:[%s817 + $0x90] sm:$0xf]
        %v1022 = vld [vmem:[%s817 + $0x94] sm:$0xf]
        %v1023 = vld [vmem:[%s817 + $0x98] sm:$0xf]
        %v1024 = vld [vmem:[%s817 + $0x9c] sm:$0xf]
        %v1025 = vld [vmem:[%s817 + $0xa0] sm:$0xf]
        %v1026 = vld [vmem:[%s817 + $0xa4] sm:$0xf]
        %v1027 = vld [vmem:[%s817 + $0xa8] sm:$0xf]
        %v1028 = vld [vmem:[%s817 + $0xac] sm:$0xf]
        %v1029 = vld [vmem:[%s817 + $0xb0] sm:$0xf]
        %v1030 = vld [vmem:[%s817 + $0xb4] sm:$0xf]
        %v1031 = vld [vmem:[%s817 + $0xb8] sm:$0xf]
        %v1032 = vld [vmem:[%s817 + $0xbc] sm:$0xf]
        %v1033 = vld [vmem:[%s817 + $0xc0] sm:$0xf]
        %v1034 = vld [vmem:[%s817 + $0xc4] sm:$0xf]
        %v1035 = vld [vmem:[%s817 + $0xc8] sm:$0xf]
        %v1036 = vld [vmem:[%s817 + $0xcc] sm:$0xf]
        %v1037 = vld [vmem:[%s817 + $0xd0] sm:$0xf]
        %v1038 = vld [vmem:[%s817 + $0xd4] sm:$0xf]
        %v1039 = vld [vmem:[%s817 + $0xd8] sm:$0xf]
        %v1040 = vld [vmem:[%s817 + $0xdc] sm:$0xf]
        %v1041 = vld [vmem:[%s817 + $0xe0] sm:$0xf]
        %v1042 = vld [vmem:[%s817 + $0xe4] sm:$0xf]
        %v1043 = vld [vmem:[%s817 + $0xe8] sm:$0xf]
        %v1044 = vld [vmem:[%s817 + $0xec] sm:$0xf]
        %v1045 = vld [vmem:[%s817 + $0xf0] sm:$0xf]
        %v1046 = vld [vmem:[%s817 + $0xf4] sm:$0xf]
        %v1047 = vld [vmem:[%s817 + $0xf8] sm:$0xf]
        %v1048 = vld [vmem:[%s817 + $0xfc] sm:$0xf]
        %v1049 = vld [vmem:[%s826] sm:$0xf]
        %v1050 = vld [vmem:[%s826 + $0x4] sm:$0xf]
        %v1051 = vld [vmem:[%s826 + $0x8] sm:$0xf]
        %v1052 = vld [vmem:[%s826 + $0xc] sm:$0xf]
        %v1053 = vld [vmem:[%s826 + $0x10] sm:$0xf]
        %v1054 = vld [vmem:[%s826 + $0x14] sm:$0xf]
        %v1055 = vld [vmem:[%s826 + $0x18] sm:$0xf]
        %v1056 = vld [vmem:[%s826 + $0x1c] sm:$0xf]
        %v1057 = vld [vmem:[%s826 + $0x20] sm:$0xf]
        %v1058 = vld [vmem:[%s826 + $0x24] sm:$0xf]
        %v1059 = vld [vmem:[%s826 + $0x28] sm:$0xf]
        %v1060 = vld [vmem:[%s826 + $0x2c] sm:$0xf]
        %v1061 = vld [vmem:[%s826 + $0x30] sm:$0xf]
        %v1062 = vld [vmem:[%s826 + $0x34] sm:$0xf]
        %v1063 = vld [vmem:[%s826 + $0x38] sm:$0xf]
        %v1064 = vld [vmem:[%s826 + $0x3c] sm:$0xf]
        %v1065 = vld [vmem:[%s826 + $0x40] sm:$0xf]
        %v1066 = vld [vmem:[%s826 + $0x44] sm:$0xf]
        %v1067 = vld [vmem:[%s826 + $0x48] sm:$0xf]
        %v1068 = vld [vmem:[%s826 + $0x4c] sm:$0xf]
        %v1069 = vld [vmem:[%s826 + $0x50] sm:$0xf]
        %v1070 = vld [vmem:[%s826 + $0x54] sm:$0xf]
        %v1071 = vld [vmem:[%s826 + $0x58] sm:$0xf]
        %v1072 = vld [vmem:[%s826 + $0x5c] sm:$0xf]
        %v1073 = vld [vmem:[%s826 + $0x60] sm:$0xf]
        %v1074 = vld [vmem:[%s826 + $0x64] sm:$0xf]
        %v1075 = vld [vmem:[%s826 + $0x68] sm:$0xf]
        %v1076 = vld [vmem:[%s826 + $0x6c] sm:$0xf]
        %v1077 = vld [vmem:[%s826 + $0x70] sm:$0xf]
        %v1078 = vld [vmem:[%s826 + $0x74] sm:$0xf]
        %v1079 = vld [vmem:[%s826 + $0x78] sm:$0xf]
        %v1080 = vld [vmem:[%s826 + $0x7c] sm:$0xf]
        %v1081 = vld [vmem:[%s826 + $0x80] sm:$0xf]
        %v1082 = vld [vmem:[%s826 + $0x84] sm:$0xf]
        %v1083 = vld [vmem:[%s826 + $0x88] sm:$0xf]
        %v1084 = vld [vmem:[%s826 + $0x8c] sm:$0xf]
        %v1085 = vld [vmem:[%s826 + $0x90] sm:$0xf]
        %v1086 = vld [vmem:[%s826 + $0x94] sm:$0xf]
        %v1087 = vld [vmem:[%s826 + $0x98] sm:$0xf]
        %v1088 = vld [vmem:[%s826 + $0x9c] sm:$0xf]
        %v1089 = vld [vmem:[%s826 + $0xa0] sm:$0xf]
        %v1090 = vld [vmem:[%s826 + $0xa4] sm:$0xf]
        %v1091 = vld [vmem:[%s826 + $0xa8] sm:$0xf]
        %v1092 = vld [vmem:[%s826 + $0xac] sm:$0xf]
        %v1093 = vld [vmem:[%s826 + $0xb0] sm:$0xf]
        %v1094 = vld [vmem:[%s826 + $0xb4] sm:$0xf]
        %v1095 = vld [vmem:[%s826 + $0xb8] sm:$0xf]
        %v1096 = vld [vmem:[%s826 + $0xbc] sm:$0xf]
        %v1097 = vld [vmem:[%s826 + $0xc0] sm:$0xf]
        %v1098 = vld [vmem:[%s826 + $0xc4] sm:$0xf]
        %v1099 = vld [vmem:[%s826 + $0xc8] sm:$0xf]
        %v1100 = vld [vmem:[%s826 + $0xcc] sm:$0xf]
        %v1101 = vld [vmem:[%s826 + $0xd0] sm:$0xf]
        %v1102 = vld [vmem:[%s826 + $0xd4] sm:$0xf]
        %v1103 = vld [vmem:[%s826 + $0xd8] sm:$0xf]
        %v1104 = vld [vmem:[%s826 + $0xdc] sm:$0xf]
        %v1105 = vld [vmem:[%s826 + $0xe0] sm:$0xf]
        %v1106 = vld [vmem:[%s826 + $0xe4] sm:$0xf]
        %v1107 = vld [vmem:[%s826 + $0xe8] sm:$0xf]
        %v1108 = vld [vmem:[%s826 + $0xec] sm:$0xf]
        %v1109 = vld [vmem:[%s826 + $0xf0] sm:$0xf]
        %v1110 = vld [vmem:[%s826 + $0xf4] sm:$0xf]
        %v1111 = vld [vmem:[%s826 + $0xf8] sm:$0xf]
        %v1112 = vld [vmem:[%s826 + $0xfc] sm:$0xf]
        %v1113 = vld [vmem:[%s835] sm:$0xf]
        %v1114 = vld [vmem:[%s835 + $0x4] sm:$0xf]
        %v1115 = vld [vmem:[%s835 + $0x8] sm:$0xf]
        %v1116 = vld [vmem:[%s835 + $0xc] sm:$0xf]
        %v1117 = vld [vmem:[%s835 + $0x10] sm:$0xf]
        %v1118 = vld [vmem:[%s835 + $0x14] sm:$0xf]
        %v1119 = vld [vmem:[%s835 + $0x18] sm:$0xf]
        %v1120 = vld [vmem:[%s835 + $0x1c] sm:$0xf]
        %v1121 = vld [vmem:[%s835 + $0x20] sm:$0xf]
        %v1122 = vld [vmem:[%s835 + $0x24] sm:$0xf]
        %v1123 = vld [vmem:[%s835 + $0x28] sm:$0xf]
        %v1124 = vld [vmem:[%s835 + $0x2c] sm:$0xf]
        %v1125 = vld [vmem:[%s835 + $0x30] sm:$0xf]
        %v1126 = vld [vmem:[%s835 + $0x34] sm:$0xf]
        %v1127 = vld [vmem:[%s835 + $0x38] sm:$0xf]
        %v1128 = vld [vmem:[%s835 + $0x3c] sm:$0xf]
        %v1129 = vld [vmem:[%s812] sm:$0x1]
        %v1130 = vld [vmem:[%s812 + $0x1] sm:$0x1]
        %v1131 = vld [vmem:[%s812 + $0x2] sm:$0x1]
        %v1132 = vld [vmem:[%s812 + $0x3] sm:$0x1]
        %v1133 = vld [vmem:[%s821] sm:$0x1]
        %v1134 = vld [vmem:[%s821 + $0x1] sm:$0x1]
        %v1135 = vld [vmem:[%s821 + $0x2] sm:$0x1]
        %v1136 = vld [vmem:[%s821 + $0x3] sm:$0x1]
        %v1137 = vld [vmem:[%s830] sm:$0x1]
        %v1138 = vld [vmem:[%s830 + $0x1] sm:$0x1]
        %v1139 = vld [vmem:[%s830 + $0x2] sm:$0x1]
        %v1140 = vld [vmem:[%s830 + $0x3] sm:$0x1]
        %v1141 = vpack.c.bf16 %v918, %v918
        %v1146 = vlaneseq
        %v1147 = vshrl.u32 %v1146, 7
        %v1148 = vsub.s32 0, %v1147
        %v1149 = vrot.slane %v1129, %v1148
        %v1150 = vlaneseq
        %v1151 = vshrl.u32 %v1150, 7
        %v1152 = vsub.s32 0, %v1151
        %v1153 = vrot.slane %v1130, %v1152
        %v1154 = vlaneseq
        %v1155 = vshrl.u32 %v1154, 7
        %v1156 = vsub.s32 0, %v1155
        %v1157 = vrot.slane %v1131, %v1156
        %v1158 = vlaneseq
        %v1159 = vshrl.u32 %v1158, 7
        %v1160 = vsub.s32 0, %v1159
        %v1161 = vrot.slane %v1132, %v1160
        %v1182 = vunpack.c.l.b16 %v921
        %v1183 = vunpack.c.l.b16 %v922
        %v1184 = vunpack.c.l.b16 %v923
        %v1185 = vunpack.c.l.b16 %v924
        %v1186 = vunpack.c.l.b16 %v925
        %v1187 = vunpack.c.l.b16 %v926
        %v1188 = vunpack.c.l.b16 %v927
        %v1189 = vunpack.c.l.b16 %v928
        %v1190 = vunpack.c.l.b16 %v929
        %v1191 = vunpack.c.l.b16 %v930
        %v1192 = vunpack.c.l.b16 %v931
        %v1193 = vunpack.c.l.b16 %v932
        %v1194 = vunpack.c.l.b16 %v933
        %v1195 = vunpack.c.l.b16 %v934
        %v1196 = vunpack.c.l.b16 %v935
        %v1197 = vunpack.c.l.b16 %v936
        %v1198 = vpack.c.b16 %v1183, %v1182
        %v1199 = vpack.c.b16 %v1185, %v1184
        %v1200 = vpack.c.b16 %v1187, %v1186
        %v1201 = vpack.c.b16 %v1189, %v1188
        %v1202 = vpack.c.b16 %v1191, %v1190
        %v1203 = vpack.c.b16 %v1193, %v1192
        %v1204 = vpack.c.b16 %v1195, %v1194
        %v1205 = vpack.c.b16 %v1197, %v1196
        %1214 = vmatprep.subr.bf16.mxu0 0
        %1215 = vmatpush1.bf16.msra.mxu0 %v1198
        %1216 = vmatprep.subr.bf16.mxu0 0
        %1217 = vmatpush1.bf16.msra.mxu0 %v1199
        %1218 = vmatprep.subr.bf16.mxu0 0
        %1219 = vmatpush1.bf16.msra.mxu0 %v1200
        %1220 = vmatprep.subr.bf16.mxu0 0
        %1221 = vmatpush1.bf16.msra.mxu0 %v1201
        %1222 = vmatprep.subr.bf16.mxu0 0
        %1223 = vmatpush1.bf16.msra.mxu0 %v1202
        %1224 = vmatprep.subr.bf16.mxu0 0
        %1225 = vmatpush1.bf16.msra.mxu0 %v1203
        %1226 = vmatprep.subr.bf16.mxu0 0
        %1227 = vmatpush1.bf16.msra.mxu0 %v1204
        %1228 = vmatprep.subr.bf16.mxu0 0
        %1229 = vmatpush1.bf16.msra.mxu0 %v1205
        %1230 = vmatprep.subr.bf16.mxu0 0
        %1231 = vmatpush1.bf16.msra.mxu0 0
        %1232 = vmatprep.subr.bf16.mxu0 0
        %1233 = vmatpush1.bf16.msra.mxu0 0
        %1234 = vmatprep.subr.bf16.mxu0 0
        %1235 = vmatpush1.bf16.msra.mxu0 0
        %1236 = vmatprep.subr.bf16.mxu0 0
        %1237 = vmatpush1.bf16.msra.mxu0 0
        %1238 = vmatprep.subr.bf16.mxu0 0
        %1239 = vmatpush1.bf16.msra.mxu0 0
        %1240 = vmatprep.subr.bf16.mxu0 0
        %1241 = vmatpush1.bf16.msra.mxu0 0
        %1242 = vmatprep.subr.bf16.mxu0 0
        %1243 = vmatpush1.bf16.msra.mxu0 0
        %1244 = vmatprep.subr.bf16.mxu0 0
        %1245 = vmatpush1.bf16.msra.mxu0 0
        %1246 = vmatprep.mubr.bf16.mxu0 0
        %1247 = vmatmul.mubr.bf16.gmra.mrb[0].mxu0 %v1141
        %v1248 = vpop.f32.mrb[0].mxu0
        %v1249 = vadd.f32 %v1149, %v1248
        %v1250 = vpop.f32.mrb[0].mxu0
        %v1251 = vpop.f32.mrb[0].mxu0
        %v1252 = vpop.f32.mrb[0].mxu0
        %1253 = vdwg.mxu0
        %v1270 = vunpack.c.l.b16 %v937
        %v1271 = vunpack.c.l.b16 %v938
        %v1272 = vunpack.c.l.b16 %v939
        %v1273 = vunpack.c.l.b16 %v940
        %v1274 = vunpack.c.l.b16 %v941
        %v1275 = vunpack.c.l.b16 %v942
        %v1276 = vunpack.c.l.b16 %v943
        %v1277 = vunpack.c.l.b16 %v944
        %v1278 = vunpack.c.l.b16 %v945
        %v1279 = vunpack.c.l.b16 %v946
        %v1280 = vunpack.c.l.b16 %v947
        %v1281 = vunpack.c.l.b16 %v948
        %v1282 = vunpack.c.l.b16 %v949
        %v1283 = vunpack.c.l.b16 %v950
        %v1284 = vunpack.c.l.b16 %v951
        %v1285 = vunpack.c.l.b16 %v952
        %v1286 = vpack.c.b16 %v1271, %v1270
        %v1287 = vpack.c.b16 %v1273, %v1272
        %v1288 = vpack.c.b16 %v1275, %v1274
        %v1289 = vpack.c.b16 %v1277, %v1276
        %v1290 = vpack.c.b16 %v1279, %v1278
        %v1291 = vpack.c.b16 %v1281, %v1280
        %v1292 = vpack.c.b16 %v1283, %v1282
        %v1293 = vpack.c.b16 %v1285, %v1284
        %1302 = vmatprep.subr.bf16.mxu0 0
        %1303 = vmatpush1.bf16.msra.mxu0 %v1286
        %1304 = vmatprep.subr.bf16.mxu0 0
        %1305 = vmatpush1.bf16.msra.mxu0 %v1287
        %1306 = vmatprep.subr.bf16.mxu0 0
        %1307 = vmatpush1.bf16.msra.mxu0 %v1288
        %1308 = vmatprep.subr.bf16.mxu0 0
        %1309 = vmatpush1.bf16.msra.mxu0 %v1289
        %1310 = vmatprep.subr.bf16.mxu0 0
        %1311 = vmatpush1.bf16.msra.mxu0 %v1290
        %1312 = vmatprep.subr.bf16.mxu0 0
        %1313 = vmatpush1.bf16.msra.mxu0 %v1291
        %1314 = vmatprep.subr.bf16.mxu0 0
        %1315 = vmatpush1.bf16.msra.mxu0 %v1292
        %1316 = vmatprep.subr.bf16.mxu0 0
        %1317 = vmatpush1.bf16.msra.mxu0 %v1293
        %1318 = vmatprep.subr.bf16.mxu0 0
        %1319 = vmatpush1.bf16.msra.mxu0 0
        %1320 = vmatprep.subr.bf16.mxu0 0
        %1321 = vmatpush1.bf16.msra.mxu0 0
        %1322 = vmatprep.subr.bf16.mxu0 0
        %1323 = vmatpush1.bf16.msra.mxu0 0
        %1324 = vmatprep.subr.bf16.mxu0 0
        %1325 = vmatpush1.bf16.msra.mxu0 0
        %1326 = vmatprep.subr.bf16.mxu0 0
        %1327 = vmatpush1.bf16.msra.mxu0 0
        %1328 = vmatprep.subr.bf16.mxu0 0
        %1329 = vmatpush1.bf16.msra.mxu0 0
        %1330 = vmatprep.subr.bf16.mxu0 0
        %1331 = vmatpush1.bf16.msra.mxu0 0
        %1332 = vmatprep.subr.bf16.mxu0 0
        %1333 = vmatpush1.bf16.msra.mxu0 0
        %1334 = vmatprep.mubr.bf16.mxu0 0
        %1335 = vmatmul.mubr.bf16.gmra.mrb[0].mxu0 %v1141
        %v1336 = vpop.f32.mrb[0].mxu0
        %v1337 = vadd.f32 %v1153, %v1336
        %v1338 = vpop.f32.mrb[0].mxu0
        %v1339 = vpop.f32.mrb[0].mxu0
        %v1340 = vpop.f32.mrb[0].mxu0
        %1341 = vdwg.mxu0
        %v1358 = vunpack.c.l.b16 %v953
        %v1359 = vunpack.c.l.b16 %v954
        %v1360 = vunpack.c.l.b16 %v955
        %v1361 = vunpack.c.l.b16 %v956
        %v1362 = vunpack.c.l.b16 %v957
        %v1363 = vunpack.c.l.b16 %v958
        %v1364 = vunpack.c.l.b16 %v959
        %v1365 = vunpack.c.l.b16 %v960
        %v1366 = vunpack.c.l.b16 %v961
        %v1367 = vunpack.c.l.b16 %v962
        %v1368 = vunpack.c.l.b16 %v963
        %v1369 = vunpack.c.l.b16 %v964
        %v1370 = vunpack.c.l.b16 %v965
        %v1371 = vunpack.c.l.b16 %v966
        %v1372 = vunpack.c.l.b16 %v967
        %v1373 = vunpack.c.l.b16 %v968
        %v1374 = vpack.c.b16 %v1359, %v1358
        %v1375 = vpack.c.b16 %v1361, %v1360
        %v1376 = vpack.c.b16 %v1363, %v1362
        %v1377 = vpack.c.b16 %v1365, %v1364
        %v1378 = vpack.c.b16 %v1367, %v1366
        %v1379 = vpack.c.b16 %v1369, %v1368
        %v1380 = vpack.c.b16 %v1371, %v1370
        %v1381 = vpack.c.b16 %v1373, %v1372
        %1390 = vmatprep.subr.bf16.mxu0 0
        %1391 = vmatpush1.bf16.msra.mxu0 %v1374
        %1392 = vmatprep.subr.bf16.mxu0 0
        %1393 = vmatpush1.bf16.msra.mxu0 %v1375
        %1394 = vmatprep.subr.bf16.mxu0 0
        %1395 = vmatpush1.bf16.msra.mxu0 %v1376
        %1396 = vmatprep.subr.bf16.mxu0 0
        %1397 = vmatpush1.bf16.msra.mxu0 %v1377
        %1398 = vmatprep.subr.bf16.mxu0 0
        %1399 = vmatpush1.bf16.msra.mxu0 %v1378
        %1400 = vmatprep.subr.bf16.mxu0 0
        %1401 = vmatpush1.bf16.msra.mxu0 %v1379
        %1402 = vmatprep.subr.bf16.mxu0 0
        %1403 = vmatpush1.bf16.msra.mxu0 %v1380
        %1404 = vmatprep.subr.bf16.mxu0 0
        %1405 = vmatpush1.bf16.msra.mxu0 %v1381
        %1406 = vmatprep.subr.bf16.mxu0 0
        %1407 = vmatpush1.bf16.msra.mxu0 0
        %1408 = vmatprep.subr.bf16.mxu0 0
        %1409 = vmatpush1.bf16.msra.mxu0 0
        %1410 = vmatprep.subr.bf16.mxu0 0
        %1411 = vmatpush1.bf16.msra.mxu0 0
        %1412 = vmatprep.subr.bf16.mxu0 0
        %1413 = vmatpush1.bf16.msra.mxu0 0
        %1414 = vmatprep.subr.bf16.mxu0 0
        %1415 = vmatpush1.bf16.msra.mxu0 0
        %1416 = vmatprep.subr.bf16.mxu0 0
        %1417 = vmatpush1.bf16.msra.mxu0 0
        %1418 = vmatprep.subr.bf16.mxu0 0
        %1419 = vmatpush1.bf16.msra.mxu0 0
        %1420 = vmatprep.subr.bf16.mxu0 0
        %1421 = vmatpush1.bf16.msra.mxu0 0
        %1422 = vmatprep.mubr.bf16.mxu0 0
        %1423 = vmatmul.mubr.bf16.gmra.mrb[0].mxu0 %v1141
        %v1424 = vpop.f32.mrb[0].mxu0
        %v1425 = vadd.f32 %v1157, %v1424
        %v1426 = vpop.f32.mrb[0].mxu0
        %v1427 = vpop.f32.mrb[0].mxu0
        %v1428 = vpop.f32.mrb[0].mxu0
        %1429 = vdwg.mxu0
        %v1446 = vunpack.c.l.b16 %v969
        %v1447 = vunpack.c.l.b16 %v970
        %v1448 = vunpack.c.l.b16 %v971
        %v1449 = vunpack.c.l.b16 %v972
        %v1450 = vunpack.c.l.b16 %v973
        %v1451 = vunpack.c.l.b16 %v974
        %v1452 = vunpack.c.l.b16 %v975
        %v1453 = vunpack.c.l.b16 %v976
        %v1454 = vunpack.c.l.b16 %v977
        %v1455 = vunpack.c.l.b16 %v978
        %v1456 = vunpack.c.l.b16 %v979
        %v1457 = vunpack.c.l.b16 %v980
        %v1458 = vunpack.c.l.b16 %v981
        %v1459 = vunpack.c.l.b16 %v982
        %v1460 = vunpack.c.l.b16 %v983
        %v1461 = vunpack.c.l.b16 %v984
        %v1462 = vpack.c.b16 %v1447, %v1446
        %v1463 = vpack.c.b16 %v1449, %v1448
        %v1464 = vpack.c.b16 %v1451, %v1450
        %v1465 = vpack.c.b16 %v1453, %v1452
        %v1466 = vpack.c.b16 %v1455, %v1454
        %v1467 = vpack.c.b16 %v1457, %v1456
        %v1468 = vpack.c.b16 %v1459, %v1458
        %v1469 = vpack.c.b16 %v1461, %v1460
        %1478 = vmatprep.subr.bf16.mxu0 0
        %1479 = vmatpush1.bf16.msra.mxu0 %v1462
        %1480 = vmatprep.subr.bf16.mxu0 0
        %1481 = vmatpush1.bf16.msra.mxu0 %v1463
        %1482 = vmatprep.subr.bf16.mxu0 0
        %1483 = vmatpush1.bf16.msra.mxu0 %v1464
        %1484 = vmatprep.subr.bf16.mxu0 0
        %1485 = vmatpush1.bf16.msra.mxu0 %v1465
        %1486 = vmatprep.subr.bf16.mxu0 0
        %1487 = vmatpush1.bf16.msra.mxu0 %v1466
        %1488 = vmatprep.subr.bf16.mxu0 0
        %1489 = vmatpush1.bf16.msra.mxu0 %v1467
        %1490 = vmatprep.subr.bf16.mxu0 0
        %1491 = vmatpush1.bf16.msra.mxu0 %v1468
        %1492 = vmatprep.subr.bf16.mxu0 0
        %1493 = vmatpush1.bf16.msra.mxu0 %v1469
        %1494 = vmatprep.subr.bf16.mxu0 0
        %1495 = vmatpush1.bf16.msra.mxu0 0
        %1496 = vmatprep.subr.bf16.mxu0 0
        %1497 = vmatpush1.bf16.msra.mxu0 0
        %1498 = vmatprep.subr.bf16.mxu0 0
        %1499 = vmatpush1.bf16.msra.mxu0 0
        %1500 = vmatprep.subr.bf16.mxu0 0
        %1501 = vmatpush1.bf16.msra.mxu0 0
        %1502 = vmatprep.subr.bf16.mxu0 0
        %1503 = vmatpush1.bf16.msra.mxu0 0
        %1504 = vmatprep.subr.bf16.mxu0 0
        %1505 = vmatpush1.bf16.msra.mxu0 0
        %1506 = vmatprep.subr.bf16.mxu0 0
        %1507 = vmatpush1.bf16.msra.mxu0 0
        %1508 = vmatprep.subr.bf16.mxu0 0
        %1509 = vmatpush1.bf16.msra.mxu0 0
        %1510 = vmatprep.mubr.bf16.mxu0 0
        %1511 = vmatmul.mubr.bf16.gmra.mrb[0].mxu0 %v1141
        %v1512 = vpop.f32.mrb[0].mxu0
        %v1513 = vadd.f32 %v1161, %v1512
        %v1514 = vpop.f32.mrb[0].mxu0
        %v1515 = vpop.f32.mrb[0].mxu0
        %v1516 = vpop.f32.mrb[0].mxu0
        %1517 = vdwg.mxu0
        %v1522 = vlaneseq
        %v1523 = vshrl.u32 %v1522, 7
        %v1524 = vsub.s32 0, %v1523
        %v1525 = vrot.slane %v1133, %v1524
        %v1526 = vlaneseq
        %v1527 = vshrl.u32 %v1526, 7
        %v1528 = vsub.s32 0, %v1527
        %v1529 = vrot.slane %v1134, %v1528
        %v1530 = vlaneseq
        %v1531 = vshrl.u32 %v1530, 7
        %v1532 = vsub.s32 0, %v1531
        %v1533 = vrot.slane %v1135, %v1532
        %v1534 = vlaneseq
        %v1535 = vshrl.u32 %v1534, 7
        %v1536 = vsub.s32 0, %v1535
        %v1537 = vrot.slane %v1136, %v1536
        %v1558 = vunpack.c.l.b16 %v985
        %v1559 = vunpack.c.l.b16 %v986
        %v1560 = vunpack.c.l.b16 %v987
        %v1561 = vunpack.c.l.b16 %v988
        %v1562 = vunpack.c.l.b16 %v989
        %v1563 = vunpack.c.l.b16 %v990
        %v1564 = vunpack.c.l.b16 %v991
        %v1565 = vunpack.c.l.b16 %v992
        %v1566 = vunpack.c.l.b16 %v993
        %v1567 = vunpack.c.l.b16 %v994
        %v1568 = vunpack.c.l.b16 %v995
        %v1569 = vunpack.c.l.b16 %v996
        %v1570 = vunpack.c.l.b16 %v997
        %v1571 = vunpack.c.l.b16 %v998
        %v1572 = vunpack.c.l.b16 %v999
        %v1573 = vunpack.c.l.b16 %v1000
        %v1574 = vpack.c.b16 %v1559, %v1558
        %v1575 = vpack.c.b16 %v1561, %v1560
        %v1576 = vpack.c.b16 %v1563, %v1562
        %v1577 = vpack.c.b16 %v1565, %v1564
        %v1578 = vpack.c.b16 %v1567, %v1566
        %v1579 = vpack.c.b16 %v1569, %v1568
        %v1580 = vpack.c.b16 %v1571, %v1570
        %v1581 = vpack.c.b16 %v1573, %v1572
        %1590 = vmatprep.subr.bf16.mxu0 0
        %1591 = vmatpush1.bf16.msra.mxu0 %v1574
        %1592 = vmatprep.subr.bf16.mxu0 0
        %1593 = vmatpush1.bf16.msra.mxu0 %v1575
        %1594 = vmatprep.subr.bf16.mxu0 0
        %1595 = vmatpush1.bf16.msra.mxu0 %v1576
        %1596 = vmatprep.subr.bf16.mxu0 0
        %1597 = vmatpush1.bf16.msra.mxu0 %v1577
        %1598 = vmatprep.subr.bf16.mxu0 0
        %1599 = vmatpush1.bf16.msra.mxu0 %v1578
        %1600 = vmatprep.subr.bf16.mxu0 0
        %1601 = vmatpush1.bf16.msra.mxu0 %v1579
        %1602 = vmatprep.subr.bf16.mxu0 0
        %1603 = vmatpush1.bf16.msra.mxu0 %v1580
        %1604 = vmatprep.subr.bf16.mxu0 0
        %1605 = vmatpush1.bf16.msra.mxu0 %v1581
        %1606 = vmatprep.subr.bf16.mxu0 0
        %1607 = vmatpush1.bf16.msra.mxu0 0
        %1608 = vmatprep.subr.bf16.mxu0 0
        %1609 = vmatpush1.bf16.msra.mxu0 0
        %1610 = vmatprep.subr.bf16.mxu0 0
        %1611 = vmatpush1.bf16.msra.mxu0 0
        %1612 = vmatprep.subr.bf16.mxu0 0
        %1613 = vmatpush1.bf16.msra.mxu0 0
        %1614 = vmatprep.subr.bf16.mxu0 0
        %1615 = vmatpush1.bf16.msra.mxu0 0
        %1616 = vmatprep.subr.bf16.mxu0 0
        %1617 = vmatpush1.bf16.msra.mxu0 0
        %1618 = vmatprep.subr.bf16.mxu0 0
        %1619 = vmatpush1.bf16.msra.mxu0 0
        %1620 = vmatprep.subr.bf16.mxu0 0
        %1621 = vmatpush1.bf16.msra.mxu0 0
        %1622 = vmatprep.mubr.bf16.mxu0 0
        %1623 = vmatmul.mubr.bf16.gmra.mrb[0].mxu0 %v1141
        %v1624 = vpop.f32.mrb[0].mxu0
        %v1625 = vadd.f32 %v1525, %v1624
        %v1626 = vpop.f32.mrb[0].mxu0
        %v1627 = vpop.f32.mrb[0].mxu0
        %v1628 = vpop.f32.mrb[0].mxu0
        %1629 = vdwg.mxu0
        %v1646 = vunpack.c.l.b16 %v1001
        %v1647 = vunpack.c.l.b16 %v1002
        %v1648 = vunpack.c.l.b16 %v1003
        %v1649 = vunpack.c.l.b16 %v1004
        %v1650 = vunpack.c.l.b16 %v1005
        %v1651 = vunpack.c.l.b16 %v1006
        %v1652 = vunpack.c.l.b16 %v1007
        %v1653 = vunpack.c.l.b16 %v1008
        %v1654 = vunpack.c.l.b16 %v1009
        %v1655 = vunpack.c.l.b16 %v1010
        %v1656 = vunpack.c.l.b16 %v1011
        %v1657 = vunpack.c.l.b16 %v1012
        %v1658 = vunpack.c.l.b16 %v1013
        %v1659 = vunpack.c.l.b16 %v1014
        %v1660 = vunpack.c.l.b16 %v1015
        %v1661 = vunpack.c.l.b16 %v1016
        %v1662 = vpack.c.b16 %v1647, %v1646
        %v1663 = vpack.c.b16 %v1649, %v1648
        %v1664 = vpack.c.b16 %v1651, %v1650
        %v1665 = vpack.c.b16 %v1653, %v1652
        %v1666 = vpack.c.b16 %v1655, %v1654
        %v1667 = vpack.c.b16 %v1657, %v1656
        %v1668 = vpack.c.b16 %v1659, %v1658
        %v1669 = vpack.c.b16 %v1661, %v1660
        %1678 = vmatprep.subr.bf16.mxu0 0
        %1679 = vmatpush1.bf16.msra.mxu0 %v1662
        %1680 = vmatprep.subr.bf16.mxu0 0
        %1681 = vmatpush1.bf16.msra.mxu0 %v1663
        %1682 = vmatprep.subr.bf16.mxu0 0
        %1683 = vmatpush1.bf16.msra.mxu0 %v1664
        %1684 = vmatprep.subr.bf16.mxu0 0
        %1685 = vmatpush1.bf16.msra.mxu0 %v1665
        %1686 = vmatprep.subr.bf16.mxu0 0
        %1687 = vmatpush1.bf16.msra.mxu0 %v1666
        %1688 = vmatprep.subr.bf16.mxu0 0
        %1689 = vmatpush1.bf16.msra.mxu0 %v1667
        %1690 = vmatprep.subr.bf16.mxu0 0
        %1691 = vmatpush1.bf16.msra.mxu0 %v1668
        %1692 = vmatprep.subr.bf16.mxu0 0
        %1693 = vmatpush1.bf16.msra.mxu0 %v1669
        %1694 = vmatprep.subr.bf16.mxu0 0
        %1695 = vmatpush1.bf16.msra.mxu0 0
        %1696 = vmatprep.subr.bf16.mxu0 0
        %1697 = vmatpush1.bf16.msra.mxu0 0
        %1698 = vmatprep.subr.bf16.mxu0 0
        %1699 = vmatpush1.bf16.msra.mxu0 0
        %1700 = vmatprep.subr.bf16.mxu0 0
        %1701 = vmatpush1.bf16.msra.mxu0 0
        %1702 = vmatprep.subr.bf16.mxu0 0
        %1703 = vmatpush1.bf16.msra.mxu0 0
        %1704 = vmatprep.subr.bf16.mxu0 0
        %1705 = vmatpush1.bf16.msra.mxu0 0
        %1706 = vmatprep.subr.bf16.mxu0 0
        %1707 = vmatpush1.bf16.msra.mxu0 0
        %1708 = vmatprep.subr.bf16.mxu0 0
        %1709 = vmatpush1.bf16.msra.mxu0 0
        %1710 = vmatprep.mubr.bf16.mxu0 0
        %1711 = vmatmul.mubr.bf16.gmra.mrb[0].mxu0 %v1141
        %v1712 = vpop.f32.mrb[0].mxu0
        %v1713 = vadd.f32 %v1529, %v1712
        %v1714 = vpop.f32.mrb[0].mxu0
        %v1715 = vpop.f32.mrb[0].mxu0
        %v1716 = vpop.f32.mrb[0].mxu0
        %1717 = vdwg.mxu0
        %v1734 = vunpack.c.l.b16 %v1017
        %v1735 = vunpack.c.l.b16 %v1018
        %v1736 = vunpack.c.l.b16 %v1019
        %v1737 = vunpack.c.l.b16 %v1020
        %v1738 = vunpack.c.l.b16 %v1021
        %v1739 = vunpack.c.l.b16 %v1022
        %v1740 = vunpack.c.l.b16 %v1023
        %v1741 = vunpack.c.l.b16 %v1024
        %v1742 = vunpack.c.l.b16 %v1025
        %v1743 = vunpack.c.l.b16 %v1026
        %v1744 = vunpack.c.l.b16 %v1027
        %v1745 = vunpack.c.l.b16 %v1028
        %v1746 = vunpack.c.l.b16 %v1029
        %v1747 = vunpack.c.l.b16 %v1030
        %v1748 = vunpack.c.l.b16 %v1031
        %v1749 = vunpack.c.l.b16 %v1032
        %v1750 = vpack.c.b16 %v1735, %v1734
        %v1751 = vpack.c.b16 %v1737, %v1736
        %v1752 = vpack.c.b16 %v1739, %v1738
        %v1753 = vpack.c.b16 %v1741, %v1740
        %v1754 = vpack.c.b16 %v1743, %v1742
        %v1755 = vpack.c.b16 %v1745, %v1744
        %v1756 = vpack.c.b16 %v1747, %v1746
        %v1757 = vpack.c.b16 %v1749, %v1748
        %1766 = vmatprep.subr.bf16.mxu0 0
        %1767 = vmatpush1.bf16.msra.mxu0 %v1750
        %1768 = vmatprep.subr.bf16.mxu0 0
        %1769 = vmatpush1.bf16.msra.mxu0 %v1751
        %1770 = vmatprep.subr.bf16.mxu0 0
        %1771 = vmatpush1.bf16.msra.mxu0 %v1752
        %1772 = vmatprep.subr.bf16.mxu0 0
        %1773 = vmatpush1.bf16.msra.mxu0 %v1753
        %1774 = vmatprep.subr.bf16.mxu0 0
        %1775 = vmatpush1.bf16.msra.mxu0 %v1754
        %1776 = vmatprep.subr.bf16.mxu0 0
        %1777 = vmatpush1.bf16.msra.mxu0 %v1755
        %1778 = vmatprep.subr.bf16.mxu0 0
        %1779 = vmatpush1.bf16.msra.mxu0 %v1756
        %1780 = vmatprep.subr.bf16.mxu0 0
        %1781 = vmatpush1.bf16.msra.mxu0 %v1757
        %1782 = vmatprep.subr.bf16.mxu0 0
        %1783 = vmatpush1.bf16.msra.mxu0 0
        %1784 = vmatprep.subr.bf16.mxu0 0
        %1785 = vmatpush1.bf16.msra.mxu0 0
        %1786 = vmatprep.subr.bf16.mxu0 0
        %1787 = vmatpush1.bf16.msra.mxu0 0
        %1788 = vmatprep.subr.bf16.mxu0 0
        %1789 = vmatpush1.bf16.msra.mxu0 0
        %1790 = vmatprep.subr.bf16.mxu0 0
        %1791 = vmatpush1.bf16.msra.mxu0 0
        %1792 = vmatprep.subr.bf16.mxu0 0
        %1793 = vmatpush1.bf16.msra.mxu0 0
        %1794 = vmatprep.subr.bf16.mxu0 0
        %1795 = vmatpush1.bf16.msra.mxu0 0
        %1796 = vmatprep.subr.bf16.mxu0 0
        %1797 = vmatpush1.bf16.msra.mxu0 0
        %1798 = vmatprep.mubr.bf16.mxu0 0
        %1799 = vmatmul.mubr.bf16.gmra.mrb[0].mxu0 %v1141
        %v1800 = vpop.f32.mrb[0].mxu0
        %v1801 = vadd.f32 %v1533, %v1800
        %v1802 = vpop.f32.mrb[0].mxu0
        %v1803 = vpop.f32.mrb[0].mxu0
        %v1804 = vpop.f32.mrb[0].mxu0
        %1805 = vdwg.mxu0
        %v1822 = vunpack.c.l.b16 %v1033
        %v1823 = vunpack.c.l.b16 %v1034
        %v1824 = vunpack.c.l.b16 %v1035
        %v1825 = vunpack.c.l.b16 %v1036
        %v1826 = vunpack.c.l.b16 %v1037
        %v1827 = vunpack.c.l.b16 %v1038
        %v1828 = vunpack.c.l.b16 %v1039
        %v1829 = vunpack.c.l.b16 %v1040
        %v1830 = vunpack.c.l.b16 %v1041
        %v1831 = vunpack.c.l.b16 %v1042
        %v1832 = vunpack.c.l.b16 %v1043
        %v1833 = vunpack.c.l.b16 %v1044
        %v1834 = vunpack.c.l.b16 %v1045
        %v1835 = vunpack.c.l.b16 %v1046
        %v1836 = vunpack.c.l.b16 %v1047
        %v1837 = vunpack.c.l.b16 %v1048
        %v1838 = vpack.c.b16 %v1823, %v1822
        %v1839 = vpack.c.b16 %v1825, %v1824
        %v1840 = vpack.c.b16 %v1827, %v1826
        %v1841 = vpack.c.b16 %v1829, %v1828
        %v1842 = vpack.c.b16 %v1831, %v1830
        %v1843 = vpack.c.b16 %v1833, %v1832
        %v1844 = vpack.c.b16 %v1835, %v1834
        %v1845 = vpack.c.b16 %v1837, %v1836
        %1854 = vmatprep.subr.bf16.mxu0 0
        %1855 = vmatpush1.bf16.msra.mxu0 %v1838
        %1856 = vmatprep.subr.bf16.mxu0 0
        %1857 = vmatpush1.bf16.msra.mxu0 %v1839
        %1858 = vmatprep.subr.bf16.mxu0 0
        %1859 = vmatpush1.bf16.msra.mxu0 %v1840
        %1860 = vmatprep.subr.bf16.mxu0 0
        %1861 = vmatpush1.bf16.msra.mxu0 %v1841
        %1862 = vmatprep.subr.bf16.mxu0 0
        %1863 = vmatpush1.bf16.msra.mxu0 %v1842
        %1864 = vmatprep.subr.bf16.mxu0 0
        %1865 = vmatpush1.bf16.msra.mxu0 %v1843
        %1866 = vmatprep.subr.bf16.mxu0 0
        %1867 = vmatpush1.bf16.msra.mxu0 %v1844
        %1868 = vmatprep.subr.bf16.mxu0 0
        %1869 = vmatpush1.bf16.msra.mxu0 %v1845
        %1870 = vmatprep.subr.bf16.mxu0 0
        %1871 = vmatpush1.bf16.msra.mxu0 0
        %1872 = vmatprep.subr.bf16.mxu0 0
        %1873 = vmatpush1.bf16.msra.mxu0 0
        %1874 = vmatprep.subr.bf16.mxu0 0
        %1875 = vmatpush1.bf16.msra.mxu0 0
        %1876 = vmatprep.subr.bf16.mxu0 0
        %1877 = vmatpush1.bf16.msra.mxu0 0
        %1878 = vmatprep.subr.bf16.mxu0 0
        %1879 = vmatpush1.bf16.msra.mxu0 0
        %1880 = vmatprep.subr.bf16.mxu0 0
        %1881 = vmatpush1.bf16.msra.mxu0 0
        %1882 = vmatprep.subr.bf16.mxu0 0
        %1883 = vmatpush1.bf16.msra.mxu0 0
        %1884 = vmatprep.subr.bf16.mxu0 0
        %1885 = vmatpush1.bf16.msra.mxu0 0
        %1886 = vmatprep.mubr.bf16.mxu0 0
        %1887 = vmatmul.mubr.bf16.gmra.mrb[0].mxu0 %v1141
        %v1888 = vpop.f32.mrb[0].mxu0
        %v1889 = vadd.f32 %v1537, %v1888
        %v1890 = vpop.f32.mrb[0].mxu0
        %v1891 = vpop.f32.mrb[0].mxu0
        %v1892 = vpop.f32.mrb[0].mxu0
        %1893 = vdwg.mxu0
        %v1898 = vlaneseq
        %v1899 = vshrl.u32 %v1898, 7
        %v1900 = vsub.s32 0, %v1899
        %v1901 = vrot.slane %v1137, %v1900
        %v1902 = vlaneseq
        %v1903 = vshrl.u32 %v1902, 7
        %v1904 = vsub.s32 0, %v1903
        %v1905 = vrot.slane %v1138, %v1904
        %v1906 = vlaneseq
        %v1907 = vshrl.u32 %v1906, 7
        %v1908 = vsub.s32 0, %v1907
        %v1909 = vrot.slane %v1139, %v1908
        %v1910 = vlaneseq
        %v1911 = vshrl.u32 %v1910, 7
        %v1912 = vsub.s32 0, %v1911
        %v1913 = vrot.slane %v1140, %v1912
        %v1934 = vunpack.c.l.b16 %v1049
        %v1935 = vunpack.c.l.b16 %v1050
        %v1936 = vunpack.c.l.b16 %v1051
        %v1937 = vunpack.c.l.b16 %v1052
        %v1938 = vunpack.c.l.b16 %v1053
        %v1939 = vunpack.c.l.b16 %v1054
        %v1940 = vunpack.c.l.b16 %v1055
        %v1941 = vunpack.c.l.b16 %v1056
        %v1942 = vunpack.c.l.b16 %v1057
        %v1943 = vunpack.c.l.b16 %v1058
        %v1944 = vunpack.c.l.b16 %v1059
        %v1945 = vunpack.c.l.b16 %v1060
        %v1946 = vunpack.c.l.b16 %v1061
        %v1947 = vunpack.c.l.b16 %v1062
        %v1948 = vunpack.c.l.b16 %v1063
        %v1949 = vunpack.c.l.b16 %v1064
        %v1950 = vpack.c.b16 %v1935, %v1934
        %v1951 = vpack.c.b16 %v1937, %v1936
        %v1952 = vpack.c.b16 %v1939, %v1938
        %v1953 = vpack.c.b16 %v1941, %v1940
        %v1954 = vpack.c.b16 %v1943, %v1942
        %v1955 = vpack.c.b16 %v1945, %v1944
        %v1956 = vpack.c.b16 %v1947, %v1946
        %v1957 = vpack.c.b16 %v1949, %v1948
        %1966 = vmatprep.subr.bf16.mxu0 0
        %1967 = vmatpush1.bf16.msra.mxu0 %v1950
        %1968 = vmatprep.subr.bf16.mxu0 0
        %1969 = vmatpush1.bf16.msra.mxu0 %v1951
        %1970 = vmatprep.subr.bf16.mxu0 0
        %1971 = vmatpush1.bf16.msra.mxu0 %v1952
        %1972 = vmatprep.subr.bf16.mxu0 0
        %1973 = vmatpush1.bf16.msra.mxu0 %v1953
        %1974 = vmatprep.subr.bf16.mxu0 0
        %1975 = vmatpush1.bf16.msra.mxu0 %v1954
        %1976 = vmatprep.subr.bf16.mxu0 0
        %1977 = vmatpush1.bf16.msra.mxu0 %v1955
        %1978 = vmatprep.subr.bf16.mxu0 0
        %1979 = vmatpush1.bf16.msra.mxu0 %v1956
        %1980 = vmatprep.subr.bf16.mxu0 0
        %1981 = vmatpush1.bf16.msra.mxu0 %v1957
        %1982 = vmatprep.subr.bf16.mxu0 0
        %1983 = vmatpush1.bf16.msra.mxu0 0
        %1984 = vmatprep.subr.bf16.mxu0 0
        %1985 = vmatpush1.bf16.msra.mxu0 0
        %1986 = vmatprep.subr.bf16.mxu0 0
        %1987 = vmatpush1.bf16.msra.mxu0 0
        %1988 = vmatprep.subr.bf16.mxu0 0
        %1989 = vmatpush1.bf16.msra.mxu0 0
        %1990 = vmatprep.subr.bf16.mxu0 0
        %1991 = vmatpush1.bf16.msra.mxu0 0
        %1992 = vmatprep.subr.bf16.mxu0 0
        %1993 = vmatpush1.bf16.msra.mxu0 0
        %1994 = vmatprep.subr.bf16.mxu0 0
        %1995 = vmatpush1.bf16.msra.mxu0 0
        %1996 = vmatprep.subr.bf16.mxu0 0
        %1997 = vmatpush1.bf16.msra.mxu0 0
        %1998 = vmatprep.mubr.bf16.mxu0 0
        %1999 = vmatmul.mubr.bf16.gmra.mrb[0].mxu0 %v1141
        %v2000 = vpop.f32.mrb[0].mxu0
        %v2001 = vadd.f32 %v1901, %v2000
        %v2002 = vpop.f32.mrb[0].mxu0
        %v2003 = vpop.f32.mrb[0].mxu0
        %v2004 = vpop.f32.mrb[0].mxu0
        %2005 = vdwg.mxu0
        %v2022 = vunpack.c.l.b16 %v1065
        %v2023 = vunpack.c.l.b16 %v1066
        %v2024 = vunpack.c.l.b16 %v1067
        %v2025 = vunpack.c.l.b16 %v1068
        %v2026 = vunpack.c.l.b16 %v1069
        %v2027 = vunpack.c.l.b16 %v1070
        %v2028 = vunpack.c.l.b16 %v1071
        %v2029 = vunpack.c.l.b16 %v1072
        %v2030 = vunpack.c.l.b16 %v1073
        %v2031 = vunpack.c.l.b16 %v1074
        %v2032 = vunpack.c.l.b16 %v1075
        %v2033 = vunpack.c.l.b16 %v1076
        %v2034 = vunpack.c.l.b16 %v1077
        %v2035 = vunpack.c.l.b16 %v1078
        %v2036 = vunpack.c.l.b16 %v1079
        %v2037 = vunpack.c.l.b16 %v1080
        %v2038 = vpack.c.b16 %v2023, %v2022
        %v2039 = vpack.c.b16 %v2025, %v2024
        %v2040 = vpack.c.b16 %v2027, %v2026
        %v2041 = vpack.c.b16 %v2029, %v2028
        %v2042 = vpack.c.b16 %v2031, %v2030
        %v2043 = vpack.c.b16 %v2033, %v2032
        %v2044 = vpack.c.b16 %v2035, %v2034
        %v2045 = vpack.c.b16 %v2037, %v2036
        %2054 = vmatprep.subr.bf16.mxu0 0
        %2055 = vmatpush1.bf16.msra.mxu0 %v2038
        %2056 = vmatprep.subr.bf16.mxu0 0
        %2057 = vmatpush1.bf16.msra.mxu0 %v2039
        %2058 = vmatprep.subr.bf16.mxu0 0
        %2059 = vmatpush1.bf16.msra.mxu0 %v2040
        %2060 = vmatprep.subr.bf16.mxu0 0
        %2061 = vmatpush1.bf16.msra.mxu0 %v2041
        %2062 = vmatprep.subr.bf16.mxu0 0
        %2063 = vmatpush1.bf16.msra.mxu0 %v2042
        %2064 = vmatprep.subr.bf16.mxu0 0
        %2065 = vmatpush1.bf16.msra.mxu0 %v2043
        %2066 = vmatprep.subr.bf16.mxu0 0
        %2067 = vmatpush1.bf16.msra.mxu0 %v2044
        %2068 = vmatprep.subr.bf16.mxu0 0
        %2069 = vmatpush1.bf16.msra.mxu0 %v2045
        %2070 = vmatprep.subr.bf16.mxu0 0
        %2071 = vmatpush1.bf16.msra.mxu0 0
        %2072 = vmatprep.subr.bf16.mxu0 0
        %2073 = vmatpush1.bf16.msra.mxu0 0
        %2074 = vmatprep.subr.bf16.mxu0 0
        %2075 = vmatpush1.bf16.msra.mxu0 0
        %2076 = vmatprep.subr.bf16.mxu0 0
        %2077 = vmatpush1.bf16.msra.mxu0 0
        %2078 = vmatprep.subr.bf16.mxu0 0
        %2079 = vmatpush1.bf16.msra.mxu0 0
        %2080 = vmatprep.subr.bf16.mxu0 0
        %2081 = vmatpush1.bf16.msra.mxu0 0
        %2082 = vmatprep.subr.bf16.mxu0 0
        %2083 = vmatpush1.bf16.msra.mxu0 0
        %2084 = vmatprep.subr.bf16.mxu0 0
        %2085 = vmatpush1.bf16.msra.mxu0 0
        %2086 = vmatprep.mubr.bf16.mxu0 0
        %2087 = vmatmul.mubr.bf16.gmra.mrb[0].mxu0 %v1141
        %v2088 = vpop.f32.mrb[0].mxu0
        %v2089 = vadd.f32 %v1905, %v2088
        %v2090 = vpop.f32.mrb[0].mxu0
        %v2091 = vpop.f32.mrb[0].mxu0
        %v2092 = vpop.f32.mrb[0].mxu0
        %2093 = vdwg.mxu0
        %v2110 = vunpack.c.l.b16 %v1081
        %v2111 = vunpack.c.l.b16 %v1082
        %v2112 = vunpack.c.l.b16 %v1083
        %v2113 = vunpack.c.l.b16 %v1084
        %v2114 = vunpack.c.l.b16 %v1085
        %v2115 = vunpack.c.l.b16 %v1086
        %v2116 = vunpack.c.l.b16 %v1087
        %v2117 = vunpack.c.l.b16 %v1088
        %v2118 = vunpack.c.l.b16 %v1089
        %v2119 = vunpack.c.l.b16 %v1090
        %v2120 = vunpack.c.l.b16 %v1091
        %v2121 = vunpack.c.l.b16 %v1092
        %v2122 = vunpack.c.l.b16 %v1093
        %v2123 = vunpack.c.l.b16 %v1094
        %v2124 = vunpack.c.l.b16 %v1095
        %v2125 = vunpack.c.l.b16 %v1096
        %v2126 = vpack.c.b16 %v2111, %v2110
        %v2127 = vpack.c.b16 %v2113, %v2112
        %v2128 = vpack.c.b16 %v2115, %v2114
        %v2129 = vpack.c.b16 %v2117, %v2116
        %v2130 = vpack.c.b16 %v2119, %v2118
        %v2131 = vpack.c.b16 %v2121, %v2120
        %v2132 = vpack.c.b16 %v2123, %v2122
        %v2133 = vpack.c.b16 %v2125, %v2124
        %2142 = vmatprep.subr.bf16.mxu0 0
        %2143 = vmatpush1.bf16.msra.mxu0 %v2126
        %2144 = vmatprep.subr.bf16.mxu0 0
        %2145 = vmatpush1.bf16.msra.mxu0 %v2127
        %2146 = vmatprep.subr.bf16.mxu0 0
        %2147 = vmatpush1.bf16.msra.mxu0 %v2128
        %2148 = vmatprep.subr.bf16.mxu0 0
        %2149 = vmatpush1.bf16.msra.mxu0 %v2129
        %2150 = vmatprep.subr.bf16.mxu0 0
        %2151 = vmatpush1.bf16.msra.mxu0 %v2130
        %2152 = vmatprep.subr.bf16.mxu0 0
        %2153 = vmatpush1.bf16.msra.mxu0 %v2131
        %2154 = vmatprep.subr.bf16.mxu0 0
        %2155 = vmatpush1.bf16.msra.mxu0 %v2132
        %2156 = vmatprep.subr.bf16.mxu0 0
        %2157 = vmatpush1.bf16.msra.mxu0 %v2133
        %2158 = vmatprep.subr.bf16.mxu0 0
        %2159 = vmatpush1.bf16.msra.mxu0 0
        %2160 = vmatprep.subr.bf16.mxu0 0
        %2161 = vmatpush1.bf16.msra.mxu0 0
        %2162 = vmatprep.subr.bf16.mxu0 0
        %2163 = vmatpush1.bf16.msra.mxu0 0
        %2164 = vmatprep.subr.bf16.mxu0 0
        %2165 = vmatpush1.bf16.msra.mxu0 0
        %2166 = vmatprep.subr.bf16.mxu0 0
        %2167 = vmatpush1.bf16.msra.mxu0 0
        %2168 = vmatprep.subr.bf16.mxu0 0
        %2169 = vmatpush1.bf16.msra.mxu0 0
        %2170 = vmatprep.subr.bf16.mxu0 0
        %2171 = vmatpush1.bf16.msra.mxu0 0
        %2172 = vmatprep.subr.bf16.mxu0 0
        %2173 = vmatpush1.bf16.msra.mxu0 0
        %2174 = vmatprep.mubr.bf16.mxu0 0
        %2175 = vmatmul.mubr.bf16.gmra.mrb[0].mxu0 %v1141
        %v2176 = vpop.f32.mrb[0].mxu0
        %v2177 = vadd.f32 %v1909, %v2176
        %v2178 = vpop.f32.mrb[0].mxu0
        %v2179 = vpop.f32.mrb[0].mxu0
        %v2180 = vpop.f32.mrb[0].mxu0
        %2181 = vdwg.mxu0
        %v2198 = vunpack.c.l.b16 %v1097
        %v2199 = vunpack.c.l.b16 %v1098
        %v2200 = vunpack.c.l.b16 %v1099
        %v2201 = vunpack.c.l.b16 %v1100
        %v2202 = vunpack.c.l.b16 %v1101
        %v2203 = vunpack.c.l.b16 %v1102
        %v2204 = vunpack.c.l.b16 %v1103
        %v2205 = vunpack.c.l.b16 %v1104
        %v2206 = vunpack.c.l.b16 %v1105
        %v2207 = vunpack.c.l.b16 %v1106
        %v2208 = vunpack.c.l.b16 %v1107
        %v2209 = vunpack.c.l.b16 %v1108
        %v2210 = vunpack.c.l.b16 %v1109
        %v2211 = vunpack.c.l.b16 %v1110
        %v2212 = vunpack.c.l.b16 %v1111
        %v2213 = vunpack.c.l.b16 %v1112
        %v2214 = vpack.c.b16 %v2199, %v2198
        %v2215 = vpack.c.b16 %v2201, %v2200
        %v2216 = vpack.c.b16 %v2203, %v2202
        %v2217 = vpack.c.b16 %v2205, %v2204
        %v2218 = vpack.c.b16 %v2207, %v2206
        %v2219 = vpack.c.b16 %v2209, %v2208
        %v2220 = vpack.c.b16 %v2211, %v2210
        %v2221 = vpack.c.b16 %v2213, %v2212
        %2230 = vmatprep.subr.bf16.mxu0 0
        %2231 = vmatpush1.bf16.msra.mxu0 %v2214
        %2232 = vmatprep.subr.bf16.mxu0 0
        %2233 = vmatpush1.bf16.msra.mxu0 %v2215
        %2234 = vmatprep.subr.bf16.mxu0 0
        %2235 = vmatpush1.bf16.msra.mxu0 %v2216
        %2236 = vmatprep.subr.bf16.mxu0 0
        %2237 = vmatpush1.bf16.msra.mxu0 %v2217
        %2238 = vmatprep.subr.bf16.mxu0 0
        %2239 = vmatpush1.bf16.msra.mxu0 %v2218
        %2240 = vmatprep.subr.bf16.mxu0 0
        %2241 = vmatpush1.bf16.msra.mxu0 %v2219
        %2242 = vmatprep.subr.bf16.mxu0 0
        %2243 = vmatpush1.bf16.msra.mxu0 %v2220
        %2244 = vmatprep.subr.bf16.mxu0 0
        %2245 = vmatpush1.bf16.msra.mxu0 %v2221
        %2246 = vmatprep.subr.bf16.mxu0 0
        %2247 = vmatpush1.bf16.msra.mxu0 0
        %2248 = vmatprep.subr.bf16.mxu0 0
        %2249 = vmatpush1.bf16.msra.mxu0 0
        %2250 = vmatprep.subr.bf16.mxu0 0
        %2251 = vmatpush1.bf16.msra.mxu0 0
        %2252 = vmatprep.subr.bf16.mxu0 0
        %2253 = vmatpush1.bf16.msra.mxu0 0
        %2254 = vmatprep.subr.bf16.mxu0 0
        %2255 = vmatpush1.bf16.msra.mxu0 0
        %2256 = vmatprep.subr.bf16.mxu0 0
        %2257 = vmatpush1.bf16.msra.mxu0 0
        %2258 = vmatprep.subr.bf16.mxu0 0
        %2259 = vmatpush1.bf16.msra.mxu0 0
        %2260 = vmatprep.subr.bf16.mxu0 0
        %2261 = vmatpush1.bf16.msra.mxu0 0
        %2262 = vmatprep.mubr.bf16.mxu0 0
        %2263 = vmatmul.mubr.bf16.gmra.mrb[0].mxu0 %v1141
        %v2264 = vpop.f32.mrb[0].mxu0
        %v2265 = vadd.f32 %v1913, %v2264
        %v2266 = vpop.f32.mrb[0].mxu0
        %v2267 = vpop.f32.mrb[0].mxu0
        %v2268 = vpop.f32.mrb[0].mxu0
        %2269 = vdwg.mxu0
        %v2270 = vpack.c.bf16 %v1249, %v1249
        %v2271 = vpack.c.bf16 %v1337, %v1337
        %v2272 = vpack.c.bf16 %v1425, %v1425
        %v2273 = vpack.c.bf16 %v1513, %v1513
        %v2274 = vpack.c.bf16 %v1625, %v1625
        %v2275 = vpack.c.bf16 %v1713, %v1713
        %v2276 = vpack.c.bf16 %v1801, %v1801
        %v2277 = vpack.c.bf16 %v1889, %v1889
        %vm2278 = vcmask 261120
        %v2280 = vsel %vm2278, %v2270, 0
        %v2283 = vsel %vm2278, %v2274, 0
        %2285 = vmatprep.subr.bf16.mxu0 0
        %2286 = vmatpush1.bf16.xpose.msra.mxu0 %v2283
        %2287 = vmatprep.subr.bf16.mxu0 0
        %2288 = vmatpush1.bf16.xpose.msra.mxu0 0
        %2289 = vmatprep.subr.bf16.mxu0 0
        %2290 = vmatpush1.bf16.xpose.msra.mxu0 0
        %2291 = vmatprep.subr.bf16.mxu0 0
        %2292 = vmatpush1.bf16.xpose.msra.mxu0 0
        %2293 = vmatprep.subr.bf16.mxu0 0
        %2294 = vmatpush1.bf16.xpose.msra.mxu0 0
        %2295 = vmatprep.subr.bf16.mxu0 0
        %2296 = vmatpush1.bf16.xpose.msra.mxu0 0
        %2297 = vmatprep.subr.bf16.mxu0 0
        %2298 = vmatpush1.bf16.xpose.msra.mxu0 0
        %2299 = vmatprep.subr.bf16.mxu0 0
        %2300 = vmatpush1.bf16.xpose.msra.mxu0 0
        %2301 = vmatprep.subr.bf16.mxu0 0
        %2302 = vmatpush1.bf16.xpose.msra.mxu0 0
        %2303 = vmatprep.subr.bf16.mxu0 0
        %2304 = vmatpush1.bf16.xpose.msra.mxu0 0
        %2305 = vmatprep.subr.bf16.mxu0 0
        %2306 = vmatpush1.bf16.xpose.msra.mxu0 0
        %2307 = vmatprep.subr.bf16.mxu0 0
        %2308 = vmatpush1.bf16.xpose.msra.mxu0 0
        %2309 = vmatprep.subr.bf16.mxu0 0
        %2310 = vmatpush1.bf16.xpose.msra.mxu0 0
        %2311 = vmatprep.subr.bf16.mxu0 0
        %2312 = vmatpush1.bf16.xpose.msra.mxu0 0
        %2313 = vmatprep.subr.bf16.mxu0 0
        %2314 = vmatpush1.bf16.xpose.msra.mxu0 0
        %2315 = vmatprep.subr.bf16.mxu0 0
        %2316 = vmatpush1.bf16.xpose.msra.mxu0 0
        %2317 = vmatprep.mubr.bf16.mxu0 0
        %2318 = vmatmul.mubr.bf16.gmra.mrb[0].mxu0 %v2280
        %v2319 = vpop.f32.mrb[0].mxu0
        %v2320 = vadd.f32 0.0, %v2319
        %v2321 = vpop.f32.mrb[0].mxu0
        %v2322 = vpop.f32.mrb[0].mxu0
        %v2323 = vpop.f32.mrb[0].mxu0
        %2324 = vdwg.mxu0
        %v2326 = vsel %vm2278, %v2271, 0
        %v2329 = vsel %vm2278, %v2275, 0
        %2331 = vmatprep.subr.bf16.mxu0 0
        %2332 = vmatpush1.bf16.xpose.msra.mxu0 %v2329
        %2333 = vmatprep.subr.bf16.mxu0 0
        %2334 = vmatpush1.bf16.xpose.msra.mxu0 0
        %2335 = vmatprep.subr.bf16.mxu0 0
        %2336 = vmatpush1.bf16.xpose.msra.mxu0 0
        %2337 = vmatprep.subr.bf16.mxu0 0
        %2338 = vmatpush1.bf16.xpose.msra.mxu0 0
        %2339 = vmatprep.subr.bf16.mxu0 0
        %2340 = vmatpush1.bf16.xpose.msra.mxu0 0
        %2341 = vmatprep.subr.bf16.mxu0 0
        %2342 = vmatpush1.bf16.xpose.msra.mxu0 0
        %2343 = vmatprep.subr.bf16.mxu0 0
        %2344 = vmatpush1.bf16.xpose.msra.mxu0 0
        %2345 = vmatprep.subr.bf16.mxu0 0
        %2346 = vmatpush1.bf16.xpose.msra.mxu0 0
        %2347 = vmatprep.subr.bf16.mxu0 0
        %2348 = vmatpush1.bf16.xpose.msra.mxu0 0
        %2349 = vmatprep.subr.bf16.mxu0 0
        %2350 = vmatpush1.bf16.xpose.msra.mxu0 0
        %2351 = vmatprep.subr.bf16.mxu0 0
        %2352 = vmatpush1.bf16.xpose.msra.mxu0 0
        %2353 = vmatprep.subr.bf16.mxu0 0
        %2354 = vmatpush1.bf16.xpose.msra.mxu0 0
        %2355 = vmatprep.subr.bf16.mxu0 0
        %2356 = vmatpush1.bf16.xpose.msra.mxu0 0
        %2357 = vmatprep.subr.bf16.mxu0 0
        %2358 = vmatpush1.bf16.xpose.msra.mxu0 0
        %2359 = vmatprep.subr.bf16.mxu0 0
        %2360 = vmatpush1.bf16.xpose.msra.mxu0 0
        %2361 = vmatprep.subr.bf16.mxu0 0
        %2362 = vmatpush1.bf16.xpose.msra.mxu0 0
        %2363 = vmatprep.mubr.bf16.mxu0 0
        %2364 = vmatmul.mubr.bf16.gmra.mrb[0].mxu0 %v2326
        %v2365 = vpop.f32.mrb[0].mxu0
        %v2366 = vadd.f32 0.0, %v2365
        %v2367 = vpop.f32.mrb[0].mxu0
        %v2368 = vpop.f32.mrb[0].mxu0
        %v2369 = vpop.f32.mrb[0].mxu0
        %2370 = vdwg.mxu0
        %v2372 = vsel %vm2278, %v2272, 0
        %v2375 = vsel %vm2278, %v2276, 0
        %2377 = vmatprep.subr.bf16.mxu0 0
        %2378 = vmatpush1.bf16.xpose.msra.mxu0 %v2375
        %2379 = vmatprep.subr.bf16.mxu0 0
        %2380 = vmatpush1.bf16.xpose.msra.mxu0 0
        %2381 = vmatprep.subr.bf16.mxu0 0
        %2382 = vmatpush1.bf16.xpose.msra.mxu0 0
        %2383 = vmatprep.subr.bf16.mxu0 0
        %2384 = vmatpush1.bf16.xpose.msra.mxu0 0
        %2385 = vmatprep.subr.bf16.mxu0 0
        %2386 = vmatpush1.bf16.xpose.msra.mxu0 0
        %2387 = vmatprep.subr.bf16.mxu0 0
        %2388 = vmatpush1.bf16.xpose.msra.mxu0 0
        %2389 = vmatprep.subr.bf16.mxu0 0
        %2390 = vmatpush1.bf16.xpose.msra.mxu0 0
        %2391 = vmatprep.subr.bf16.mxu0 0
        %2392 = vmatpush1.bf16.xpose.msra.mxu0 0
        %2393 = vmatprep.subr.bf16.mxu0 0
        %2394 = vmatpush1.bf16.xpose.msra.mxu0 0
        %2395 = vmatprep.subr.bf16.mxu0 0
        %2396 = vmatpush1.bf16.xpose.msra.mxu0 0
        %2397 = vmatprep.subr.bf16.mxu0 0
        %2398 = vmatpush1.bf16.xpose.msra.mxu0 0
        %2399 = vmatprep.subr.bf16.mxu0 0
        %2400 = vmatpush1.bf16.xpose.msra.mxu0 0
        %2401 = vmatprep.subr.bf16.mxu0 0
        %2402 = vmatpush1.bf16.xpose.msra.mxu0 0
        %2403 = vmatprep.subr.bf16.mxu0 0
        %2404 = vmatpush1.bf16.xpose.msra.mxu0 0
        %2405 = vmatprep.subr.bf16.mxu0 0
        %2406 = vmatpush1.bf16.xpose.msra.mxu0 0
        %2407 = vmatprep.subr.bf16.mxu0 0
        %2408 = vmatpush1.bf16.xpose.msra.mxu0 0
        %2409 = vmatprep.mubr.bf16.mxu0 0
        %2410 = vmatmul.mubr.bf16.gmra.mrb[0].mxu0 %v2372
        %v2411 = vpop.f32.mrb[0].mxu0
        %v2412 = vadd.f32 0.0, %v2411
        %v2413 = vpop.f32.mrb[0].mxu0
        %v2414 = vpop.f32.mrb[0].mxu0
        %v2415 = vpop.f32.mrb[0].mxu0
        %2416 = vdwg.mxu0
        %v2418 = vsel %vm2278, %v2273, 0
        %v2421 = vsel %vm2278, %v2277, 0
        %2423 = vmatprep.subr.bf16.mxu0 0
        %2424 = vmatpush1.bf16.xpose.msra.mxu0 %v2421
        %2425 = vmatprep.subr.bf16.mxu0 0
        %2426 = vmatpush1.bf16.xpose.msra.mxu0 0
        %2427 = vmatprep.subr.bf16.mxu0 0
        %2428 = vmatpush1.bf16.xpose.msra.mxu0 0
        %2429 = vmatprep.subr.bf16.mxu0 0
        %2430 = vmatpush1.bf16.xpose.msra.mxu0 0
        %2431 = vmatprep.subr.bf16.mxu0 0
        %2432 = vmatpush1.bf16.xpose.msra.mxu0 0
        %2433 = vmatprep.subr.bf16.mxu0 0
        %2434 = vmatpush1.bf16.xpose.msra.mxu0 0
        %2435 = vmatprep.subr.bf16.mxu0 0
        %2436 = vmatpush1.bf16.xpose.msra.mxu0 0
        %2437 = vmatprep.subr.bf16.mxu0 0
        %2438 = vmatpush1.bf16.xpose.msra.mxu0 0
        %2439 = vmatprep.subr.bf16.mxu0 0
        %2440 = vmatpush1.bf16.xpose.msra.mxu0 0
        %2441 = vmatprep.subr.bf16.mxu0 0
        %2442 = vmatpush1.bf16.xpose.msra.mxu0 0
        %2443 = vmatprep.subr.bf16.mxu0 0
        %2444 = vmatpush1.bf16.xpose.msra.mxu0 0
        %2445 = vmatprep.subr.bf16.mxu0 0
        %2446 = vmatpush1.bf16.xpose.msra.mxu0 0
        %2447 = vmatprep.subr.bf16.mxu0 0
        %2448 = vmatpush1.bf16.xpose.msra.mxu0 0
        %2449 = vmatprep.subr.bf16.mxu0 0
        %2450 = vmatpush1.bf16.xpose.msra.mxu0 0
        %2451 = vmatprep.subr.bf16.mxu0 0
        %2452 = vmatpush1.bf16.xpose.msra.mxu0 0
        %2453 = vmatprep.subr.bf16.mxu0 0
        %2454 = vmatpush1.bf16.xpose.msra.mxu0 0
        %2455 = vmatprep.mubr.bf16.mxu0 0
        %2456 = vmatmul.mubr.bf16.gmra.mrb[0].mxu0 %v2418
        %v2457 = vpop.f32.mrb[0].mxu0
        %v2458 = vadd.f32 0.0, %v2457
        %v2459 = vpop.f32.mrb[0].mxu0
        %v2460 = vpop.f32.mrb[0].mxu0
        %v2461 = vpop.f32.mrb[0].mxu0
        %2462 = vdwg.mxu0
        %v2463 = vmul.f32 %v2320, 0.17677669
        %v2464 = vmul.f32 %v2366, 0.17677669
        %v2465 = vmul.f32 %v2412, 0.17677669
        %v2466 = vmul.f32 %v2458, 0.17677669
        %v2467 = vlaneseq
        %v2468 = vshrl.u32 %v2467, 7
        %v2469 = vsub.s32 0, %v2468
        %v2470 = vrot.slane %v920, %v2469
        %v2471 = vadd.f32 %v2463, %v2470
        %v2472 = vadd.f32 %v2464, %v2470
        %v2473 = vadd.f32 %v2465, %v2470
        %v2474 = vadd.f32 %v2466, %v2470
        %vm2475 = vcmask 64512
        %v2476 = vsel %vm2475, %v2471, -inf
        %2477 = vmax.xlane.f32.xlu0 %v2476
        %v2478 = vpop.xlane.xlu0 %2477
        %v2479 = vsel %vm2475, %v2472, -inf
        %2480 = vmax.xlane.f32.xlu0 %v2479
        %v2481 = vpop.xlane.xlu0 %2480
        %v2482 = vsel %vm2475, %v2473, -inf
        %2483 = vmax.xlane.f32.xlu0 %v2482
        %v2484 = vpop.xlane.xlu0 %2483
        %v2485 = vsel %vm2475, %v2474, -inf
        %2486 = vmax.xlane.f32.xlu0 %v2485
        %v2487 = vpop.xlane.xlu0 %2486
        %v2488 = vsub.f32 %v2471, %v2478
        %v2489 = vsub.f32 %v2472, %v2481
        %v2490 = vsub.f32 %v2473, %v2484
        %v2491 = vsub.f32 %v2474, %v2487
        %v2492 = vmul.f32 %v2488, 1.442695
        %v2493 = vpow.pop %v2492
        %v2494 = vmul.f32 %v2489, 1.442695
        %v2495 = vpow.pop %v2494
        %v2496 = vmul.f32 %v2490, 1.442695
        %v2497 = vpow.pop %v2496
        %v2498 = vmul.f32 %v2491, 1.442695
        %v2499 = vpow.pop %v2498
        %v2500 = vsel %vm2475, %v2493, 0.0
        %2501 = vadd.xlane.f32.xlu0 %v2500
        %v2502 = vpop.xlane.xlu0 %2501
        %v2503 = vsel %vm2475, %v2495, 0.0
        %2504 = vadd.xlane.f32.xlu0 %v2503
        %v2505 = vpop.xlane.xlu0 %2504
        %v2506 = vsel %vm2475, %v2497, 0.0
        %2507 = vadd.xlane.f32.xlu0 %v2506
        %v2508 = vpop.xlane.xlu0 %2507
        %v2509 = vsel %vm2475, %v2499, 0.0
        %2510 = vadd.xlane.f32.xlu0 %v2509
        %v2511 = vpop.xlane.xlu0 %2510
        %v2512 = vrcp.pop %v2502
        %v2513 = vrcp.pop %v2505
        %v2514 = vrcp.pop %v2508
        %v2515 = vrcp.pop %v2511
        %v2516 = vmul.f32 %v2493, %v2512
        %v2517 = vmul.f32 %v2495, %v2513
        %v2518 = vmul.f32 %v2497, %v2514
        %v2519 = vmul.f32 %v2499, %v2515
        %v2520 = vpack.c.bf16 %v2516, %v2516
        %v2521 = vpack.c.bf16 %v2517, %v2517
        %v2522 = vpack.c.bf16 %v2518, %v2518
        %v2523 = vpack.c.bf16 %v2519, %v2519
        %v2524 = vpack.c.bf16 %v2001, %v2001
        %v2525 = vpack.c.bf16 %v2089, %v2089
        %v2526 = vpack.c.bf16 %v2177, %v2177
        %v2527 = vpack.c.bf16 %v2265, %v2265
        %v2529 = vsel %vm2475, %v2520, 0
        %vm2531 = vcmask 1043456
        %v2533 = vsel %vm2531, %v2524, 0
        %2535 = vmatprep.subr.bf16.mxu0 0
        %2536 = vmatpush1.bf16.msra.mxu0 %v2533
        %2537 = vmatprep.subr.bf16.mxu0 0
        %2538 = vmatpush1.bf16.msra.mxu0 0
        %2539 = vmatprep.subr.bf16.mxu0 0
        %2540 = vmatpush1.bf16.msra.mxu0 0
        %2541 = vmatprep.subr.bf16.mxu0 0
        %2542 = vmatpush1.bf16.msra.mxu0 0
        %2543 = vmatprep.subr.bf16.mxu0 0
        %2544 = vmatpush1.bf16.msra.mxu0 0
        %2545 = vmatprep.subr.bf16.mxu0 0
        %2546 = vmatpush1.bf16.msra.mxu0 0
        %2547 = vmatprep.subr.bf16.mxu0 0
        %2548 = vmatpush1.bf16.msra.mxu0 0
        %2549 = vmatprep.subr.bf16.mxu0 0
        %2550 = vmatpush1.bf16.msra.mxu0 0
        %2551 = vmatprep.subr.bf16.mxu0 0
        %2552 = vmatpush1.bf16.msra.mxu0 0
        %2553 = vmatprep.subr.bf16.mxu0 0
        %2554 = vmatpush1.bf16.msra.mxu0 0
        %2555 = vmatprep.subr.bf16.mxu0 0
        %2556 = vmatpush1.bf16.msra.mxu0 0
        %2557 = vmatprep.subr.bf16.mxu0 0
        %2558 = vmatpush1.bf16.msra.mxu0 0
        %2559 = vmatprep.subr.bf16.mxu0 0
        %2560 = vmatpush1.bf16.msra.mxu0 0
        %2561 = vmatprep.subr.bf16.mxu0 0
        %2562 = vmatpush1.bf16.msra.mxu0 0
        %2563 = vmatprep.subr.bf16.mxu0 0
        %2564 = vmatpush1.bf16.msra.mxu0 0
        %2565 = vmatprep.subr.bf16.mxu0 0
        %2566 = vmatpush1.bf16.msra.mxu0 0
        %2567 = vmatprep.mubr.bf16.mxu0 0
        %2568 = vmatmul.mubr.bf16.gmra.mrb[0].mxu0 %v2529
        %v2569 = vpop.f32.mrb[0].mxu0
        %v2570 = vadd.f32 0.0, %v2569
        %v2571 = vpop.f32.mrb[0].mxu0
        %v2572 = vpop.f32.mrb[0].mxu0
        %v2573 = vpop.f32.mrb[0].mxu0
        %2574 = vdwg.mxu0
        %v2576 = vsel %vm2475, %v2521, 0
        %v2579 = vsel %vm2531, %v2525, 0
        %2581 = vmatprep.subr.bf16.mxu0 0
        %2582 = vmatpush1.bf16.msra.mxu0 %v2579
        %2583 = vmatprep.subr.bf16.mxu0 0
        %2584 = vmatpush1.bf16.msra.mxu0 0
        %2585 = vmatprep.subr.bf16.mxu0 0
        %2586 = vmatpush1.bf16.msra.mxu0 0
        %2587 = vmatprep.subr.bf16.mxu0 0
        %2588 = vmatpush1.bf16.msra.mxu0 0
        %2589 = vmatprep.subr.bf16.mxu0 0
        %2590 = vmatpush1.bf16.msra.mxu0 0
        %2591 = vmatprep.subr.bf16.mxu0 0
        %2592 = vmatpush1.bf16.msra.mxu0 0
        %2593 = vmatprep.subr.bf16.mxu0 0
        %2594 = vmatpush1.bf16.msra.mxu0 0
        %2595 = vmatprep.subr.bf16.mxu0 0
        %2596 = vmatpush1.bf16.msra.mxu0 0
        %2597 = vmatprep.subr.bf16.mxu0 0
        %2598 = vmatpush1.bf16.msra.mxu0 0
        %2599 = vmatprep.subr.bf16.mxu0 0
        %2600 = vmatpush1.bf16.msra.mxu0 0
        %2601 = vmatprep.subr.bf16.mxu0 0
        %2602 = vmatpush1.bf16.msra.mxu0 0
        %2603 = vmatprep.subr.bf16.mxu0 0
        %2604 = vmatpush1.bf16.msra.mxu0 0
        %2605 = vmatprep.subr.bf16.mxu0 0
        %2606 = vmatpush1.bf16.msra.mxu0 0
        %2607 = vmatprep.subr.bf16.mxu0 0
        %2608 = vmatpush1.bf16.msra.mxu0 0
        %2609 = vmatprep.subr.bf16.mxu0 0
        %2610 = vmatpush1.bf16.msra.mxu0 0
        %2611 = vmatprep.subr.bf16.mxu0 0
        %2612 = vmatpush1.bf16.msra.mxu0 0
        %2613 = vmatprep.mubr.bf16.mxu0 0
        %2614 = vmatmul.mubr.bf16.gmra.mrb[0].mxu0 %v2576
        %v2615 = vpop.f32.mrb[0].mxu0
        %v2616 = vadd.f32 0.0, %v2615
        %v2617 = vpop.f32.mrb[0].mxu0
        %v2618 = vpop.f32.mrb[0].mxu0
        %v2619 = vpop.f32.mrb[0].mxu0
        %2620 = vdwg.mxu0
        %v2622 = vsel %vm2475, %v2522, 0
        %v2625 = vsel %vm2531, %v2526, 0
        %2627 = vmatprep.subr.bf16.mxu0 0
        %2628 = vmatpush1.bf16.msra.mxu0 %v2625
        %2629 = vmatprep.subr.bf16.mxu0 0
        %2630 = vmatpush1.bf16.msra.mxu0 0
        %2631 = vmatprep.subr.bf16.mxu0 0
        %2632 = vmatpush1.bf16.msra.mxu0 0
        %2633 = vmatprep.subr.bf16.mxu0 0
        %2634 = vmatpush1.bf16.msra.mxu0 0
        %2635 = vmatprep.subr.bf16.mxu0 0
        %2636 = vmatpush1.bf16.msra.mxu0 0
        %2637 = vmatprep.subr.bf16.mxu0 0
        %2638 = vmatpush1.bf16.msra.mxu0 0
        %2639 = vmatprep.subr.bf16.mxu0 0
        %2640 = vmatpush1.bf16.msra.mxu0 0
        %2641 = vmatprep.subr.bf16.mxu0 0
        %2642 = vmatpush1.bf16.msra.mxu0 0
        %2643 = vmatprep.subr.bf16.mxu0 0
        %2644 = vmatpush1.bf16.msra.mxu0 0
        %2645 = vmatprep.subr.bf16.mxu0 0
        %2646 = vmatpush1.bf16.msra.mxu0 0
        %2647 = vmatprep.subr.bf16.mxu0 0
        %2648 = vmatpush1.bf16.msra.mxu0 0
        %2649 = vmatprep.subr.bf16.mxu0 0
        %2650 = vmatpush1.bf16.msra.mxu0 0
        %2651 = vmatprep.subr.bf16.mxu0 0
        %2652 = vmatpush1.bf16.msra.mxu0 0
        %2653 = vmatprep.subr.bf16.mxu0 0
        %2654 = vmatpush1.bf16.msra.mxu0 0
        %2655 = vmatprep.subr.bf16.mxu0 0
        %2656 = vmatpush1.bf16.msra.mxu0 0
        %2657 = vmatprep.subr.bf16.mxu0 0
        %2658 = vmatpush1.bf16.msra.mxu0 0
        %2659 = vmatprep.mubr.bf16.mxu0 0
        %2660 = vmatmul.mubr.bf16.gmra.mrb[0].mxu0 %v2622
        %v2661 = vpop.f32.mrb[0].mxu0
        %v2662 = vadd.f32 0.0, %v2661
        %v2663 = vpop.f32.mrb[0].mxu0
        %v2664 = vpop.f32.mrb[0].mxu0
        %v2665 = vpop.f32.mrb[0].mxu0
        %2666 = vdwg.mxu0
        %v2668 = vsel %vm2475, %v2523, 0
        %v2671 = vsel %vm2531, %v2527, 0
        %2673 = vmatprep.subr.bf16.mxu0 0
        %2674 = vmatpush1.bf16.msra.mxu0 %v2671
        %2675 = vmatprep.subr.bf16.mxu0 0
        %2676 = vmatpush1.bf16.msra.mxu0 0
        %2677 = vmatprep.subr.bf16.mxu0 0
        %2678 = vmatpush1.bf16.msra.mxu0 0
        %2679 = vmatprep.subr.bf16.mxu0 0
        %2680 = vmatpush1.bf16.msra.mxu0 0
        %2681 = vmatprep.subr.bf16.mxu0 0
        %2682 = vmatpush1.bf16.msra.mxu0 0
        %2683 = vmatprep.subr.bf16.mxu0 0
        %2684 = vmatpush1.bf16.msra.mxu0 0
        %2685 = vmatprep.subr.bf16.mxu0 0
        %2686 = vmatpush1.bf16.msra.mxu0 0
        %2687 = vmatprep.subr.bf16.mxu0 0
        %2688 = vmatpush1.bf16.msra.mxu0 0
        %2689 = vmatprep.subr.bf16.mxu0 0
        %2690 = vmatpush1.bf16.msra.mxu0 0
        %2691 = vmatprep.subr.bf16.mxu0 0
        %2692 = vmatpush1.bf16.msra.mxu0 0
        %2693 = vmatprep.subr.bf16.mxu0 0
        %2694 = vmatpush1.bf16.msra.mxu0 0
        %2695 = vmatprep.subr.bf16.mxu0 0
        %2696 = vmatpush1.bf16.msra.mxu0 0
        %2697 = vmatprep.subr.bf16.mxu0 0
        %2698 = vmatpush1.bf16.msra.mxu0 0
        %2699 = vmatprep.subr.bf16.mxu0 0
        %2700 = vmatpush1.bf16.msra.mxu0 0
        %2701 = vmatprep.subr.bf16.mxu0 0
        %2702 = vmatpush1.bf16.msra.mxu0 0
        %2703 = vmatprep.subr.bf16.mxu0 0
        %2704 = vmatpush1.bf16.msra.mxu0 0
        %2705 = vmatprep.mubr.bf16.mxu0 0
        %2706 = vmatmul.mubr.bf16.gmra.mrb[0].mxu0 %v2668
        %v2707 = vpop.f32.mrb[0].mxu0
        %v2708 = vadd.f32 0.0, %v2707
        %v2709 = vpop.f32.mrb[0].mxu0
        %v2710 = vpop.f32.mrb[0].mxu0
        %v2711 = vpop.f32.mrb[0].mxu0
        %2712 = vdwg.mxu0
        %v2713 = vpack.c.bf16 %v2570, %v2570
        %v2714 = vpack.c.bf16 %v2616, %v2616
        %v2715 = vpack.c.bf16 %v2662, %v2662
        %v2716 = vpack.c.bf16 %v2708, %v2708
        %v2721 = vunpack.c.l.b16 %v1113
        %v2722 = vunpack.c.l.b16 %v1114
        %v2723 = vunpack.c.l.b16 %v1115
        %v2724 = vunpack.c.l.b16 %v1116
        %v2725 = vpack.c.b16 %v2722, %v2721
        %v2726 = vpack.c.b16 %v2724, %v2723
        %v2730 = vsel %vm2278, %v2713, 0
        %2732 = vmatprep.subr.bf16.mxu0 0
        %2733 = vmatpush1.bf16.msra.mxu0 %v2725
        %2734 = vmatprep.subr.bf16.mxu0 0
        %2735 = vmatpush1.bf16.msra.mxu0 %v2726
        %2736 = vmatprep.subr.bf16.mxu0 0
        %2737 = vmatpush1.bf16.msra.mxu0 0
        %2738 = vmatprep.subr.bf16.mxu0 0
        %2739 = vmatpush1.bf16.msra.mxu0 0
        %2740 = vmatprep.subr.bf16.mxu0 0
        %2741 = vmatpush1.bf16.msra.mxu0 0
        %2742 = vmatprep.subr.bf16.mxu0 0
        %2743 = vmatpush1.bf16.msra.mxu0 0
        %2744 = vmatprep.subr.bf16.mxu0 0
        %2745 = vmatpush1.bf16.msra.mxu0 0
        %2746 = vmatprep.subr.bf16.mxu0 0
        %2747 = vmatpush1.bf16.msra.mxu0 0
        %2748 = vmatprep.subr.bf16.mxu0 0
        %2749 = vmatpush1.bf16.msra.mxu0 0
        %2750 = vmatprep.subr.bf16.mxu0 0
        %2751 = vmatpush1.bf16.msra.mxu0 0
        %2752 = vmatprep.subr.bf16.mxu0 0
        %2753 = vmatpush1.bf16.msra.mxu0 0
        %2754 = vmatprep.subr.bf16.mxu0 0
        %2755 = vmatpush1.bf16.msra.mxu0 0
        %2756 = vmatprep.subr.bf16.mxu0 0
        %2757 = vmatpush1.bf16.msra.mxu0 0
        %2758 = vmatprep.subr.bf16.mxu0 0
        %2759 = vmatpush1.bf16.msra.mxu0 0
        %2760 = vmatprep.subr.bf16.mxu0 0
        %2761 = vmatpush1.bf16.msra.mxu0 0
        %2762 = vmatprep.subr.bf16.mxu0 0
        %2763 = vmatpush1.bf16.msra.mxu0 0
        %2764 = vmatprep.mubr.bf16.mxu0 0
        %2765 = vmatmul.mubr.bf16.gmra.mrb[0].mxu0 %v2730
        %v2766 = vpop.f32.mrb[0].mxu0
        %v2767 = vadd.f32 0.0, %v2766
        %v2768 = vpop.f32.mrb[0].mxu0
        %v2769 = vpop.f32.mrb[0].mxu0
        %v2770 = vpop.f32.mrb[0].mxu0
        %2771 = vdwg.mxu0
        %v2776 = vunpack.c.l.b16 %v1117
        %v2777 = vunpack.c.l.b16 %v1118
        %v2778 = vunpack.c.l.b16 %v1119
        %v2779 = vunpack.c.l.b16 %v1120
        %v2780 = vpack.c.b16 %v2777, %v2776
        %v2781 = vpack.c.b16 %v2779, %v2778
        %v2785 = vsel %vm2278, %v2714, 0
        %2787 = vmatprep.subr.bf16.mxu0 0
        %2788 = vmatpush1.bf16.msra.mxu0 %v2780
        %2789 = vmatprep.subr.bf16.mxu0 0
        %2790 = vmatpush1.bf16.msra.mxu0 %v2781
        %2791 = vmatprep.subr.bf16.mxu0 0
        %2792 = vmatpush1.bf16.msra.mxu0 0
        %2793 = vmatprep.subr.bf16.mxu0 0
        %2794 = vmatpush1.bf16.msra.mxu0 0
        %2795 = vmatprep.subr.bf16.mxu0 0
        %2796 = vmatpush1.bf16.msra.mxu0 0
        %2797 = vmatprep.subr.bf16.mxu0 0
        %2798 = vmatpush1.bf16.msra.mxu0 0
        %2799 = vmatprep.subr.bf16.mxu0 0
        %2800 = vmatpush1.bf16.msra.mxu0 0
        %2801 = vmatprep.subr.bf16.mxu0 0
        %2802 = vmatpush1.bf16.msra.mxu0 0
        %2803 = vmatprep.subr.bf16.mxu0 0
        %2804 = vmatpush1.bf16.msra.mxu0 0
        %2805 = vmatprep.subr.bf16.mxu0 0
        %2806 = vmatpush1.bf16.msra.mxu0 0
        %2807 = vmatprep.subr.bf16.mxu0 0
        %2808 = vmatpush1.bf16.msra.mxu0 0
        %2809 = vmatprep.subr.bf16.mxu0 0
        %2810 = vmatpush1.bf16.msra.mxu0 0
        %2811 = vmatprep.subr.bf16.mxu0 0
        %2812 = vmatpush1.bf16.msra.mxu0 0
        %2813 = vmatprep.subr.bf16.mxu0 0
        %2814 = vmatpush1.bf16.msra.mxu0 0
        %2815 = vmatprep.subr.bf16.mxu0 0
        %2816 = vmatpush1.bf16.msra.mxu0 0
        %2817 = vmatprep.subr.bf16.mxu0 0
        %2818 = vmatpush1.bf16.msra.mxu0 0
        %2819 = vmatprep.mubr.bf16.mxu0 0
        %2820 = vmatmul.mubr.bf16.gmra.mrb[0].mxu0 %v2785
        %v2821 = vpop.f32.mrb[0].mxu0
        %v2822 = vadd.f32 0.0, %v2821
        %v2823 = vpop.f32.mrb[0].mxu0
        %v2824 = vpop.f32.mrb[0].mxu0
        %v2825 = vpop.f32.mrb[0].mxu0
        %2826 = vdwg.mxu0
        %v2831 = vunpack.c.l.b16 %v1121
        %v2832 = vunpack.c.l.b16 %v1122
        %v2833 = vunpack.c.l.b16 %v1123
        %v2834 = vunpack.c.l.b16 %v1124
        %v2835 = vpack.c.b16 %v2832, %v2831
        %v2836 = vpack.c.b16 %v2834, %v2833
        %v2840 = vsel %vm2278, %v2715, 0
        %2842 = vmatprep.subr.bf16.mxu0 0
        %2843 = vmatpush1.bf16.msra.mxu0 %v2835
        %2844 = vmatprep.subr.bf16.mxu0 0
        %2845 = vmatpush1.bf16.msra.mxu0 %v2836
        %2846 = vmatprep.subr.bf16.mxu0 0
        %2847 = vmatpush1.bf16.msra.mxu0 0
        %2848 = vmatprep.subr.bf16.mxu0 0
        %2849 = vmatpush1.bf16.msra.mxu0 0
        %2850 = vmatprep.subr.bf16.mxu0 0
        %2851 = vmatpush1.bf16.msra.mxu0 0
        %2852 = vmatprep.subr.bf16.mxu0 0
        %2853 = vmatpush1.bf16.msra.mxu0 0
        %2854 = vmatprep.subr.bf16.mxu0 0
        %2855 = vmatpush1.bf16.msra.mxu0 0
        %2856 = vmatprep.subr.bf16.mxu0 0
        %2857 = vmatpush1.bf16.msra.mxu0 0
        %2858 = vmatprep.subr.bf16.mxu0 0
        %2859 = vmatpush1.bf16.msra.mxu0 0
        %2860 = vmatprep.subr.bf16.mxu0 0
        %2861 = vmatpush1.bf16.msra.mxu0 0
        %2862 = vmatprep.subr.bf16.mxu0 0
        %2863 = vmatpush1.bf16.msra.mxu0 0
        %2864 = vmatprep.subr.bf16.mxu0 0
        %2865 = vmatpush1.bf16.msra.mxu0 0
        %2866 = vmatprep.subr.bf16.mxu0 0
        %2867 = vmatpush1.bf16.msra.mxu0 0
        %2868 = vmatprep.subr.bf16.mxu0 0
        %2869 = vmatpush1.bf16.msra.mxu0 0
        %2870 = vmatprep.subr.bf16.mxu0 0
        %2871 = vmatpush1.bf16.msra.mxu0 0
        %2872 = vmatprep.subr.bf16.mxu0 0
        %2873 = vmatpush1.bf16.msra.mxu0 0
        %2874 = vmatprep.mubr.bf16.mxu0 0
        %2875 = vmatmul.mubr.bf16.gmra.mrb[0].mxu0 %v2840
        %v2876 = vpop.f32.mrb[0].mxu0
        %v2877 = vadd.f32 0.0, %v2876
        %v2878 = vpop.f32.mrb[0].mxu0
        %v2879 = vpop.f32.mrb[0].mxu0
        %v2880 = vpop.f32.mrb[0].mxu0
        %2881 = vdwg.mxu0
        %v2886 = vunpack.c.l.b16 %v1125
        %v2887 = vunpack.c.l.b16 %v1126
        %v2888 = vunpack.c.l.b16 %v1127
        %v2889 = vunpack.c.l.b16 %v1128
        %v2890 = vpack.c.b16 %v2887, %v2886
        %v2891 = vpack.c.b16 %v2889, %v2888
        %v2895 = vsel %vm2278, %v2716, 0
        %2897 = vmatprep.subr.bf16.mxu0 0
        %2898 = vmatpush1.bf16.msra.mxu0 %v2890
        %2899 = vmatprep.subr.bf16.mxu0 0
        %2900 = vmatpush1.bf16.msra.mxu0 %v2891
        %2901 = vmatprep.subr.bf16.mxu0 0
        %2902 = vmatpush1.bf16.msra.mxu0 0
        %2903 = vmatprep.subr.bf16.mxu0 0
        %2904 = vmatpush1.bf16.msra.mxu0 0
        %2905 = vmatprep.subr.bf16.mxu0 0
        %2906 = vmatpush1.bf16.msra.mxu0 0
        %2907 = vmatprep.subr.bf16.mxu0 0
        %2908 = vmatpush1.bf16.msra.mxu0 0
        %2909 = vmatprep.subr.bf16.mxu0 0
        %2910 = vmatpush1.bf16.msra.mxu0 0
        %2911 = vmatprep.subr.bf16.mxu0 0
        %2912 = vmatpush1.bf16.msra.mxu0 0
        %2913 = vmatprep.subr.bf16.mxu0 0
        %2914 = vmatpush1.bf16.msra.mxu0 0
        %2915 = vmatprep.subr.bf16.mxu0 0
        %2916 = vmatpush1.bf16.msra.mxu0 0
        %2917 = vmatprep.subr.bf16.mxu0 0
        %2918 = vmatpush1.bf16.msra.mxu0 0
        %2919 = vmatprep.subr.bf16.mxu0 0
        %2920 = vmatpush1.bf16.msra.mxu0 0
        %2921 = vmatprep.subr.bf16.mxu0 0
        %2922 = vmatpush1.bf16.msra.mxu0 0
        %2923 = vmatprep.subr.bf16.mxu0 0
        %2924 = vmatpush1.bf16.msra.mxu0 0
        %2925 = vmatprep.subr.bf16.mxu0 0
        %2926 = vmatpush1.bf16.msra.mxu0 0
        %2927 = vmatprep.subr.bf16.mxu0 0
        %2928 = vmatpush1.bf16.msra.mxu0 0
        %2929 = vmatprep.mubr.bf16.mxu0 0
        %2930 = vmatmul.mubr.bf16.gmra.mrb[0].mxu0 %v2895
        %v2931 = vpop.f32.mrb[0].mxu0
        %v2932 = vadd.f32 0.0, %v2931
        %v2933 = vpop.f32.mrb[0].mxu0
        %v2934 = vpop.f32.mrb[0].mxu0
        %v2935 = vpop.f32.mrb[0].mxu0
        %2936 = vdwg.mxu0
        %v2937 = vadd.f32 %v2767, %v2822
        %v2938 = vadd.f32 %v2937, %v2877
        %v2939 = vadd.f32 %v2938, %v2932
        %v2940 = vpack.c.bf16 %v919, %v919
        %2941 = vmatprep.subr.bf16.mxu0 0
        %2942 = vmatpush1.bf16.msra.mxu0 %v1198
        %2943 = vmatprep.subr.bf16.mxu0 0
        %2944 = vmatpush1.bf16.msra.mxu0 %v1199
        %2945 = vmatprep.subr.bf16.mxu0 0
        %2946 = vmatpush1.bf16.msra.mxu0 %v1200
        %2947 = vmatprep.subr.bf16.mxu0 0
        %2948 = vmatpush1.bf16.msra.mxu0 %v1201
        %2949 = vmatprep.subr.bf16.mxu0 0
        %2950 = vmatpush1.bf16.msra.mxu0 %v1202
        %2951 = vmatprep.subr.bf16.mxu0 0
        %2952 = vmatpush1.bf16.msra.mxu0 %v1203
        %2953 = vmatprep.subr.bf16.mxu0 0
        %2954 = vmatpush1.bf16.msra.mxu0 %v1204
        %2955 = vmatprep.subr.bf16.mxu0 0
        %2956 = vmatpush1.bf16.msra.mxu0 %v1205
        %2957 = vmatprep.subr.bf16.mxu0 0
        %2958 = vmatpush1.bf16.msra.mxu0 0
        %2959 = vmatprep.subr.bf16.mxu0 0
        %2960 = vmatpush1.bf16.msra.mxu0 0
        %2961 = vmatprep.subr.bf16.mxu0 0
        %2962 = vmatpush1.bf16.msra.mxu0 0
        %2963 = vmatprep.subr.bf16.mxu0 0
        %2964 = vmatpush1.bf16.msra.mxu0 0
        %2965 = vmatprep.subr.bf16.mxu0 0
        %2966 = vmatpush1.bf16.msra.mxu0 0
        %2967 = vmatprep.subr.bf16.mxu0 0
        %2968 = vmatpush1.bf16.msra.mxu0 0
        %2969 = vmatprep.subr.bf16.mxu0 0
        %2970 = vmatpush1.bf16.msra.mxu0 0
        %2971 = vmatprep.subr.bf16.mxu0 0
        %2972 = vmatpush1.bf16.msra.mxu0 0
        %2973 = vmatprep.mubr.bf16.mxu0 0
        %2974 = vmatmul.mubr.bf16.gmra.mrb[0].mxu0 %v2940
        %v2975 = vpop.f32.mrb[0].mxu0
        %v2976 = vadd.f32 %v1149, %v2975
        %v2977 = vpop.f32.mrb[0].mxu0
        %v2978 = vpop.f32.mrb[0].mxu0
        %v2979 = vpop.f32.mrb[0].mxu0
        %2980 = vdwg.mxu0
        %2981 = vmatprep.subr.bf16.mxu0 0
        %2982 = vmatpush1.bf16.msra.mxu0 %v1286
        %2983 = vmatprep.subr.bf16.mxu0 0
        %2984 = vmatpush1.bf16.msra.mxu0 %v1287
        %2985 = vmatprep.subr.bf16.mxu0 0
        %2986 = vmatpush1.bf16.msra.mxu0 %v1288
        %2987 = vmatprep.subr.bf16.mxu0 0
        %2988 = vmatpush1.bf16.msra.mxu0 %v1289
        %2989 = vmatprep.subr.bf16.mxu0 0
        %2990 = vmatpush1.bf16.msra.mxu0 %v1290
        %2991 = vmatprep.subr.bf16.mxu0 0
        %2992 = vmatpush1.bf16.msra.mxu0 %v1291
        %2993 = vmatprep.subr.bf16.mxu0 0
        %2994 = vmatpush1.bf16.msra.mxu0 %v1292
        %2995 = vmatprep.subr.bf16.mxu0 0
        %2996 = vmatpush1.bf16.msra.mxu0 %v1293
        %2997 = vmatprep.subr.bf16.mxu0 0
        %2998 = vmatpush1.bf16.msra.mxu0 0
        %2999 = vmatprep.subr.bf16.mxu0 0
        %3000 = vmatpush1.bf16.msra.mxu0 0
        %3001 = vmatprep.subr.bf16.mxu0 0
        %3002 = vmatpush1.bf16.msra.mxu0 0
        %3003 = vmatprep.subr.bf16.mxu0 0
        %3004 = vmatpush1.bf16.msra.mxu0 0
        %3005 = vmatprep.subr.bf16.mxu0 0
        %3006 = vmatpush1.bf16.msra.mxu0 0
        %3007 = vmatprep.subr.bf16.mxu0 0
        %3008 = vmatpush1.bf16.msra.mxu0 0
        %3009 = vmatprep.subr.bf16.mxu0 0
        %3010 = vmatpush1.bf16.msra.mxu0 0
        %3011 = vmatprep.subr.bf16.mxu0 0
        %3012 = vmatpush1.bf16.msra.mxu0 0
        %3013 = vmatprep.mubr.bf16.mxu0 0
        %3014 = vmatmul.mubr.bf16.gmra.mrb[0].mxu0 %v2940
        %v3015 = vpop.f32.mrb[0].mxu0
        %v3016 = vadd.f32 %v1153, %v3015
        %v3017 = vpop.f32.mrb[0].mxu0
        %v3018 = vpop.f32.mrb[0].mxu0
        %v3019 = vpop.f32.mrb[0].mxu0
        %3020 = vdwg.mxu0
        %3021 = vmatprep.subr.bf16.mxu0 0
        %3022 = vmatpush1.bf16.msra.mxu0 %v1374
        %3023 = vmatprep.subr.bf16.mxu0 0
        %3024 = vmatpush1.bf16.msra.mxu0 %v1375
        %3025 = vmatprep.subr.bf16.mxu0 0
        %3026 = vmatpush1.bf16.msra.mxu0 %v1376
        %3027 = vmatprep.subr.bf16.mxu0 0
        %3028 = vmatpush1.bf16.msra.mxu0 %v1377
        %3029 = vmatprep.subr.bf16.mxu0 0
        %3030 = vmatpush1.bf16.msra.mxu0 %v1378
        %3031 = vmatprep.subr.bf16.mxu0 0
        %3032 = vmatpush1.bf16.msra.mxu0 %v1379
        %3033 = vmatprep.subr.bf16.mxu0 0
        %3034 = vmatpush1.bf16.msra.mxu0 %v1380
        %3035 = vmatprep.subr.bf16.mxu0 0
        %3036 = vmatpush1.bf16.msra.mxu0 %v1381
        %3037 = vmatprep.subr.bf16.mxu0 0
        %3038 = vmatpush1.bf16.msra.mxu0 0
        %3039 = vmatprep.subr.bf16.mxu0 0
        %3040 = vmatpush1.bf16.msra.mxu0 0
        %3041 = vmatprep.subr.bf16.mxu0 0
        %3042 = vmatpush1.bf16.msra.mxu0 0
        %3043 = vmatprep.subr.bf16.mxu0 0
        %3044 = vmatpush1.bf16.msra.mxu0 0
        %3045 = vmatprep.subr.bf16.mxu0 0
        %3046 = vmatpush1.bf16.msra.mxu0 0
        %3047 = vmatprep.subr.bf16.mxu0 0
        %3048 = vmatpush1.bf16.msra.mxu0 0
        %3049 = vmatprep.subr.bf16.mxu0 0
        %3050 = vmatpush1.bf16.msra.mxu0 0
        %3051 = vmatprep.subr.bf16.mxu0 0
        %3052 = vmatpush1.bf16.msra.mxu0 0
        %3053 = vmatprep.mubr.bf16.mxu0 0
        %3054 = vmatmul.mubr.bf16.gmra.mrb[0].mxu0 %v2940
        %v3055 = vpop.f32.mrb[0].mxu0
        %v3056 = vadd.f32 %v1157, %v3055
        %v3057 = vpop.f32.mrb[0].mxu0
        %v3058 = vpop.f32.mrb[0].mxu0
        %v3059 = vpop.f32.mrb[0].mxu0
        %3060 = vdwg.mxu0
        %3061 = vmatprep.subr.bf16.mxu0 0
        %3062 = vmatpush1.bf16.msra.mxu0 %v1462
        %3063 = vmatprep.subr.bf16.mxu0 0
        %3064 = vmatpush1.bf16.msra.mxu0 %v1463
        %3065 = vmatprep.subr.bf16.mxu0 0
        %3066 = vmatpush1.bf16.msra.mxu0 %v1464
        %3067 = vmatprep.subr.bf16.mxu0 0
        %3068 = vmatpush1.bf16.msra.mxu0 %v1465
        %3069 = vmatprep.subr.bf16.mxu0 0
        %3070 = vmatpush1.bf16.msra.mxu0 %v1466
        %3071 = vmatprep.subr.bf16.mxu0 0
        %3072 = vmatpush1.bf16.msra.mxu0 %v1467
        %3073 = vmatprep.subr.bf16.mxu0 0
        %3074 = vmatpush1.bf16.msra.mxu0 %v1468
        %3075 = vmatprep.subr.bf16.mxu0 0
        %3076 = vmatpush1.bf16.msra.mxu0 %v1469
        %3077 = vmatprep.subr.bf16.mxu0 0
        %3078 = vmatpush1.bf16.msra.mxu0 0
        %3079 = vmatprep.subr.bf16.mxu0 0
        %3080 = vmatpush1.bf16.msra.mxu0 0
        %3081 = vmatprep.subr.bf16.mxu0 0
        %3082 = vmatpush1.bf16.msra.mxu0 0
        %3083 = vmatprep.subr.bf16.mxu0 0
        %3084 = vmatpush1.bf16.msra.mxu0 0
        %3085 = vmatprep.subr.bf16.mxu0 0
        %3086 = vmatpush1.bf16.msra.mxu0 0
        %3087 = vmatprep.subr.bf16.mxu0 0
        %3088 = vmatpush1.bf16.msra.mxu0 0
        %3089 = vmatprep.subr.bf16.mxu0 0
        %3090 = vmatpush1.bf16.msra.mxu0 0
        %3091 = vmatprep.subr.bf16.mxu0 0
        %3092 = vmatpush1.bf16.msra.mxu0 0
        %3093 = vmatprep.mubr.bf16.mxu0 0
        %3094 = vmatmul.mubr.bf16.gmra.mrb[0].mxu0 %v2940
        %v3095 = vpop.f32.mrb[0].mxu0
        %v3096 = vadd.f32 %v1161, %v3095
        %v3097 = vpop.f32.mrb[0].mxu0
        %v3098 = vpop.f32.mrb[0].mxu0
        %v3099 = vpop.f32.mrb[0].mxu0
        %3100 = vdwg.mxu0
        %3101 = vmatprep.subr.bf16.mxu0 0
        %3102 = vmatpush1.bf16.msra.mxu0 %v1574
        %3103 = vmatprep.subr.bf16.mxu0 0
        %3104 = vmatpush1.bf16.msra.mxu0 %v1575
        %3105 = vmatprep.subr.bf16.mxu0 0
        %3106 = vmatpush1.bf16.msra.mxu0 %v1576
        %3107 = vmatprep.subr.bf16.mxu0 0
        %3108 = vmatpush1.bf16.msra.mxu0 %v1577
        %3109 = vmatprep.subr.bf16.mxu0 0
        %3110 = vmatpush1.bf16.msra.mxu0 %v1578
        %3111 = vmatprep.subr.bf16.mxu0 0
        %3112 = vmatpush1.bf16.msra.mxu0 %v1579
        %3113 = vmatprep.subr.bf16.mxu0 0
        %3114 = vmatpush1.bf16.msra.mxu0 %v1580
        %3115 = vmatprep.subr.bf16.mxu0 0
        %3116 = vmatpush1.bf16.msra.mxu0 %v1581
        %3117 = vmatprep.subr.bf16.mxu0 0
        %3118 = vmatpush1.bf16.msra.mxu0 0
        %3119 = vmatprep.subr.bf16.mxu0 0
        %3120 = vmatpush1.bf16.msra.mxu0 0
        %3121 = vmatprep.subr.bf16.mxu0 0
        %3122 = vmatpush1.bf16.msra.mxu0 0
        %3123 = vmatprep.subr.bf16.mxu0 0
        %3124 = vmatpush1.bf16.msra.mxu0 0
        %3125 = vmatprep.subr.bf16.mxu0 0
        %3126 = vmatpush1.bf16.msra.mxu0 0
        %3127 = vmatprep.subr.bf16.mxu0 0
        %3128 = vmatpush1.bf16.msra.mxu0 0
        %3129 = vmatprep.subr.bf16.mxu0 0
        %3130 = vmatpush1.bf16.msra.mxu0 0
        %3131 = vmatprep.subr.bf16.mxu0 0
        %3132 = vmatpush1.bf16.msra.mxu0 0
        %3133 = vmatprep.mubr.bf16.mxu0 0
        %3134 = vmatmul.mubr.bf16.gmra.mrb[0].mxu0 %v2940
        %v3135 = vpop.f32.mrb[0].mxu0
        %v3136 = vadd.f32 %v1525, %v3135
        %v3137 = vpop.f32.mrb[0].mxu0
        %v3138 = vpop.f32.mrb[0].mxu0
        %v3139 = vpop.f32.mrb[0].mxu0
        %3140 = vdwg.mxu0
        %3141 = vmatprep.subr.bf16.mxu0 0
        %3142 = vmatpush1.bf16.msra.mxu0 %v1662
        %3143 = vmatprep.subr.bf16.mxu0 0
        %3144 = vmatpush1.bf16.msra.mxu0 %v1663
        %3145 = vmatprep.subr.bf16.mxu0 0
        %3146 = vmatpush1.bf16.msra.mxu0 %v1664
        %3147 = vmatprep.subr.bf16.mxu0 0
        %3148 = vmatpush1.bf16.msra.mxu0 %v1665
        %3149 = vmatprep.subr.bf16.mxu0 0
        %3150 = vmatpush1.bf16.msra.mxu0 %v1666
        %3151 = vmatprep.subr.bf16.mxu0 0
        %3152 = vmatpush1.bf16.msra.mxu0 %v1667
        %3153 = vmatprep.subr.bf16.mxu0 0
        %3154 = vmatpush1.bf16.msra.mxu0 %v1668
        %3155 = vmatprep.subr.bf16.mxu0 0
        %3156 = vmatpush1.bf16.msra.mxu0 %v1669
        %3157 = vmatprep.subr.bf16.mxu0 0
        %3158 = vmatpush1.bf16.msra.mxu0 0
        %3159 = vmatprep.subr.bf16.mxu0 0
        %3160 = vmatpush1.bf16.msra.mxu0 0
        %3161 = vmatprep.subr.bf16.mxu0 0
        %3162 = vmatpush1.bf16.msra.mxu0 0
        %3163 = vmatprep.subr.bf16.mxu0 0
        %3164 = vmatpush1.bf16.msra.mxu0 0
        %3165 = vmatprep.subr.bf16.mxu0 0
        %3166 = vmatpush1.bf16.msra.mxu0 0
        %3167 = vmatprep.subr.bf16.mxu0 0
        %3168 = vmatpush1.bf16.msra.mxu0 0
        %3169 = vmatprep.subr.bf16.mxu0 0
        %3170 = vmatpush1.bf16.msra.mxu0 0
        %3171 = vmatprep.subr.bf16.mxu0 0
        %3172 = vmatpush1.bf16.msra.mxu0 0
        %3173 = vmatprep.mubr.bf16.mxu0 0
        %3174 = vmatmul.mubr.bf16.gmra.mrb[0].mxu0 %v2940
        %v3175 = vpop.f32.mrb[0].mxu0
        %v3176 = vadd.f32 %v1529, %v3175
        %v3177 = vpop.f32.mrb[0].mxu0
        %v3178 = vpop.f32.mrb[0].mxu0
        %v3179 = vpop.f32.mrb[0].mxu0
        %3180 = vdwg.mxu0
        %3181 = vmatprep.subr.bf16.mxu0 0
        %3182 = vmatpush1.bf16.msra.mxu0 %v1750
        %3183 = vmatprep.subr.bf16.mxu0 0
        %3184 = vmatpush1.bf16.msra.mxu0 %v1751
        %3185 = vmatprep.subr.bf16.mxu0 0
        %3186 = vmatpush1.bf16.msra.mxu0 %v1752
        %3187 = vmatprep.subr.bf16.mxu0 0
        %3188 = vmatpush1.bf16.msra.mxu0 %v1753
        %3189 = vmatprep.subr.bf16.mxu0 0
        %3190 = vmatpush1.bf16.msra.mxu0 %v1754
        %3191 = vmatprep.subr.bf16.mxu0 0
        %3192 = vmatpush1.bf16.msra.mxu0 %v1755
        %3193 = vmatprep.subr.bf16.mxu0 0
        %3194 = vmatpush1.bf16.msra.mxu0 %v1756
        %3195 = vmatprep.subr.bf16.mxu0 0
        %3196 = vmatpush1.bf16.msra.mxu0 %v1757
        %3197 = vmatprep.subr.bf16.mxu0 0
        %3198 = vmatpush1.bf16.msra.mxu0 0
        %3199 = vmatprep.subr.bf16.mxu0 0
        %3200 = vmatpush1.bf16.msra.mxu0 0
        %3201 = vmatprep.subr.bf16.mxu0 0
        %3202 = vmatpush1.bf16.msra.mxu0 0
        %3203 = vmatprep.subr.bf16.mxu0 0
        %3204 = vmatpush1.bf16.msra.mxu0 0
        %3205 = vmatprep.subr.bf16.mxu0 0
        %3206 = vmatpush1.bf16.msra.mxu0 0
        %3207 = vmatprep.subr.bf16.mxu0 0
        %3208 = vmatpush1.bf16.msra.mxu0 0
        %3209 = vmatprep.subr.bf16.mxu0 0
        %3210 = vmatpush1.bf16.msra.mxu0 0
        %3211 = vmatprep.subr.bf16.mxu0 0
        %3212 = vmatpush1.bf16.msra.mxu0 0
        %3213 = vmatprep.mubr.bf16.mxu0 0
        %3214 = vmatmul.mubr.bf16.gmra.mrb[0].mxu0 %v2940
        %v3215 = vpop.f32.mrb[0].mxu0
        %v3216 = vadd.f32 %v1533, %v3215
        %v3217 = vpop.f32.mrb[0].mxu0
        %v3218 = vpop.f32.mrb[0].mxu0
        %v3219 = vpop.f32.mrb[0].mxu0
        %3220 = vdwg.mxu0
        %3221 = vmatprep.subr.bf16.mxu0 0
        %3222 = vmatpush1.bf16.msra.mxu0 %v1838
        %3223 = vmatprep.subr.bf16.mxu0 0
        %3224 = vmatpush1.bf16.msra.mxu0 %v1839
        %3225 = vmatprep.subr.bf16.mxu0 0
        %3226 = vmatpush1.bf16.msra.mxu0 %v1840
        %3227 = vmatprep.subr.bf16.mxu0 0
        %3228 = vmatpush1.bf16.msra.mxu0 %v1841
        %3229 = vmatprep.subr.bf16.mxu0 0
        %3230 = vmatpush1.bf16.msra.mxu0 %v1842
        %3231 = vmatprep.subr.bf16.mxu0 0
        %3232 = vmatpush1.bf16.msra.mxu0 %v1843
        %3233 = vmatprep.subr.bf16.mxu0 0
        %3234 = vmatpush1.bf16.msra.mxu0 %v1844
        %3235 = vmatprep.subr.bf16.mxu0 0
        %3236 = vmatpush1.bf16.msra.mxu0 %v1845
        %3237 = vmatprep.subr.bf16.mxu0 0
        %3238 = vmatpush1.bf16.msra.mxu0 0
        %3239 = vmatprep.subr.bf16.mxu0 0
        %3240 = vmatpush1.bf16.msra.mxu0 0
        %3241 = vmatprep.subr.bf16.mxu0 0
        %3242 = vmatpush1.bf16.msra.mxu0 0
        %3243 = vmatprep.subr.bf16.mxu0 0
        %3244 = vmatpush1.bf16.msra.mxu0 0
        %3245 = vmatprep.subr.bf16.mxu0 0
        %3246 = vmatpush1.bf16.msra.mxu0 0
        %3247 = vmatprep.subr.bf16.mxu0 0
        %3248 = vmatpush1.bf16.msra.mxu0 0
        %3249 = vmatprep.subr.bf16.mxu0 0
        %3250 = vmatpush1.bf16.msra.mxu0 0
        %3251 = vmatprep.subr.bf16.mxu0 0
        %3252 = vmatpush1.bf16.msra.mxu0 0
        %3253 = vmatprep.mubr.bf16.mxu0 0
        %3254 = vmatmul.mubr.bf16.gmra.mrb[0].mxu0 %v2940
        %v3255 = vpop.f32.mrb[0].mxu0
        %v3256 = vadd.f32 %v1537, %v3255
        %v3257 = vpop.f32.mrb[0].mxu0
        %v3258 = vpop.f32.mrb[0].mxu0
        %v3259 = vpop.f32.mrb[0].mxu0
        %3260 = vdwg.mxu0
        %3261 = vmatprep.subr.bf16.mxu0 0
        %3262 = vmatpush1.bf16.msra.mxu0 %v1950
        %3263 = vmatprep.subr.bf16.mxu0 0
        %3264 = vmatpush1.bf16.msra.mxu0 %v1951
        %3265 = vmatprep.subr.bf16.mxu0 0
        %3266 = vmatpush1.bf16.msra.mxu0 %v1952
        %3267 = vmatprep.subr.bf16.mxu0 0
        %3268 = vmatpush1.bf16.msra.mxu0 %v1953
        %3269 = vmatprep.subr.bf16.mxu0 0
        %3270 = vmatpush1.bf16.msra.mxu0 %v1954
        %3271 = vmatprep.subr.bf16.mxu0 0
        %3272 = vmatpush1.bf16.msra.mxu0 %v1955
        %3273 = vmatprep.subr.bf16.mxu0 0
        %3274 = vmatpush1.bf16.msra.mxu0 %v1956
        %3275 = vmatprep.subr.bf16.mxu0 0
        %3276 = vmatpush1.bf16.msra.mxu0 %v1957
        %3277 = vmatprep.subr.bf16.mxu0 0
        %3278 = vmatpush1.bf16.msra.mxu0 0
        %3279 = vmatprep.subr.bf16.mxu0 0
        %3280 = vmatpush1.bf16.msra.mxu0 0
        %3281 = vmatprep.subr.bf16.mxu0 0
        %3282 = vmatpush1.bf16.msra.mxu0 0
        %3283 = vmatprep.subr.bf16.mxu0 0
        %3284 = vmatpush1.bf16.msra.mxu0 0
        %3285 = vmatprep.subr.bf16.mxu0 0
        %3286 = vmatpush1.bf16.msra.mxu0 0
        %3287 = vmatprep.subr.bf16.mxu0 0
        %3288 = vmatpush1.bf16.msra.mxu0 0
        %3289 = vmatprep.subr.bf16.mxu0 0
        %3290 = vmatpush1.bf16.msra.mxu0 0
        %3291 = vmatprep.subr.bf16.mxu0 0
        %3292 = vmatpush1.bf16.msra.mxu0 0
        %3293 = vmatprep.mubr.bf16.mxu0 0
        %3294 = vmatmul.mubr.bf16.gmra.mrb[0].mxu0 %v2940
        %v3295 = vpop.f32.mrb[0].mxu0
        %v3296 = vadd.f32 %v1901, %v3295
        %v3297 = vpop.f32.mrb[0].mxu0
        %v3298 = vpop.f32.mrb[0].mxu0
        %v3299 = vpop.f32.mrb[0].mxu0
        %3300 = vdwg.mxu0
        %3301 = vmatprep.subr.bf16.mxu0 0
        %3302 = vmatpush1.bf16.msra.mxu0 %v2038
        %3303 = vmatprep.subr.bf16.mxu0 0
        %3304 = vmatpush1.bf16.msra.mxu0 %v2039
        %3305 = vmatprep.subr.bf16.mxu0 0
        %3306 = vmatpush1.bf16.msra.mxu0 %v2040
        %3307 = vmatprep.subr.bf16.mxu0 0
        %3308 = vmatpush1.bf16.msra.mxu0 %v2041
        %3309 = vmatprep.subr.bf16.mxu0 0
        %3310 = vmatpush1.bf16.msra.mxu0 %v2042
        %3311 = vmatprep.subr.bf16.mxu0 0
        %3312 = vmatpush1.bf16.msra.mxu0 %v2043
        %3313 = vmatprep.subr.bf16.mxu0 0
        %3314 = vmatpush1.bf16.msra.mxu0 %v2044
        %3315 = vmatprep.subr.bf16.mxu0 0
        %3316 = vmatpush1.bf16.msra.mxu0 %v2045
        %3317 = vmatprep.subr.bf16.mxu0 0
        %3318 = vmatpush1.bf16.msra.mxu0 0
        %3319 = vmatprep.subr.bf16.mxu0 0
        %3320 = vmatpush1.bf16.msra.mxu0 0
        %3321 = vmatprep.subr.bf16.mxu0 0
        %3322 = vmatpush1.bf16.msra.mxu0 0
        %3323 = vmatprep.subr.bf16.mxu0 0
        %3324 = vmatpush1.bf16.msra.mxu0 0
        %3325 = vmatprep.subr.bf16.mxu0 0
        %3326 = vmatpush1.bf16.msra.mxu0 0
        %3327 = vmatprep.subr.bf16.mxu0 0
        %3328 = vmatpush1.bf16.msra.mxu0 0
        %3329 = vmatprep.subr.bf16.mxu0 0
        %3330 = vmatpush1.bf16.msra.mxu0 0
        %3331 = vmatprep.subr.bf16.mxu0 0
        %3332 = vmatpush1.bf16.msra.mxu0 0
        %3333 = vmatprep.mubr.bf16.mxu0 0
        %3334 = vmatmul.mubr.bf16.gmra.mrb[0].mxu0 %v2940
        %v3335 = vpop.f32.mrb[0].mxu0
        %v3336 = vadd.f32 %v1905, %v3335
        %v3337 = vpop.f32.mrb[0].mxu0
        %v3338 = vpop.f32.mrb[0].mxu0
        %v3339 = vpop.f32.mrb[0].mxu0
        %3340 = vdwg.mxu0
        %3341 = vmatprep.subr.bf16.mxu0 0
        %3342 = vmatpush1.bf16.msra.mxu0 %v2126
        %3343 = vmatprep.subr.bf16.mxu0 0
        %3344 = vmatpush1.bf16.msra.mxu0 %v2127
        %3345 = vmatprep.subr.bf16.mxu0 0
        %3346 = vmatpush1.bf16.msra.mxu0 %v2128
        %3347 = vmatprep.subr.bf16.mxu0 0
        %3348 = vmatpush1.bf16.msra.mxu0 %v2129
        %3349 = vmatprep.subr.bf16.mxu0 0
        %3350 = vmatpush1.bf16.msra.mxu0 %v2130
        %3351 = vmatprep.subr.bf16.mxu0 0
        %3352 = vmatpush1.bf16.msra.mxu0 %v2131
        %3353 = vmatprep.subr.bf16.mxu0 0
        %3354 = vmatpush1.bf16.msra.mxu0 %v2132
        %3355 = vmatprep.subr.bf16.mxu0 0
        %3356 = vmatpush1.bf16.msra.mxu0 %v2133
        %3357 = vmatprep.subr.bf16.mxu0 0
        %3358 = vmatpush1.bf16.msra.mxu0 0
        %3359 = vmatprep.subr.bf16.mxu0 0
        %3360 = vmatpush1.bf16.msra.mxu0 0
        %3361 = vmatprep.subr.bf16.mxu0 0
        %3362 = vmatpush1.bf16.msra.mxu0 0
        %3363 = vmatprep.subr.bf16.mxu0 0
        %3364 = vmatpush1.bf16.msra.mxu0 0
        %3365 = vmatprep.subr.bf16.mxu0 0
        %3366 = vmatpush1.bf16.msra.mxu0 0
        %3367 = vmatprep.subr.bf16.mxu0 0
        %3368 = vmatpush1.bf16.msra.mxu0 0
        %3369 = vmatprep.subr.bf16.mxu0 0
        %3370 = vmatpush1.bf16.msra.mxu0 0
        %3371 = vmatprep.subr.bf16.mxu0 0
        %3372 = vmatpush1.bf16.msra.mxu0 0
        %3373 = vmatprep.mubr.bf16.mxu0 0
        %3374 = vmatmul.mubr.bf16.gmra.mrb[0].mxu0 %v2940
        %v3375 = vpop.f32.mrb[0].mxu0
        %v3376 = vadd.f32 %v1909, %v3375
        %v3377 = vpop.f32.mrb[0].mxu0
        %v3378 = vpop.f32.mrb[0].mxu0
        %v3379 = vpop.f32.mrb[0].mxu0
        %3380 = vdwg.mxu0
        %3381 = vmatprep.subr.bf16.mxu0 0
        %3382 = vmatpush1.bf16.msra.mxu0 %v2214
        %3383 = vmatprep.subr.bf16.mxu0 0
        %3384 = vmatpush1.bf16.msra.mxu0 %v2215
        %3385 = vmatprep.subr.bf16.mxu0 0
        %3386 = vmatpush1.bf16.msra.mxu0 %v2216
        %3387 = vmatprep.subr.bf16.mxu0 0
        %3388 = vmatpush1.bf16.msra.mxu0 %v2217
        %3389 = vmatprep.subr.bf16.mxu0 0
        %3390 = vmatpush1.bf16.msra.mxu0 %v2218
        %3391 = vmatprep.subr.bf16.mxu0 0
        %3392 = vmatpush1.bf16.msra.mxu0 %v2219
        %3393 = vmatprep.subr.bf16.mxu0 0
        %3394 = vmatpush1.bf16.msra.mxu0 %v2220
        %3395 = vmatprep.subr.bf16.mxu0 0
        %3396 = vmatpush1.bf16.msra.mxu0 %v2221
        %3397 = vmatprep.subr.bf16.mxu0 0
        %3398 = vmatpush1.bf16.msra.mxu0 0
        %3399 = vmatprep.subr.bf16.mxu0 0
        %3400 = vmatpush1.bf16.msra.mxu0 0
        %3401 = vmatprep.subr.bf16.mxu0 0
        %3402 = vmatpush1.bf16.msra.mxu0 0
        %3403 = vmatprep.subr.bf16.mxu0 0
        %3404 = vmatpush1.bf16.msra.mxu0 0
        %3405 = vmatprep.subr.bf16.mxu0 0
        %3406 = vmatpush1.bf16.msra.mxu0 0
        %3407 = vmatprep.subr.bf16.mxu0 0
        %3408 = vmatpush1.bf16.msra.mxu0 0
        %3409 = vmatprep.subr.bf16.mxu0 0
        %3410 = vmatpush1.bf16.msra.mxu0 0
        %3411 = vmatprep.subr.bf16.mxu0 0
        %3412 = vmatpush1.bf16.msra.mxu0 0
        %3413 = vmatprep.mubr.bf16.mxu0 0
        %3414 = vmatmul.mubr.bf16.gmra.mrb[0].mxu0 %v2940
        %v3415 = vpop.f32.mrb[0].mxu0
        %v3416 = vadd.f32 %v1913, %v3415
        %v3417 = vpop.f32.mrb[0].mxu0
        %v3418 = vpop.f32.mrb[0].mxu0
        %v3419 = vpop.f32.mrb[0].mxu0
        %3420 = vdwg.mxu0
        %v3421 = vpack.c.bf16 %v2976, %v2976
        %v3422 = vpack.c.bf16 %v3016, %v3016
        %v3423 = vpack.c.bf16 %v3056, %v3056
        %v3424 = vpack.c.bf16 %v3096, %v3096
        %v3425 = vpack.c.bf16 %v3136, %v3136
        %v3426 = vpack.c.bf16 %v3176, %v3176
        %v3427 = vpack.c.bf16 %v3216, %v3216
        %v3428 = vpack.c.bf16 %v3256, %v3256
        %v3430 = vsel %vm2278, %v3421, 0
        %v3433 = vsel %vm2278, %v3425, 0
        %3435 = vmatprep.subr.bf16.mxu0 0
        %3436 = vmatpush1.bf16.xpose.msra.mxu0 %v3433
        %3437 = vmatprep.subr.bf16.mxu0 0
        %3438 = vmatpush1.bf16.xpose.msra.mxu0 0
        %3439 = vmatprep.subr.bf16.mxu0 0
        %3440 = vmatpush1.bf16.xpose.msra.mxu0 0
        %3441 = vmatprep.subr.bf16.mxu0 0
        %3442 = vmatpush1.bf16.xpose.msra.mxu0 0
        %3443 = vmatprep.subr.bf16.mxu0 0
        %3444 = vmatpush1.bf16.xpose.msra.mxu0 0
        %3445 = vmatprep.subr.bf16.mxu0 0
        %3446 = vmatpush1.bf16.xpose.msra.mxu0 0
        %3447 = vmatprep.subr.bf16.mxu0 0
        %3448 = vmatpush1.bf16.xpose.msra.mxu0 0
        %3449 = vmatprep.subr.bf16.mxu0 0
        %3450 = vmatpush1.bf16.xpose.msra.mxu0 0
        %3451 = vmatprep.subr.bf16.mxu0 0
        %3452 = vmatpush1.bf16.xpose.msra.mxu0 0
        %3453 = vmatprep.subr.bf16.mxu0 0
        %3454 = vmatpush1.bf16.xpose.msra.mxu0 0
        %3455 = vmatprep.subr.bf16.mxu0 0
        %3456 = vmatpush1.bf16.xpose.msra.mxu0 0
        %3457 = vmatprep.subr.bf16.mxu0 0
        %3458 = vmatpush1.bf16.xpose.msra.mxu0 0
        %3459 = vmatprep.subr.bf16.mxu0 0
        %3460 = vmatpush1.bf16.xpose.msra.mxu0 0
        %3461 = vmatprep.subr.bf16.mxu0 0
        %3462 = vmatpush1.bf16.xpose.msra.mxu0 0
        %3463 = vmatprep.subr.bf16.mxu0 0
        %3464 = vmatpush1.bf16.xpose.msra.mxu0 0
        %3465 = vmatprep.subr.bf16.mxu0 0
        %3466 = vmatpush1.bf16.xpose.msra.mxu0 0
        %3467 = vmatprep.mubr.bf16.mxu0 0
        %3468 = vmatmul.mubr.bf16.gmra.mrb[0].mxu0 %v3430
        %v3469 = vpop.f32.mrb[0].mxu0
        %v3470 = vadd.f32 0.0, %v3469
        %v3471 = vpop.f32.mrb[0].mxu0
        %v3472 = vpop.f32.mrb[0].mxu0
        %v3473 = vpop.f32.mrb[0].mxu0
        %3474 = vdwg.mxu0
        %v3476 = vsel %vm2278, %v3422, 0
        %v3479 = vsel %vm2278, %v3426, 0
        %3481 = vmatprep.subr.bf16.mxu0 0
        %3482 = vmatpush1.bf16.xpose.msra.mxu0 %v3479
        %3483 = vmatprep.subr.bf16.mxu0 0
        %3484 = vmatpush1.bf16.xpose.msra.mxu0 0
        %3485 = vmatprep.subr.bf16.mxu0 0
        %3486 = vmatpush1.bf16.xpose.msra.mxu0 0
        %3487 = vmatprep.subr.bf16.mxu0 0
        %3488 = vmatpush1.bf16.xpose.msra.mxu0 0
        %3489 = vmatprep.subr.bf16.mxu0 0
        %3490 = vmatpush1.bf16.xpose.msra.mxu0 0
        %3491 = vmatprep.subr.bf16.mxu0 0
        %3492 = vmatpush1.bf16.xpose.msra.mxu0 0
        %3493 = vmatprep.subr.bf16.mxu0 0
        %3494 = vmatpush1.bf16.xpose.msra.mxu0 0
        %3495 = vmatprep.subr.bf16.mxu0 0
        %3496 = vmatpush1.bf16.xpose.msra.mxu0 0
        %3497 = vmatprep.subr.bf16.mxu0 0
        %3498 = vmatpush1.bf16.xpose.msra.mxu0 0
        %3499 = vmatprep.subr.bf16.mxu0 0
        %3500 = vmatpush1.bf16.xpose.msra.mxu0 0
        %3501 = vmatprep.subr.bf16.mxu0 0
        %3502 = vmatpush1.bf16.xpose.msra.mxu0 0
        %3503 = vmatprep.subr.bf16.mxu0 0
        %3504 = vmatpush1.bf16.xpose.msra.mxu0 0
        %3505 = vmatprep.subr.bf16.mxu0 0
        %3506 = vmatpush1.bf16.xpose.msra.mxu0 0
        %3507 = vmatprep.subr.bf16.mxu0 0
        %3508 = vmatpush1.bf16.xpose.msra.mxu0 0
        %3509 = vmatprep.subr.bf16.mxu0 0
        %3510 = vmatpush1.bf16.xpose.msra.mxu0 0
        %3511 = vmatprep.subr.bf16.mxu0 0
        %3512 = vmatpush1.bf16.xpose.msra.mxu0 0
        %3513 = vmatprep.mubr.bf16.mxu0 0
        %3514 = vmatmul.mubr.bf16.gmra.mrb[0].mxu0 %v3476
        %v3515 = vpop.f32.mrb[0].mxu0
        %v3516 = vadd.f32 0.0, %v3515
        %v3517 = vpop.f32.mrb[0].mxu0
        %v3518 = vpop.f32.mrb[0].mxu0
        %v3519 = vpop.f32.mrb[0].mxu0
        %3520 = vdwg.mxu0
        %v3522 = vsel %vm2278, %v3423, 0
        %v3525 = vsel %vm2278, %v3427, 0
        %3527 = vmatprep.subr.bf16.mxu0 0
        %3528 = vmatpush1.bf16.xpose.msra.mxu0 %v3525
        %3529 = vmatprep.subr.bf16.mxu0 0
        %3530 = vmatpush1.bf16.xpose.msra.mxu0 0
        %3531 = vmatprep.subr.bf16.mxu0 0
        %3532 = vmatpush1.bf16.xpose.msra.mxu0 0
        %3533 = vmatprep.subr.bf16.mxu0 0
        %3534 = vmatpush1.bf16.xpose.msra.mxu0 0
        %3535 = vmatprep.subr.bf16.mxu0 0
        %3536 = vmatpush1.bf16.xpose.msra.mxu0 0
        %3537 = vmatprep.subr.bf16.mxu0 0
        %3538 = vmatpush1.bf16.xpose.msra.mxu0 0
        %3539 = vmatprep.subr.bf16.mxu0 0
        %3540 = vmatpush1.bf16.xpose.msra.mxu0 0
        %3541 = vmatprep.subr.bf16.mxu0 0
        %3542 = vmatpush1.bf16.xpose.msra.mxu0 0
        %3543 = vmatprep.subr.bf16.mxu0 0
        %3544 = vmatpush1.bf16.xpose.msra.mxu0 0
        %3545 = vmatprep.subr.bf16.mxu0 0
        %3546 = vmatpush1.bf16.xpose.msra.mxu0 0
        %3547 = vmatprep.subr.bf16.mxu0 0
        %3548 = vmatpush1.bf16.xpose.msra.mxu0 0
        %3549 = vmatprep.subr.bf16.mxu0 0
        %3550 = vmatpush1.bf16.xpose.msra.mxu0 0
        %3551 = vmatprep.subr.bf16.mxu0 0
        %3552 = vmatpush1.bf16.xpose.msra.mxu0 0
        %3553 = vmatprep.subr.bf16.mxu0 0
        %3554 = vmatpush1.bf16.xpose.msra.mxu0 0
        %3555 = vmatprep.subr.bf16.mxu0 0
        %3556 = vmatpush1.bf16.xpose.msra.mxu0 0
        %3557 = vmatprep.subr.bf16.mxu0 0
        %3558 = vmatpush1.bf16.xpose.msra.mxu0 0
        %3559 = vmatprep.mubr.bf16.mxu0 0
        %3560 = vmatmul.mubr.bf16.gmra.mrb[0].mxu0 %v3522
        %v3561 = vpop.f32.mrb[0].mxu0
        %v3562 = vadd.f32 0.0, %v3561
        %v3563 = vpop.f32.mrb[0].mxu0
        %v3564 = vpop.f32.mrb[0].mxu0
        %v3565 = vpop.f32.mrb[0].mxu0
        %3566 = vdwg.mxu0
        %v3568 = vsel %vm2278, %v3424, 0
        %v3571 = vsel %vm2278, %v3428, 0
        %3573 = vmatprep.subr.bf16.mxu0 0
        %3574 = vmatpush1.bf16.xpose.msra.mxu0 %v3571
        %3575 = vmatprep.subr.bf16.mxu0 0
        %3576 = vmatpush1.bf16.xpose.msra.mxu0 0
        %3577 = vmatprep.subr.bf16.mxu0 0
        %3578 = vmatpush1.bf16.xpose.msra.mxu0 0
        %3579 = vmatprep.subr.bf16.mxu0 0
        %3580 = vmatpush1.bf16.xpose.msra.mxu0 0
        %3581 = vmatprep.subr.bf16.mxu0 0
        %3582 = vmatpush1.bf16.xpose.msra.mxu0 0
        %3583 = vmatprep.subr.bf16.mxu0 0
        %3584 = vmatpush1.bf16.xpose.msra.mxu0 0
        %3585 = vmatprep.subr.bf16.mxu0 0
        %3586 = vmatpush1.bf16.xpose.msra.mxu0 0
        %3587 = vmatprep.subr.bf16.mxu0 0
        %3588 = vmatpush1.bf16.xpose.msra.mxu0 0
        %3589 = vmatprep.subr.bf16.mxu0 0
        %3590 = vmatpush1.bf16.xpose.msra.mxu0 0
        %3591 = vmatprep.subr.bf16.mxu0 0
        %3592 = vmatpush1.bf16.xpose.msra.mxu0 0
        %3593 = vmatprep.subr.bf16.mxu0 0
        %3594 = vmatpush1.bf16.xpose.msra.mxu0 0
        %3595 = vmatprep.subr.bf16.mxu0 0
        %3596 = vmatpush1.bf16.xpose.msra.mxu0 0
        %3597 = vmatprep.subr.bf16.mxu0 0
        %3598 = vmatpush1.bf16.xpose.msra.mxu0 0
        %3599 = vmatprep.subr.bf16.mxu0 0
        %3600 = vmatpush1.bf16.xpose.msra.mxu0 0
        %3601 = vmatprep.subr.bf16.mxu0 0
        %3602 = vmatpush1.bf16.xpose.msra.mxu0 0
        %3603 = vmatprep.subr.bf16.mxu0 0
        %3604 = vmatpush1.bf16.xpose.msra.mxu0 0
        %3605 = vmatprep.mubr.bf16.mxu0 0
        %3606 = vmatmul.mubr.bf16.gmra.mrb[0].mxu0 %v3568
        %v3607 = vpop.f32.mrb[0].mxu0
        %v3608 = vadd.f32 0.0, %v3607
        %v3609 = vpop.f32.mrb[0].mxu0
        %v3610 = vpop.f32.mrb[0].mxu0
        %v3611 = vpop.f32.mrb[0].mxu0
        %3612 = vdwg.mxu0
        %v3613 = vmul.f32 %v3470, 0.17677669
        %v3614 = vmul.f32 %v3516, 0.17677669
        %v3615 = vmul.f32 %v3562, 0.17677669
        %v3616 = vmul.f32 %v3608, 0.17677669
        %v3617 = vlaneseq
        %v3618 = vshrl.u32 %v3617, 7
        %v3619 = vsub.s32 1, %v3618
        %v3620 = vrot.slane %v920, %v3619
        %v3621 = vadd.f32 %v3613, %v3620
        %v3622 = vadd.f32 %v3614, %v3620
        %v3623 = vadd.f32 %v3615, %v3620
        %v3624 = vadd.f32 %v3616, %v3620
        %v3625 = vsel %vm2475, %v3621, -inf
        %3626 = vmax.xlane.f32.xlu0 %v3625
        %v3627 = vpop.xlane.xlu0 %3626
        %v3628 = vsel %vm2475, %v3622, -inf
        %3629 = vmax.xlane.f32.xlu0 %v3628
        %v3630 = vpop.xlane.xlu0 %3629
        %v3631 = vsel %vm2475, %v3623, -inf
        %3632 = vmax.xlane.f32.xlu0 %v3631
        %v3633 = vpop.xlane.xlu0 %3632
        %v3634 = vsel %vm2475, %v3624, -inf
        %3635 = vmax.xlane.f32.xlu0 %v3634
        %v3636 = vpop.xlane.xlu0 %3635
        %v3637 = vsub.f32 %v3621, %v3627
        %v3638 = vsub.f32 %v3622, %v3630
        %v3639 = vsub.f32 %v3623, %v3633
        %v3640 = vsub.f32 %v3624, %v3636
        %v3641 = vmul.f32 %v3637, 1.442695
        %v3642 = vpow.pop %v3641
        %v3643 = vmul.f32 %v3638, 1.442695
        %v3644 = vpow.pop %v3643
        %v3645 = vmul.f32 %v3639, 1.442695
        %v3646 = vpow.pop %v3645
        %v3647 = vmul.f32 %v3640, 1.442695
        %v3648 = vpow.pop %v3647
        %v3649 = vsel %vm2475, %v3642, 0.0
        %3650 = vadd.xlane.f32.xlu0 %v3649
        %v3651 = vpop.xlane.xlu0 %3650
        %v3652 = vsel %vm2475, %v3644, 0.0
        %3653 = vadd.xlane.f32.xlu0 %v3652
        %v3654 = vpop.xlane.xlu0 %3653
        %v3655 = vsel %vm2475, %v3646, 0.0
        %3656 = vadd.xlane.f32.xlu0 %v3655
        %v3657 = vpop.xlane.xlu0 %3656
        %v3658 = vsel %vm2475, %v3648, 0.0
        %3659 = vadd.xlane.f32.xlu0 %v3658
        %v3660 = vpop.xlane.xlu0 %3659
        %v3661 = vrcp.pop %v3651
        %v3662 = vrcp.pop %v3654
        %v3663 = vrcp.pop %v3657
        %v3664 = vrcp.pop %v3660
        %v3665 = vmul.f32 %v3642, %v3661
        %v3666 = vmul.f32 %v3644, %v3662
        %v3667 = vmul.f32 %v3646, %v3663
        %v3668 = vmul.f32 %v3648, %v3664
        %v3669 = vpack.c.bf16 %v3665, %v3665
        %v3670 = vpack.c.bf16 %v3666, %v3666
        %v3671 = vpack.c.bf16 %v3667, %v3667
        %v3672 = vpack.c.bf16 %v3668, %v3668
        %v3673 = vpack.c.bf16 %v3296, %v3296
        %v3674 = vpack.c.bf16 %v3336, %v3336
        %v3675 = vpack.c.bf16 %v3376, %v3376
        %v3676 = vpack.c.bf16 %v3416, %v3416
        %v3678 = vsel %vm2475, %v3669, 0
        %v3681 = vsel %vm2531, %v3673, 0
        %3683 = vmatprep.subr.bf16.mxu0 0
        %3684 = vmatpush1.bf16.msra.mxu0 %v3681
        %3685 = vmatprep.subr.bf16.mxu0 0
        %3686 = vmatpush1.bf16.msra.mxu0 0
        %3687 = vmatprep.subr.bf16.mxu0 0
        %3688 = vmatpush1.bf16.msra.mxu0 0
        %3689 = vmatprep.subr.bf16.mxu0 0
        %3690 = vmatpush1.bf16.msra.mxu0 0
        %3691 = vmatprep.subr.bf16.mxu0 0
        %3692 = vmatpush1.bf16.msra.mxu0 0
        %3693 = vmatprep.subr.bf16.mxu0 0
        %3694 = vmatpush1.bf16.msra.mxu0 0
        %3695 = vmatprep.subr.bf16.mxu0 0
        %3696 = vmatpush1.bf16.msra.mxu0 0
        %3697 = vmatprep.subr.bf16.mxu0 0
        %3698 = vmatpush1.bf16.msra.mxu0 0
        %3699 = vmatprep.subr.bf16.mxu0 0
        %3700 = vmatpush1.bf16.msra.mxu0 0
        %3701 = vmatprep.subr.bf16.mxu0 0
        %3702 = vmatpush1.bf16.msra.mxu0 0
        %3703 = vmatprep.subr.bf16.mxu0 0
        %3704 = vmatpush1.bf16.msra.mxu0 0
        %3705 = vmatprep.subr.bf16.mxu0 0
        %3706 = vmatpush1.bf16.msra.mxu0 0
        %3707 = vmatprep.subr.bf16.mxu0 0
        %3708 = vmatpush1.bf16.msra.mxu0 0
        %3709 = vmatprep.subr.bf16.mxu0 0
        %3710 = vmatpush1.bf16.msra.mxu0 0
        %3711 = vmatprep.subr.bf16.mxu0 0
        %3712 = vmatpush1.bf16.msra.mxu0 0
        %3713 = vmatprep.subr.bf16.mxu0 0
        %3714 = vmatpush1.bf16.msra.mxu0 0
        %3715 = vmatprep.mubr.bf16.mxu0 0
        %3716 = vmatmul.mubr.bf16.gmra.mrb[0].mxu0 %v3678
        %v3717 = vpop.f32.mrb[0].mxu0
        %v3718 = vadd.f32 0.0, %v3717
        %v3719 = vpop.f32.mrb[0].mxu0
        %v3720 = vpop.f32.mrb[0].mxu0
        %v3721 = vpop.f32.mrb[0].mxu0
        %3722 = vdwg.mxu0
        %v3724 = vsel %vm2475, %v3670, 0
        %v3727 = vsel %vm2531, %v3674, 0
        %3729 = vmatprep.subr.bf16.mxu0 0
        %3730 = vmatpush1.bf16.msra.mxu0 %v3727
        %3731 = vmatprep.subr.bf16.mxu0 0
        %3732 = vmatpush1.bf16.msra.mxu0 0
        %3733 = vmatprep.subr.bf16.mxu0 0
        %3734 = vmatpush1.bf16.msra.mxu0 0
        %3735 = vmatprep.subr.bf16.mxu0 0
        %3736 = vmatpush1.bf16.msra.mxu0 0
        %3737 = vmatprep.subr.bf16.mxu0 0
        %3738 = vmatpush1.bf16.msra.mxu0 0
        %3739 = vmatprep.subr.bf16.mxu0 0
        %3740 = vmatpush1.bf16.msra.mxu0 0
        %3741 = vmatprep.subr.bf16.mxu0 0
        %3742 = vmatpush1.bf16.msra.mxu0 0
        %3743 = vmatprep.subr.bf16.mxu0 0
        %3744 = vmatpush1.bf16.msra.mxu0 0
        %3745 = vmatprep.subr.bf16.mxu0 0
        %3746 = vmatpush1.bf16.msra.mxu0 0
        %3747 = vmatprep.subr.bf16.mxu0 0
        %3748 = vmatpush1.bf16.msra.mxu0 0
        %3749 = vmatprep.subr.bf16.mxu0 0
        %3750 = vmatpush1.bf16.msra.mxu0 0
        %3751 = vmatprep.subr.bf16.mxu0 0
        %3752 = vmatpush1.bf16.msra.mxu0 0
        %3753 = vmatprep.subr.bf16.mxu0 0
        %3754 = vmatpush1.bf16.msra.mxu0 0
        %3755 = vmatprep.subr.bf16.mxu0 0
        %3756 = vmatpush1.bf16.msra.mxu0 0
        %3757 = vmatprep.subr.bf16.mxu0 0
        %3758 = vmatpush1.bf16.msra.mxu0 0
        %3759 = vmatprep.subr.bf16.mxu0 0
        %3760 = vmatpush1.bf16.msra.mxu0 0
        %3761 = vmatprep.mubr.bf16.mxu0 0
        %3762 = vmatmul.mubr.bf16.gmra.mrb[0].mxu0 %v3724
        %v3763 = vpop.f32.mrb[0].mxu0
        %v3764 = vadd.f32 0.0, %v3763
        %v3765 = vpop.f32.mrb[0].mxu0
        %v3766 = vpop.f32.mrb[0].mxu0
        %v3767 = vpop.f32.mrb[0].mxu0
        %3768 = vdwg.mxu0
        %v3770 = vsel %vm2475, %v3671, 0
        %v3773 = vsel %vm2531, %v3675, 0
        %3775 = vmatprep.subr.bf16.mxu0 0
        %3776 = vmatpush1.bf16.msra.mxu0 %v3773
        %3777 = vmatprep.subr.bf16.mxu0 0
        %3778 = vmatpush1.bf16.msra.mxu0 0
        %3779 = vmatprep.subr.bf16.mxu0 0
        %3780 = vmatpush1.bf16.msra.mxu0 0
        %3781 = vmatprep.subr.bf16.mxu0 0
        %3782 = vmatpush1.bf16.msra.mxu0 0
        %3783 = vmatprep.subr.bf16.mxu0 0
        %3784 = vmatpush1.bf16.msra.mxu0 0
        %3785 = vmatprep.subr.bf16.mxu0 0
        %3786 = vmatpush1.bf16.msra.mxu0 0
        %3787 = vmatprep.subr.bf16.mxu0 0
        %3788 = vmatpush1.bf16.msra.mxu0 0
        %3789 = vmatprep.subr.bf16.mxu0 0
        %3790 = vmatpush1.bf16.msra.mxu0 0
        %3791 = vmatprep.subr.bf16.mxu0 0
        %3792 = vmatpush1.bf16.msra.mxu0 0
        %3793 = vmatprep.subr.bf16.mxu0 0
        %3794 = vmatpush1.bf16.msra.mxu0 0
        %3795 = vmatprep.subr.bf16.mxu0 0
        %3796 = vmatpush1.bf16.msra.mxu0 0
        %3797 = vmatprep.subr.bf16.mxu0 0
        %3798 = vmatpush1.bf16.msra.mxu0 0
        %3799 = vmatprep.subr.bf16.mxu0 0
        %3800 = vmatpush1.bf16.msra.mxu0 0
        %3801 = vmatprep.subr.bf16.mxu0 0
        %3802 = vmatpush1.bf16.msra.mxu0 0
        %3803 = vmatprep.subr.bf16.mxu0 0
        %3804 = vmatpush1.bf16.msra.mxu0 0
        %3805 = vmatprep.subr.bf16.mxu0 0
        %3806 = vmatpush1.bf16.msra.mxu0 0
        %3807 = vmatprep.mubr.bf16.mxu0 0
        %3808 = vmatmul.mubr.bf16.gmra.mrb[0].mxu0 %v3770
        %v3809 = vpop.f32.mrb[0].mxu0
        %v3810 = vadd.f32 0.0, %v3809
        %v3811 = vpop.f32.mrb[0].mxu0
        %v3812 = vpop.f32.mrb[0].mxu0
        %v3813 = vpop.f32.mrb[0].mxu0
        %3814 = vdwg.mxu0
        %v3816 = vsel %vm2475, %v3672, 0
        %v3819 = vsel %vm2531, %v3676, 0
        %3821 = vmatprep.subr.bf16.mxu0 0
        %3822 = vmatpush1.bf16.msra.mxu0 %v3819
        %3823 = vmatprep.subr.bf16.mxu0 0
        %3824 = vmatpush1.bf16.msra.mxu0 0
        %3825 = vmatprep.subr.bf16.mxu0 0
        %3826 = vmatpush1.bf16.msra.mxu0 0
        %3827 = vmatprep.subr.bf16.mxu0 0
        %3828 = vmatpush1.bf16.msra.mxu0 0
        %3829 = vmatprep.subr.bf16.mxu0 0
        %3830 = vmatpush1.bf16.msra.mxu0 0
        %3831 = vmatprep.subr.bf16.mxu0 0
        %3832 = vmatpush1.bf16.msra.mxu0 0
        %3833 = vmatprep.subr.bf16.mxu0 0
        %3834 = vmatpush1.bf16.msra.mxu0 0
        %3835 = vmatprep.subr.bf16.mxu0 0
        %3836 = vmatpush1.bf16.msra.mxu0 0
        %3837 = vmatprep.subr.bf16.mxu0 0
        %3838 = vmatpush1.bf16.msra.mxu0 0
        %3839 = vmatprep.subr.bf16.mxu0 0
        %3840 = vmatpush1.bf16.msra.mxu0 0
        %3841 = vmatprep.subr.bf16.mxu0 0
        %3842 = vmatpush1.bf16.msra.mxu0 0
        %3843 = vmatprep.subr.bf16.mxu0 0
        %3844 = vmatpush1.bf16.msra.mxu0 0
        %3845 = vmatprep.subr.bf16.mxu0 0
        %3846 = vmatpush1.bf16.msra.mxu0 0
        %3847 = vmatprep.subr.bf16.mxu0 0
        %3848 = vmatpush1.bf16.msra.mxu0 0
        %3849 = vmatprep.subr.bf16.mxu0 0
        %3850 = vmatpush1.bf16.msra.mxu0 0
        %3851 = vmatprep.subr.bf16.mxu0 0
        %3852 = vmatpush1.bf16.msra.mxu0 0
        %3853 = vmatprep.mubr.bf16.mxu0 0
        %3854 = vmatmul.mubr.bf16.gmra.mrb[0].mxu0 %v3816
        %v3855 = vpop.f32.mrb[0].mxu0
        %v3856 = vadd.f32 0.0, %v3855
        %v3857 = vpop.f32.mrb[0].mxu0
        %v3858 = vpop.f32.mrb[0].mxu0
        %v3859 = vpop.f32.mrb[0].mxu0
        %3860 = vdwg.mxu0
        %v3861 = vpack.c.bf16 %v3718, %v3718
        %v3862 = vpack.c.bf16 %v3764, %v3764
        %v3863 = vpack.c.bf16 %v3810, %v3810
        %v3864 = vpack.c.bf16 %v3856, %v3856
        %v3866 = vsel %vm2278, %v3861, 0
        %3868 = vmatprep.subr.bf16.mxu0 0
        %3869 = vmatpush1.bf16.msra.mxu0 %v2725
        %3870 = vmatprep.subr.bf16.mxu0 0
        %3871 = vmatpush1.bf16.msra.mxu0 %v2726
        %3872 = vmatprep.subr.bf16.mxu0 0
        %3873 = vmatpush1.bf16.msra.mxu0 0
        %3874 = vmatprep.subr.bf16.mxu0 0
        %3875 = vmatpush1.bf16.msra.mxu0 0
        %3876 = vmatprep.subr.bf16.mxu0 0
        %3877 = vmatpush1.bf16.msra.mxu0 0
        %3878 = vmatprep.subr.bf16.mxu0 0
        %3879 = vmatpush1.bf16.msra.mxu0 0
        %3880 = vmatprep.subr.bf16.mxu0 0
        %3881 = vmatpush1.bf16.msra.mxu0 0
        %3882 = vmatprep.subr.bf16.mxu0 0
        %3883 = vmatpush1.bf16.msra.mxu0 0
        %3884 = vmatprep.subr.bf16.mxu0 0
        %3885 = vmatpush1.bf16.msra.mxu0 0
        %3886 = vmatprep.subr.bf16.mxu0 0
        %3887 = vmatpush1.bf16.msra.mxu0 0
        %3888 = vmatprep.subr.bf16.mxu0 0
        %3889 = vmatpush1.bf16.msra.mxu0 0
        %3890 = vmatprep.subr.bf16.mxu0 0
        %3891 = vmatpush1.bf16.msra.mxu0 0
        %3892 = vmatprep.subr.bf16.mxu0 0
        %3893 = vmatpush1.bf16.msra.mxu0 0
        %3894 = vmatprep.subr.bf16.mxu0 0
        %3895 = vmatpush1.bf16.msra.mxu0 0
        %3896 = vmatprep.subr.bf16.mxu0 0
        %3897 = vmatpush1.bf16.msra.mxu0 0
        %3898 = vmatprep.subr.bf16.mxu0 0
        %3899 = vmatpush1.bf16.msra.mxu0 0
        %3900 = vmatprep.mubr.bf16.mxu0 0
        %3901 = vmatmul.mubr.bf16.gmra.mrb[0].mxu0 %v3866
        %v3902 = vpop.f32.mrb[0].mxu0
        %v3903 = vadd.f32 0.0, %v3902
        %v3904 = vpop.f32.mrb[0].mxu0
        %v3905 = vpop.f32.mrb[0].mxu0
        %v3906 = vpop.f32.mrb[0].mxu0
        %3907 = vdwg.mxu0
        %v3909 = vsel %vm2278, %v3862, 0
        %3911 = vmatprep.subr.bf16.mxu0 0
        %3912 = vmatpush1.bf16.msra.mxu0 %v2780
        %3913 = vmatprep.subr.bf16.mxu0 0
        %3914 = vmatpush1.bf16.msra.mxu0 %v2781
        %3915 = vmatprep.subr.bf16.mxu0 0
        %3916 = vmatpush1.bf16.msra.mxu0 0
        %3917 = vmatprep.subr.bf16.mxu0 0
        %3918 = vmatpush1.bf16.msra.mxu0 0
        %3919 = vmatprep.subr.bf16.mxu0 0
        %3920 = vmatpush1.bf16.msra.mxu0 0
        %3921 = vmatprep.subr.bf16.mxu0 0
        %3922 = vmatpush1.bf16.msra.mxu0 0
        %3923 = vmatprep.subr.bf16.mxu0 0
        %3924 = vmatpush1.bf16.msra.mxu0 0
        %3925 = vmatprep.subr.bf16.mxu0 0
        %3926 = vmatpush1.bf16.msra.mxu0 0
        %3927 = vmatprep.subr.bf16.mxu0 0
        %3928 = vmatpush1.bf16.msra.mxu0 0
        %3929 = vmatprep.subr.bf16.mxu0 0
        %3930 = vmatpush1.bf16.msra.mxu0 0
        %3931 = vmatprep.subr.bf16.mxu0 0
        %3932 = vmatpush1.bf16.msra.mxu0 0
        %3933 = vmatprep.subr.bf16.mxu0 0
        %3934 = vmatpush1.bf16.msra.mxu0 0
        %3935 = vmatprep.subr.bf16.mxu0 0
        %3936 = vmatpush1.bf16.msra.mxu0 0
        %3937 = vmatprep.subr.bf16.mxu0 0
        %3938 = vmatpush1.bf16.msra.mxu0 0
        %3939 = vmatprep.subr.bf16.mxu0 0
        %3940 = vmatpush1.bf16.msra.mxu0 0
        %3941 = vmatprep.subr.bf16.mxu0 0
        %3942 = vmatpush1.bf16.msra.mxu0 0
        %3943 = vmatprep.mubr.bf16.mxu0 0
        %3944 = vmatmul.mubr.bf16.gmra.mrb[0].mxu0 %v3909
        %v3945 = vpop.f32.mrb[0].mxu0
        %v3946 = vadd.f32 0.0, %v3945
        %v3947 = vpop.f32.mrb[0].mxu0
        %v3948 = vpop.f32.mrb[0].mxu0
        %v3949 = vpop.f32.mrb[0].mxu0
        %3950 = vdwg.mxu0
        %v3952 = vsel %vm2278, %v3863, 0
        %3954 = vmatprep.subr.bf16.mxu0 0
        %3955 = vmatpush1.bf16.msra.mxu0 %v2835
        %3956 = vmatprep.subr.bf16.mxu0 0
        %3957 = vmatpush1.bf16.msra.mxu0 %v2836
        %3958 = vmatprep.subr.bf16.mxu0 0
        %3959 = vmatpush1.bf16.msra.mxu0 0
        %3960 = vmatprep.subr.bf16.mxu0 0
        %3961 = vmatpush1.bf16.msra.mxu0 0
        %3962 = vmatprep.subr.bf16.mxu0 0
        %3963 = vmatpush1.bf16.msra.mxu0 0
        %3964 = vmatprep.subr.bf16.mxu0 0
        %3965 = vmatpush1.bf16.msra.mxu0 0
        %3966 = vmatprep.subr.bf16.mxu0 0
        %3967 = vmatpush1.bf16.msra.mxu0 0
        %3968 = vmatprep.subr.bf16.mxu0 0
        %3969 = vmatpush1.bf16.msra.mxu0 0
        %3970 = vmatprep.subr.bf16.mxu0 0
        %3971 = vmatpush1.bf16.msra.mxu0 0
        %3972 = vmatprep.subr.bf16.mxu0 0
        %3973 = vmatpush1.bf16.msra.mxu0 0
        %3974 = vmatprep.subr.bf16.mxu0 0
        %3975 = vmatpush1.bf16.msra.mxu0 0
        %3976 = vmatprep.subr.bf16.mxu0 0
        %3977 = vmatpush1.bf16.msra.mxu0 0
        %3978 = vmatprep.subr.bf16.mxu0 0
        %3979 = vmatpush1.bf16.msra.mxu0 0
        %3980 = vmatprep.subr.bf16.mxu0 0
        %3981 = vmatpush1.bf16.msra.mxu0 0
        %3982 = vmatprep.subr.bf16.mxu0 0
        %3983 = vmatpush1.bf16.msra.mxu0 0
        %3984 = vmatprep.subr.bf16.mxu0 0
        %3985 = vmatpush1.bf16.msra.mxu0 0
        %3986 = vmatprep.mubr.bf16.mxu0 0
        %3987 = vmatmul.mubr.bf16.gmra.mrb[0].mxu0 %v3952
        %v3988 = vpop.f32.mrb[0].mxu0
        %v3989 = vadd.f32 0.0, %v3988
        %v3990 = vpop.f32.mrb[0].mxu0
        %v3991 = vpop.f32.mrb[0].mxu0
        %v3992 = vpop.f32.mrb[0].mxu0
        %3993 = vdwg.mxu0
        %v3995 = vsel %vm2278, %v3864, 0
        %3997 = vmatprep.subr.bf16.mxu0 0
        %3998 = vmatpush1.bf16.msra.mxu0 %v2890
        %3999 = vmatprep.subr.bf16.mxu0 0
        %4000 = vmatpush1.bf16.msra.mxu0 %v2891
        %4001 = vmatprep.subr.bf16.mxu0 0
        %4002 = vmatpush1.bf16.msra.mxu0 0
        %4003 = vmatprep.subr.bf16.mxu0 0
        %4004 = vmatpush1.bf16.msra.mxu0 0
        %4005 = vmatprep.subr.bf16.mxu0 0
        %4006 = vmatpush1.bf16.msra.mxu0 0
        %4007 = vmatprep.subr.bf16.mxu0 0
        %4008 = vmatpush1.bf16.msra.mxu0 0
        %4009 = vmatprep.subr.bf16.mxu0 0
        %4010 = vmatpush1.bf16.msra.mxu0 0
        %4011 = vmatprep.subr.bf16.mxu0 0
        %4012 = vmatpush1.bf16.msra.mxu0 0
        %4013 = vmatprep.subr.bf16.mxu0 0
        %4014 = vmatpush1.bf16.msra.mxu0 0
        %4015 = vmatprep.subr.bf16.mxu0 0
        %4016 = vmatpush1.bf16.msra.mxu0 0
        %4017 = vmatprep.subr.bf16.mxu0 0
        %4018 = vmatpush1.bf16.msra.mxu0 0
        %4019 = vmatprep.subr.bf16.mxu0 0
        %4020 = vmatpush1.bf16.msra.mxu0 0
        %4021 = vmatprep.subr.bf16.mxu0 0
        %4022 = vmatpush1.bf16.msra.mxu0 0
        %4023 = vmatprep.subr.bf16.mxu0 0
        %4024 = vmatpush1.bf16.msra.mxu0 0
        %4025 = vmatprep.subr.bf16.mxu0 0
        %4026 = vmatpush1.bf16.msra.mxu0 0
        %4027 = vmatprep.subr.bf16.mxu0 0
        %4028 = vmatpush1.bf16.msra.mxu0 0
        %4029 = vmatprep.mubr.bf16.mxu0 0
        %4030 = vmatmul.mubr.bf16.gmra.mrb[0].mxu0 %v3995
        %v4031 = vpop.f32.mrb[0].mxu0
        %v4032 = vadd.f32 0.0, %v4031
        %v4033 = vpop.f32.mrb[0].mxu0
        %v4034 = vpop.f32.mrb[0].mxu0
        %v4035 = vpop.f32.mrb[0].mxu0
        %4036 = vdwg.mxu0
        %v4037 = vadd.f32 %v3903, %v3946
        %v4038 = vadd.f32 %v4037, %v3989
        %v4039 = vadd.f32 %v4038, %v4032
        %v4040 = vld [vmem:[%s838] sm:$0x1]
        %v4042 = vlaneseq
        %v4043 = vshrl.u32 %v4042, 7
        %v4044 = vsub.s32 0, %v4043
        %v4045 = vrot.slane %v4040, %v4044
        %v4047 = vadd.f32 %v2939, %v4045
        %v4048 = vadd.f32 %v4039, %v4045
        %v4049 = vadd.f32 %v918, %v4047
        %v4050 = vadd.f32 %v919, %v4048
        %v4051 = vld [vmem:[%s841] sm:$0x1]
        %v4052 = vld [vmem:[%s844] sm:$0x1]
        %4053 = vadd.xlane.f32.xlu0 %v4049
        %v4054 = vpop.xlane.xlu0 %4053
        %4055 = vadd.xlane.f32.xlu0 %v4050
        %v4056 = vpop.xlane.xlu0 %4055
        %v4057 = vrcp.pop 128.0
        %v4058 = vmul.f32 %v4054, %v4057
        %v4059 = vmul.f32 %v4056, %v4057
        %v4060 = vsub.f32 %v4049, %v4058
        %v4061 = vsub.f32 %v4050, %v4059
        %v4062 = vmul.f32 %v4060, %v4060
        %v4063 = vmul.f32 %v4061, %v4061
        %4064 = vadd.xlane.f32.xlu0 %v4062
        %v4065 = vpop.xlane.xlu0 %4064
        %4066 = vadd.xlane.f32.xlu0 %v4063
        %v4067 = vpop.xlane.xlu0 %4066
        %v4068 = vmul.f32 %v4065, %v4057
        %v4069 = vmul.f32 %v4067, %v4057
        %v4070 = vadd.f32 %v4068, 1e-12
        %v4071 = vadd.f32 %v4069, 1e-12
        %v4072 = vrsqrt.pop %v4070
        %v4073 = vrsqrt.pop %v4071
        %v4074 = vmul.f32 %v4060, %v4072
        %v4075 = vmul.f32 %v4061, %v4073
        %v4077 = vlaneseq
        %v4078 = vshrl.u32 %v4077, 7
        %v4079 = vsub.s32 0, %v4078
        %v4080 = vrot.slane %v4051, %v4079
        %v4082 = vmul.f32 %v4074, %v4080
        %v4083 = vmul.f32 %v4075, %v4080
        %v4085 = vlaneseq
        %v4086 = vshrl.u32 %v4085, 7
        %v4087 = vsub.s32 0, %v4086
        %v4088 = vrot.slane %v4052, %v4087
        %v4090 = vadd.f32 %v4082, %v4088
        %v4091 = vadd.f32 %v4083, %v4088
        %v4092 = vpack.c.bf16 %v4091, %v4090
        %v4093 = vld [vmem:[%s849] sm:$0xff]
        %v4094 = vld [vmem:[%s849 + $0x8] sm:$0xff]
        %v4095 = vld [vmem:[%s849 + $0x10] sm:$0xff]
        %v4096 = vld [vmem:[%s849 + $0x18] sm:$0xff]
        %v4097 = vld [vmem:[%s849 + $0x20] sm:$0xff]
        %v4098 = vld [vmem:[%s849 + $0x28] sm:$0xff]
        %v4099 = vld [vmem:[%s849 + $0x30] sm:$0xff]
        %v4100 = vld [vmem:[%s849 + $0x38] sm:$0xff]
        %v4101 = vld [vmem:[%s849 + $0x40] sm:$0xff]
        %v4102 = vld [vmem:[%s849 + $0x48] sm:$0xff]
        %v4103 = vld [vmem:[%s849 + $0x50] sm:$0xff]
        %v4104 = vld [vmem:[%s849 + $0x58] sm:$0xff]
        %v4105 = vld [vmem:[%s849 + $0x60] sm:$0xff]
        %v4106 = vld [vmem:[%s849 + $0x68] sm:$0xff]
        %v4107 = vld [vmem:[%s849 + $0x70] sm:$0xff]
        %v4108 = vld [vmem:[%s849 + $0x78] sm:$0xff]
        %v4109 = vld [vmem:[%s849 + $0x80] sm:$0xff]
        %v4110 = vld [vmem:[%s849 + $0x88] sm:$0xff]
        %v4111 = vld [vmem:[%s849 + $0x90] sm:$0xff]
        %v4112 = vld [vmem:[%s849 + $0x98] sm:$0xff]
        %v4113 = vld [vmem:[%s849 + $0xa0] sm:$0xff]
        %v4114 = vld [vmem:[%s849 + $0xa8] sm:$0xff]
        %v4115 = vld [vmem:[%s849 + $0xb0] sm:$0xff]
        %v4116 = vld [vmem:[%s849 + $0xb8] sm:$0xff]
        %v4117 = vld [vmem:[%s849 + $0xc0] sm:$0xff]
        %v4118 = vld [vmem:[%s849 + $0xc8] sm:$0xff]
        %v4119 = vld [vmem:[%s849 + $0xd0] sm:$0xff]
        %v4120 = vld [vmem:[%s849 + $0xd8] sm:$0xff]
        %v4121 = vld [vmem:[%s849 + $0xe0] sm:$0xff]
        %v4122 = vld [vmem:[%s849 + $0xe8] sm:$0xff]
        %v4123 = vld [vmem:[%s849 + $0xf0] sm:$0xff]
        %v4124 = vld [vmem:[%s849 + $0xf8] sm:$0xff]
        %v4125 = vld [vmem:[%s853] sm:$0xf]
        %v4127 = vlaneseq
        %v4128 = vshrl.u32 %v4127, 7
        %v4129 = vsub.s32 0, %v4128
        %v4130 = vrot.slane %v4125, %v4129
        %v4131 = vlaneseq
        %v4132 = vshrl.u32 %v4131, 7
        %v4133 = vsub.s32 1, %v4132
        %v4134 = vrot.slane %v4125, %v4133
        %v4135 = vlaneseq
        %v4136 = vshrl.u32 %v4135, 7
        %v4137 = vsub.s32 2, %v4136
        %v4138 = vrot.slane %v4125, %v4137
        %v4139 = vlaneseq
        %v4140 = vshrl.u32 %v4139, 7
        %v4141 = vsub.s32 3, %v4140
        %v4142 = vrot.slane %v4125, %v4141
        %v4179 = vunpack.c.l.b16 %v4093
        %v4180 = vunpack.c.h.b16 %v4093
        %v4181 = vunpack.c.l.b16 %v4094
        %v4182 = vunpack.c.h.b16 %v4094
        %v4183 = vunpack.c.l.b16 %v4095
        %v4184 = vunpack.c.h.b16 %v4095
        %v4185 = vunpack.c.l.b16 %v4096
        %v4186 = vunpack.c.h.b16 %v4096
        %v4187 = vunpack.c.l.b16 %v4097
        %v4188 = vunpack.c.h.b16 %v4097
        %v4189 = vunpack.c.l.b16 %v4098
        %v4190 = vunpack.c.h.b16 %v4098
        %v4191 = vunpack.c.l.b16 %v4099
        %v4192 = vunpack.c.h.b16 %v4099
        %v4193 = vunpack.c.l.b16 %v4100
        %v4194 = vunpack.c.h.b16 %v4100
        %v4195 = vunpack.c.l.b16 %v4101
        %v4196 = vunpack.c.h.b16 %v4101
        %v4197 = vunpack.c.l.b16 %v4102
        %v4198 = vunpack.c.h.b16 %v4102
        %v4199 = vunpack.c.l.b16 %v4103
        %v4200 = vunpack.c.h.b16 %v4103
        %v4201 = vunpack.c.l.b16 %v4104
        %v4202 = vunpack.c.h.b16 %v4104
        %v4203 = vunpack.c.l.b16 %v4105
        %v4204 = vunpack.c.h.b16 %v4105
        %v4205 = vunpack.c.l.b16 %v4106
        %v4206 = vunpack.c.h.b16 %v4106
        %v4207 = vunpack.c.l.b16 %v4107
        %v4208 = vunpack.c.h.b16 %v4107
        %v4209 = vunpack.c.l.b16 %v4108
        %v4210 = vunpack.c.h.b16 %v4108
        %v4211 = vunpack.c.l.b16 %v4109
        %v4212 = vunpack.c.h.b16 %v4109
        %v4213 = vunpack.c.l.b16 %v4110
        %v4214 = vunpack.c.h.b16 %v4110
        %v4215 = vunpack.c.l.b16 %v4111
        %v4216 = vunpack.c.h.b16 %v4111
        %v4217 = vunpack.c.l.b16 %v4112
        %v4218 = vunpack.c.h.b16 %v4112
        %v4219 = vunpack.c.l.b16 %v4113
        %v4220 = vunpack.c.h.b16 %v4113
        %v4221 = vunpack.c.l.b16 %v4114
        %v4222 = vunpack.c.h.b16 %v4114
        %v4223 = vunpack.c.l.b16 %v4115
        %v4224 = vunpack.c.h.b16 %v4115
        %v4225 = vunpack.c.l.b16 %v4116
        %v4226 = vunpack.c.h.b16 %v4116
        %v4227 = vunpack.c.l.b16 %v4117
        %v4228 = vunpack.c.h.b16 %v4117
        %v4229 = vunpack.c.l.b16 %v4118
        %v4230 = vunpack.c.h.b16 %v4118
        %v4231 = vunpack.c.l.b16 %v4119
        %v4232 = vunpack.c.h.b16 %v4119
        %v4233 = vunpack.c.l.b16 %v4120
        %v4234 = vunpack.c.h.b16 %v4120
        %v4235 = vunpack.c.l.b16 %v4121
        %v4236 = vunpack.c.h.b16 %v4121
        %v4237 = vunpack.c.l.b16 %v4122
        %v4238 = vunpack.c.h.b16 %v4122
        %v4239 = vunpack.c.l.b16 %v4123
        %v4240 = vunpack.c.h.b16 %v4123
        %v4241 = vunpack.c.l.b16 %v4124
        %v4242 = vunpack.c.h.b16 %v4124
        %v4243 = vpack.c.b16 %v4183, %v4179
        %v4244 = vpack.c.b16 %v4184, %v4180
        %v4245 = vpack.c.b16 %v4185, %v4181
        %v4246 = vpack.c.b16 %v4186, %v4182
        %v4247 = vpack.c.b16 %v4191, %v4187
        %v4248 = vpack.c.b16 %v4192, %v4188
        %v4249 = vpack.c.b16 %v4193, %v4189
        %v4250 = vpack.c.b16 %v4194, %v4190
        %v4251 = vpack.c.b16 %v4199, %v4195
        %v4252 = vpack.c.b16 %v4200, %v4196
        %v4253 = vpack.c.b16 %v4201, %v4197
        %v4254 = vpack.c.b16 %v4202, %v4198
        %v4255 = vpack.c.b16 %v4207, %v4203
        %v4256 = vpack.c.b16 %v4208, %v4204
        %v4257 = vpack.c.b16 %v4209, %v4205
        %v4258 = vpack.c.b16 %v4210, %v4206
        %v4259 = vpack.c.b16 %v4215, %v4211
        %v4260 = vpack.c.b16 %v4216, %v4212
        %v4261 = vpack.c.b16 %v4217, %v4213
        %v4262 = vpack.c.b16 %v4218, %v4214
        %v4263 = vpack.c.b16 %v4223, %v4219
        %v4264 = vpack.c.b16 %v4224, %v4220
        %v4265 = vpack.c.b16 %v4225, %v4221
        %v4266 = vpack.c.b16 %v4226, %v4222
        %v4267 = vpack.c.b16 %v4231, %v4227
        %v4268 = vpack.c.b16 %v4232, %v4228
        %v4269 = vpack.c.b16 %v4233, %v4229
        %v4270 = vpack.c.b16 %v4234, %v4230
        %v4271 = vpack.c.b16 %v4239, %v4235
        %v4272 = vpack.c.b16 %v4240, %v4236
        %v4273 = vpack.c.b16 %v4241, %v4237
        %v4274 = vpack.c.b16 %v4242, %v4238
        %4307 = vmatprep.subr.bf16.mxu0 %v4244
        %4308 = vmatpush1.bf16.msra.mxu0 %v4243
        %4309 = vmatprep.subr.bf16.mxu0 %v4248
        %4310 = vmatpush1.bf16.msra.mxu0 %v4247
        %4311 = vmatprep.subr.bf16.mxu0 %v4252
        %4312 = vmatpush1.bf16.msra.mxu0 %v4251
        %4313 = vmatprep.subr.bf16.mxu0 %v4256
        %4314 = vmatpush1.bf16.msra.mxu0 %v4255
        %4315 = vmatprep.subr.bf16.mxu0 %v4260
        %4316 = vmatpush1.bf16.msra.mxu0 %v4259
        %4317 = vmatprep.subr.bf16.mxu0 %v4264
        %4318 = vmatpush1.bf16.msra.mxu0 %v4263
        %4319 = vmatprep.subr.bf16.mxu0 %v4268
        %4320 = vmatpush1.bf16.msra.mxu0 %v4267
        %4321 = vmatprep.subr.bf16.mxu0 %v4272
        %4322 = vmatpush1.bf16.msra.mxu0 %v4271
        %4323 = vmatprep.subr.bf16.mxu0 0
        %4324 = vmatpush1.bf16.msra.mxu0 0
        %4325 = vmatprep.subr.bf16.mxu0 0
        %4326 = vmatpush1.bf16.msra.mxu0 0
        %4327 = vmatprep.subr.bf16.mxu0 0
        %4328 = vmatpush1.bf16.msra.mxu0 0
        %4329 = vmatprep.subr.bf16.mxu0 0
        %4330 = vmatpush1.bf16.msra.mxu0 0
        %4331 = vmatprep.subr.bf16.mxu0 0
        %4332 = vmatpush1.bf16.msra.mxu0 0
        %4333 = vmatprep.subr.bf16.mxu0 0
        %4334 = vmatpush1.bf16.msra.mxu0 0
        %4335 = vmatprep.subr.bf16.mxu0 0
        %4336 = vmatpush1.bf16.msra.mxu0 0
        %4337 = vmatprep.subr.bf16.mxu0 0
        %4338 = vmatpush1.bf16.msra.mxu0 0
        %4339 = vmatprep.mubr.bf16.mxu0 0
        %4340 = vmatmul.mubr.bf16.gmra.mrb[0].mxu0 %v4092
        %v4341 = vpop.f32.mrb[0].mxu0
        %v4342 = vadd.f32 %v4130, %v4341
        %v4343 = vpop.f32.mrb[0].mxu0
        %v4344 = vadd.f32 %v4134, %v4343
        %v4345 = vpop.f32.mrb[0].mxu0
        %v4346 = vadd.f32 %v4130, %v4345
        %v4347 = vpop.f32.mrb[0].mxu0
        %v4348 = vadd.f32 %v4134, %v4347
        %4349 = vdwg.mxu0
        %4350 = vmatprep.subr.bf16.mxu0 %v4246
        %4351 = vmatpush1.bf16.msra.mxu0 %v4245
        %4352 = vmatprep.subr.bf16.mxu0 %v4250
        %4353 = vmatpush1.bf16.msra.mxu0 %v4249
        %4354 = vmatprep.subr.bf16.mxu0 %v4254
        %4355 = vmatpush1.bf16.msra.mxu0 %v4253
        %4356 = vmatprep.subr.bf16.mxu0 %v4258
        %4357 = vmatpush1.bf16.msra.mxu0 %v4257
        %4358 = vmatprep.subr.bf16.mxu0 %v4262
        %4359 = vmatpush1.bf16.msra.mxu0 %v4261
        %4360 = vmatprep.subr.bf16.mxu0 %v4266
        %4361 = vmatpush1.bf16.msra.mxu0 %v4265
        %4362 = vmatprep.subr.bf16.mxu0 %v4270
        %4363 = vmatpush1.bf16.msra.mxu0 %v4269
        %4364 = vmatprep.subr.bf16.mxu0 %v4274
        %4365 = vmatpush1.bf16.msra.mxu0 %v4273
        %4366 = vmatprep.subr.bf16.mxu0 0
        %4367 = vmatpush1.bf16.msra.mxu0 0
        %4368 = vmatprep.subr.bf16.mxu0 0
        %4369 = vmatpush1.bf16.msra.mxu0 0
        %4370 = vmatprep.subr.bf16.mxu0 0
        %4371 = vmatpush1.bf16.msra.mxu0 0
        %4372 = vmatprep.subr.bf16.mxu0 0
        %4373 = vmatpush1.bf16.msra.mxu0 0
        %4374 = vmatprep.subr.bf16.mxu0 0
        %4375 = vmatpush1.bf16.msra.mxu0 0
        %4376 = vmatprep.subr.bf16.mxu0 0
        %4377 = vmatpush1.bf16.msra.mxu0 0
        %4378 = vmatprep.subr.bf16.mxu0 0
        %4379 = vmatpush1.bf16.msra.mxu0 0
        %4380 = vmatprep.subr.bf16.mxu0 0
        %4381 = vmatpush1.bf16.msra.mxu0 0
        %4382 = vmatprep.mubr.bf16.mxu0 0
        %4383 = vmatmul.mubr.bf16.gmra.mrb[0].mxu0 %v4092
        %v4384 = vpop.f32.mrb[0].mxu0
        %v4385 = vadd.f32 %v4138, %v4384
        %v4386 = vpop.f32.mrb[0].mxu0
        %v4387 = vadd.f32 %v4142, %v4386
        %v4388 = vpop.f32.mrb[0].mxu0
        %v4389 = vadd.f32 %v4138, %v4388
        %v4390 = vpop.f32.mrb[0].mxu0
        %v4391 = vadd.f32 %v4142, %v4390
        %4392 = vdwg.mxu0
        %v4393 = vmul.f32 %v4342, %v4342
        %v4394 = vmul.f32 %v4344, %v4344
        %v4395 = vmul.f32 %v4385, %v4385
        %v4396 = vmul.f32 %v4387, %v4387
        %v4397 = vmul.f32 %v4346, %v4346
        %v4398 = vmul.f32 %v4348, %v4348
        %v4399 = vmul.f32 %v4389, %v4389
        %v4400 = vmul.f32 %v4391, %v4391
        %v4401 = vmul.f32 %v4342, %v4393
        %v4402 = vmul.f32 %v4344, %v4394
        %v4403 = vmul.f32 %v4385, %v4395
        %v4404 = vmul.f32 %v4387, %v4396
        %v4405 = vmul.f32 %v4346, %v4397
        %v4406 = vmul.f32 %v4348, %v4398
        %v4407 = vmul.f32 %v4389, %v4399
        %v4408 = vmul.f32 %v4391, %v4400
        %v4409 = vmul.f32 %v4401, 0.044715
        %v4410 = vmul.f32 %v4402, 0.044715
        %v4411 = vmul.f32 %v4403, 0.044715
        %v4412 = vmul.f32 %v4404, 0.044715
        %v4413 = vmul.f32 %v4405, 0.044715
        %v4414 = vmul.f32 %v4406, 0.044715
        %v4415 = vmul.f32 %v4407, 0.044715
        %v4416 = vmul.f32 %v4408, 0.044715
        %v4417 = vadd.f32 %v4342, %v4409
        %v4418 = vadd.f32 %v4344, %v4410
        %v4419 = vadd.f32 %v4385, %v4411
        %v4420 = vadd.f32 %v4387, %v4412
        %v4421 = vadd.f32 %v4346, %v4413
        %v4422 = vadd.f32 %v4348, %v4414
        %v4423 = vadd.f32 %v4389, %v4415
        %v4424 = vadd.f32 %v4391, %v4416
        %v4425 = vmul.f32 %v4417, 0.7978846
        %v4426 = vmul.f32 %v4418, 0.7978846
        %v4427 = vmul.f32 %v4419, 0.7978846
        %v4428 = vmul.f32 %v4420, 0.7978846
        %v4429 = vmul.f32 %v4421, 0.7978846
        %v4430 = vmul.f32 %v4422, 0.7978846
        %v4431 = vmul.f32 %v4423, 0.7978846
        %v4432 = vmul.f32 %v4424, 0.7978846
        %v4433 = vtanh.pop %v4425
        %v4434 = vtanh.pop %v4426
        %v4435 = vtanh.pop %v4427
        %v4436 = vtanh.pop %v4428
        %v4437 = vtanh.pop %v4429
        %v4438 = vtanh.pop %v4430
        %v4439 = vtanh.pop %v4431
        %v4440 = vtanh.pop %v4432
        %v4441 = vadd.f32 %v4433, 1.0
        %v4442 = vadd.f32 %v4434, 1.0
        %v4443 = vadd.f32 %v4435, 1.0
        %v4444 = vadd.f32 %v4436, 1.0
        %v4445 = vadd.f32 %v4437, 1.0
        %v4446 = vadd.f32 %v4438, 1.0
        %v4447 = vadd.f32 %v4439, 1.0
        %v4448 = vadd.f32 %v4440, 1.0
        %v4449 = vmul.f32 %v4441, 0.5
        %v4450 = vmul.f32 %v4442, 0.5
        %v4451 = vmul.f32 %v4443, 0.5
        %v4452 = vmul.f32 %v4444, 0.5
        %v4453 = vmul.f32 %v4445, 0.5
        %v4454 = vmul.f32 %v4446, 0.5
        %v4455 = vmul.f32 %v4447, 0.5
        %v4456 = vmul.f32 %v4448, 0.5
        %v4457 = vmul.f32 %v4342, %v4449
        %v4458 = vmul.f32 %v4344, %v4450
        %v4459 = vmul.f32 %v4385, %v4451
        %v4460 = vmul.f32 %v4387, %v4452
        %v4461 = vmul.f32 %v4346, %v4453
        %v4462 = vmul.f32 %v4348, %v4454
        %v4463 = vmul.f32 %v4389, %v4455
        %v4464 = vmul.f32 %v4391, %v4456
        %v4465 = vpack.c.bf16 %v4461, %v4457
        %v4466 = vpack.c.bf16 %v4462, %v4458
        %v4467 = vpack.c.bf16 %v4463, %v4459
        %v4468 = vpack.c.bf16 %v4464, %v4460
        %v4469 = vld [vmem:[%s858] sm:$0xf]
        %v4470 = vld [vmem:[%s858 + $0x4] sm:$0xf]
        %v4471 = vld [vmem:[%s858 + $0x8] sm:$0xf]
        %v4472 = vld [vmem:[%s858 + $0xc] sm:$0xf]
        %v4473 = vld [vmem:[%s858 + $0x10] sm:$0xf]
        %v4474 = vld [vmem:[%s858 + $0x14] sm:$0xf]
        %v4475 = vld [vmem:[%s858 + $0x18] sm:$0xf]
        %v4476 = vld [vmem:[%s858 + $0x1c] sm:$0xf]
        %v4477 = vld [vmem:[%s858 + $0x20] sm:$0xf]
        %v4478 = vld [vmem:[%s858 + $0x24] sm:$0xf]
        %v4479 = vld [vmem:[%s858 + $0x28] sm:$0xf]
        %v4480 = vld [vmem:[%s858 + $0x2c] sm:$0xf]
        %v4481 = vld [vmem:[%s858 + $0x30] sm:$0xf]
        %v4482 = vld [vmem:[%s858 + $0x34] sm:$0xf]
        %v4483 = vld [vmem:[%s858 + $0x38] sm:$0xf]
        %v4484 = vld [vmem:[%s858 + $0x3c] sm:$0xf]
        %v4485 = vld [vmem:[%s858 + $0x40] sm:$0xf]
        %v4486 = vld [vmem:[%s858 + $0x44] sm:$0xf]
        %v4487 = vld [vmem:[%s858 + $0x48] sm:$0xf]
        %v4488 = vld [vmem:[%s858 + $0x4c] sm:$0xf]
        %v4489 = vld [vmem:[%s858 + $0x50] sm:$0xf]
        %v4490 = vld [vmem:[%s858 + $0x54] sm:$0xf]
        %v4491 = vld [vmem:[%s858 + $0x58] sm:$0xf]
        %v4492 = vld [vmem:[%s858 + $0x5c] sm:$0xf]
        %v4493 = vld [vmem:[%s858 + $0x60] sm:$0xf]
        %v4494 = vld [vmem:[%s858 + $0x64] sm:$0xf]
        %v4495 = vld [vmem:[%s858 + $0x68] sm:$0xf]
        %v4496 = vld [vmem:[%s858 + $0x6c] sm:$0xf]
        %v4497 = vld [vmem:[%s858 + $0x70] sm:$0xf]
        %v4498 = vld [vmem:[%s858 + $0x74] sm:$0xf]
        %v4499 = vld [vmem:[%s858 + $0x78] sm:$0xf]
        %v4500 = vld [vmem:[%s858 + $0x7c] sm:$0xf]
        %v4501 = vld [vmem:[%s858 + $0x80] sm:$0xf]
        %v4502 = vld [vmem:[%s858 + $0x84] sm:$0xf]
        %v4503 = vld [vmem:[%s858 + $0x88] sm:$0xf]
        %v4504 = vld [vmem:[%s858 + $0x8c] sm:$0xf]
        %v4505 = vld [vmem:[%s858 + $0x90] sm:$0xf]
        %v4506 = vld [vmem:[%s858 + $0x94] sm:$0xf]
        %v4507 = vld [vmem:[%s858 + $0x98] sm:$0xf]
        %v4508 = vld [vmem:[%s858 + $0x9c] sm:$0xf]
        %v4509 = vld [vmem:[%s858 + $0xa0] sm:$0xf]
        %v4510 = vld [vmem:[%s858 + $0xa4] sm:$0xf]
        %v4511 = vld [vmem:[%s858 + $0xa8] sm:$0xf]
        %v4512 = vld [vmem:[%s858 + $0xac] sm:$0xf]
        %v4513 = vld [vmem:[%s858 + $0xb0] sm:$0xf]
        %v4514 = vld [vmem:[%s858 + $0xb4] sm:$0xf]
        %v4515 = vld [vmem:[%s858 + $0xb8] sm:$0xf]
        %v4516 = vld [vmem:[%s858 + $0xbc] sm:$0xf]
        %v4517 = vld [vmem:[%s858 + $0xc0] sm:$0xf]
        %v4518 = vld [vmem:[%s858 + $0xc4] sm:$0xf]
        %v4519 = vld [vmem:[%s858 + $0xc8] sm:$0xf]
        %v4520 = vld [vmem:[%s858 + $0xcc] sm:$0xf]
        %v4521 = vld [vmem:[%s858 + $0xd0] sm:$0xf]
        %v4522 = vld [vmem:[%s858 + $0xd4] sm:$0xf]
        %v4523 = vld [vmem:[%s858 + $0xd8] sm:$0xf]
        %v4524 = vld [vmem:[%s858 + $0xdc] sm:$0xf]
        %v4525 = vld [vmem:[%s858 + $0xe0] sm:$0xf]
        %v4526 = vld [vmem:[%s858 + $0xe4] sm:$0xf]
        %v4527 = vld [vmem:[%s858 + $0xe8] sm:$0xf]
        %v4528 = vld [vmem:[%s858 + $0xec] sm:$0xf]
        %v4529 = vld [vmem:[%s858 + $0xf0] sm:$0xf]
        %v4530 = vld [vmem:[%s858 + $0xf4] sm:$0xf]
        %v4531 = vld [vmem:[%s858 + $0xf8] sm:$0xf]
        %v4532 = vld [vmem:[%s858 + $0xfc] sm:$0xf]
        %v4533 = vld [vmem:[%s861] sm:$0x1]
        %v4535 = vlaneseq
        %v4536 = vshrl.u32 %v4535, 7
        %v4537 = vsub.s32 0, %v4536
        %v4538 = vrot.slane %v4533, %v4537
        %v4604 = vunpack.c.l.b16 %v4469
        %v4605 = vunpack.c.l.b16 %v4470
        %v4606 = vunpack.c.l.b16 %v4471
        %v4607 = vunpack.c.l.b16 %v4472
        %v4608 = vunpack.c.l.b16 %v4473
        %v4609 = vunpack.c.l.b16 %v4474
        %v4610 = vunpack.c.l.b16 %v4475
        %v4611 = vunpack.c.l.b16 %v4476
        %v4612 = vunpack.c.l.b16 %v4477
        %v4613 = vunpack.c.l.b16 %v4478
        %v4614 = vunpack.c.l.b16 %v4479
        %v4615 = vunpack.c.l.b16 %v4480
        %v4616 = vunpack.c.l.b16 %v4481
        %v4617 = vunpack.c.l.b16 %v4482
        %v4618 = vunpack.c.l.b16 %v4483
        %v4619 = vunpack.c.l.b16 %v4484
        %v4620 = vunpack.c.l.b16 %v4485
        %v4621 = vunpack.c.l.b16 %v4486
        %v4622 = vunpack.c.l.b16 %v4487
        %v4623 = vunpack.c.l.b16 %v4488
        %v4624 = vunpack.c.l.b16 %v4489
        %v4625 = vunpack.c.l.b16 %v4490
        %v4626 = vunpack.c.l.b16 %v4491
        %v4627 = vunpack.c.l.b16 %v4492
        %v4628 = vunpack.c.l.b16 %v4493
        %v4629 = vunpack.c.l.b16 %v4494
        %v4630 = vunpack.c.l.b16 %v4495
        %v4631 = vunpack.c.l.b16 %v4496
        %v4632 = vunpack.c.l.b16 %v4497
        %v4633 = vunpack.c.l.b16 %v4498
        %v4634 = vunpack.c.l.b16 %v4499
        %v4635 = vunpack.c.l.b16 %v4500
        %v4636 = vunpack.c.l.b16 %v4501
        %v4637 = vunpack.c.l.b16 %v4502
        %v4638 = vunpack.c.l.b16 %v4503
        %v4639 = vunpack.c.l.b16 %v4504
        %v4640 = vunpack.c.l.b16 %v4505
        %v4641 = vunpack.c.l.b16 %v4506
        %v4642 = vunpack.c.l.b16 %v4507
        %v4643 = vunpack.c.l.b16 %v4508
        %v4644 = vunpack.c.l.b16 %v4509
        %v4645 = vunpack.c.l.b16 %v4510
        %v4646 = vunpack.c.l.b16 %v4511
        %v4647 = vunpack.c.l.b16 %v4512
        %v4648 = vunpack.c.l.b16 %v4513
        %v4649 = vunpack.c.l.b16 %v4514
        %v4650 = vunpack.c.l.b16 %v4515
        %v4651 = vunpack.c.l.b16 %v4516
        %v4652 = vunpack.c.l.b16 %v4517
        %v4653 = vunpack.c.l.b16 %v4518
        %v4654 = vunpack.c.l.b16 %v4519
        %v4655 = vunpack.c.l.b16 %v4520
        %v4656 = vunpack.c.l.b16 %v4521
        %v4657 = vunpack.c.l.b16 %v4522
        %v4658 = vunpack.c.l.b16 %v4523
        %v4659 = vunpack.c.l.b16 %v4524
        %v4660 = vunpack.c.l.b16 %v4525
        %v4661 = vunpack.c.l.b16 %v4526
        %v4662 = vunpack.c.l.b16 %v4527
        %v4663 = vunpack.c.l.b16 %v4528
        %v4664 = vunpack.c.l.b16 %v4529
        %v4665 = vunpack.c.l.b16 %v4530
        %v4666 = vunpack.c.l.b16 %v4531
        %v4667 = vunpack.c.l.b16 %v4532
        %v4668 = vpack.c.b16 %v4605, %v4604
        %v4669 = vpack.c.b16 %v4607, %v4606
        %v4670 = vpack.c.b16 %v4609, %v4608
        %v4671 = vpack.c.b16 %v4611, %v4610
        %v4672 = vpack.c.b16 %v4613, %v4612
        %v4673 = vpack.c.b16 %v4615, %v4614
        %v4674 = vpack.c.b16 %v4617, %v4616
        %v4675 = vpack.c.b16 %v4619, %v4618
        %v4676 = vpack.c.b16 %v4621, %v4620
        %v4677 = vpack.c.b16 %v4623, %v4622
        %v4678 = vpack.c.b16 %v4625, %v4624
        %v4679 = vpack.c.b16 %v4627, %v4626
        %v4680 = vpack.c.b16 %v4629, %v4628
        %v4681 = vpack.c.b16 %v4631, %v4630
        %v4682 = vpack.c.b16 %v4633, %v4632
        %v4683 = vpack.c.b16 %v4635, %v4634
        %v4684 = vpack.c.b16 %v4637, %v4636
        %v4685 = vpack.c.b16 %v4639, %v4638
        %v4686 = vpack.c.b16 %v4641, %v4640
        %v4687 = vpack.c.b16 %v4643, %v4642
        %v4688 = vpack.c.b16 %v4645, %v4644
        %v4689 = vpack.c.b16 %v4647, %v4646
        %v4690 = vpack.c.b16 %v4649, %v4648
        %v4691 = vpack.c.b16 %v4651, %v4650
        %v4692 = vpack.c.b16 %v4653, %v4652
        %v4693 = vpack.c.b16 %v4655, %v4654
        %v4694 = vpack.c.b16 %v4657, %v4656
        %v4695 = vpack.c.b16 %v4659, %v4658
        %v4696 = vpack.c.b16 %v4661, %v4660
        %v4697 = vpack.c.b16 %v4663, %v4662
        %v4698 = vpack.c.b16 %v4665, %v4664
        %v4699 = vpack.c.b16 %v4667, %v4666
        %4732 = vmatprep.subr.bf16.mxu0 0
        %4733 = vmatpush1.bf16.msra.mxu0 %v4668
        %4734 = vmatprep.subr.bf16.mxu0 0
        %4735 = vmatpush1.bf16.msra.mxu0 %v4669
        %4736 = vmatprep.subr.bf16.mxu0 0
        %4737 = vmatpush1.bf16.msra.mxu0 %v4670
        %4738 = vmatprep.subr.bf16.mxu0 0
        %4739 = vmatpush1.bf16.msra.mxu0 %v4671
        %4740 = vmatprep.subr.bf16.mxu0 0
        %4741 = vmatpush1.bf16.msra.mxu0 %v4672
        %4742 = vmatprep.subr.bf16.mxu0 0
        %4743 = vmatpush1.bf16.msra.mxu0 %v4673
        %4744 = vmatprep.subr.bf16.mxu0 0
        %4745 = vmatpush1.bf16.msra.mxu0 %v4674
        %4746 = vmatprep.subr.bf16.mxu0 0
        %4747 = vmatpush1.bf16.msra.mxu0 %v4675
        %4748 = vmatprep.subr.bf16.mxu0 0
        %4749 = vmatpush1.bf16.msra.mxu0 %v4676
        %4750 = vmatprep.subr.bf16.mxu0 0
        %4751 = vmatpush1.bf16.msra.mxu0 %v4677
        %4752 = vmatprep.subr.bf16.mxu0 0
        %4753 = vmatpush1.bf16.msra.mxu0 %v4678
        %4754 = vmatprep.subr.bf16.mxu0 0
        %4755 = vmatpush1.bf16.msra.mxu0 %v4679
        %4756 = vmatprep.subr.bf16.mxu0 0
        %4757 = vmatpush1.bf16.msra.mxu0 %v4680
        %4758 = vmatprep.subr.bf16.mxu0 0
        %4759 = vmatpush1.bf16.msra.mxu0 %v4681
        %4760 = vmatprep.subr.bf16.mxu0 0
        %4761 = vmatpush1.bf16.msra.mxu0 %v4682
        %4762 = vmatprep.subr.bf16.mxu0 0
        %4763 = vmatpush1.bf16.msra.mxu0 %v4683
        %4764 = vmatprep.mubr.bf16.mxu0 %v4466
        %4765 = vmatmul.mubr.bf16.gmra.mrb[0].mxu0 %v4465
        %v4766 = vpop.f32.mrb[0].mxu0
        %v4767 = vadd.f32 %v4538, %v4766
        %v4768 = vpop.f32.mrb[0].mxu0
        %v4769 = vpop.f32.mrb[0].mxu0
        %v4770 = vadd.f32 %v4538, %v4769
        %v4771 = vpop.f32.mrb[0].mxu0
        %4772 = vdwg.mxu0
        %4773 = vmatprep.subr.bf16.mxu0 0
        %4774 = vmatpush1.bf16.msra.mxu0 %v4684
        %4775 = vmatprep.subr.bf16.mxu0 0
        %4776 = vmatpush1.bf16.msra.mxu0 %v4685
        %4777 = vmatprep.subr.bf16.mxu0 0
        %4778 = vmatpush1.bf16.msra.mxu0 %v4686
        %4779 = vmatprep.subr.bf16.mxu0 0
        %4780 = vmatpush1.bf16.msra.mxu0 %v4687
        %4781 = vmatprep.subr.bf16.mxu0 0
        %4782 = vmatpush1.bf16.msra.mxu0 %v4688
        %4783 = vmatprep.subr.bf16.mxu0 0
        %4784 = vmatpush1.bf16.msra.mxu0 %v4689
        %4785 = vmatprep.subr.bf16.mxu0 0
        %4786 = vmatpush1.bf16.msra.mxu0 %v4690
        %4787 = vmatprep.subr.bf16.mxu0 0
        %4788 = vmatpush1.bf16.msra.mxu0 %v4691
        %4789 = vmatprep.subr.bf16.mxu0 0
        %4790 = vmatpush1.bf16.msra.mxu0 %v4692
        %4791 = vmatprep.subr.bf16.mxu0 0
        %4792 = vmatpush1.bf16.msra.mxu0 %v4693
        %4793 = vmatprep.subr.bf16.mxu0 0
        %4794 = vmatpush1.bf16.msra.mxu0 %v4694
        %4795 = vmatprep.subr.bf16.mxu0 0
        %4796 = vmatpush1.bf16.msra.mxu0 %v4695
        %4797 = vmatprep.subr.bf16.mxu0 0
        %4798 = vmatpush1.bf16.msra.mxu0 %v4696
        %4799 = vmatprep.subr.bf16.mxu0 0
        %4800 = vmatpush1.bf16.msra.mxu0 %v4697
        %4801 = vmatprep.subr.bf16.mxu0 0
        %4802 = vmatpush1.bf16.msra.mxu0 %v4698
        %4803 = vmatprep.subr.bf16.mxu0 0
        %4804 = vmatpush1.bf16.msra.mxu0 %v4699
        %4805 = vmatprep.mubr.bf16.mxu0 %v4468
        %4806 = vmatmul.mubr.bf16.gmra.mrb[0].mxu0 %v4467
        %v4807 = vpop.f32.mrb[0].mxu0
        %v4808 = vadd.f32 %v4767, %v4807
        %v4809 = vpop.f32.mrb[0].mxu0
        %v4810 = vpop.f32.mrb[0].mxu0
        %v4811 = vadd.f32 %v4770, %v4810
        %v4812 = vpop.f32.mrb[0].mxu0
        %4813 = vdwg.mxu0
        %v4814 = vadd.f32 %v4090, %v4808
        %v4815 = vadd.f32 %v4091, %v4811
        %v4816 = vld [vmem:[%s864] sm:$0x1]
        %v4817 = vld [vmem:[%s867] sm:$0x1]
        %4818 = vadd.xlane.f32.xlu0 %v4814
        %v4819 = vpop.xlane.xlu0 %4818
        %4820 = vadd.xlane.f32.xlu0 %v4815
        %v4821 = vpop.xlane.xlu0 %4820
        %v4822 = vmul.f32 %v4819, %v4057
        %v4823 = vmul.f32 %v4821, %v4057
        %v4824 = vsub.f32 %v4814, %v4822
        %v4825 = vsub.f32 %v4815, %v4823
        %v4826 = vmul.f32 %v4824, %v4824
        %v4827 = vmul.f32 %v4825, %v4825
        %4828 = vadd.xlane.f32.xlu0 %v4826
        %v4829 = vpop.xlane.xlu0 %4828
        %4830 = vadd.xlane.f32.xlu0 %v4827
        %v4831 = vpop.xlane.xlu0 %4830
        %v4832 = vmul.f32 %v4829, %v4057
        %v4833 = vmul.f32 %v4831, %v4057
        %v4834 = vadd.f32 %v4832, 1e-12
        %v4835 = vadd.f32 %v4833, 1e-12
        %v4836 = vrsqrt.pop %v4834
        %v4837 = vrsqrt.pop %v4835
        %v4838 = vmul.f32 %v4824, %v4836
        %v4839 = vmul.f32 %v4825, %v4837
        %v4841 = vlaneseq
        %v4842 = vshrl.u32 %v4841, 7
        %v4843 = vsub.s32 0, %v4842
        %v4844 = vrot.slane %v4816, %v4843
        %v4846 = vmul.f32 %v4838, %v4844
        %v4847 = vmul.f32 %v4839, %v4844
        %v4849 = vlaneseq
        %v4850 = vshrl.u32 %v4849, 7
        %v4851 = vsub.s32 0, %v4850
        %v4852 = vrot.slane %v4817, %v4851
        %v4854 = vadd.f32 %v4846, %v4852
        %v4855 = vadd.f32 %v4847, %v4852
        %4856 = vst [vmem:[#allocation2] sm:$0xff] %v4854
        %4857 = vst [vmem:[#allocation2 + $0x8] sm:$0xff] %v4855
        %p4858 = scmp.eq.s32.totalorder %s32, 1
        // Predicated region
        $region105: #{tpu_custom_call.1} parent=99 // pred_check
          %p4859 = pneg %p4858
        $region106: #{tpu_custom_call.1} parent=99 // pred_check_branch
          %4861 = sbr.rel (%p4859) target = $region108
        $region107: #{tpu_custom_call.1} parent=99 // pred_region
          %4862 = vst [vmem:[#allocation3] sm:$0xff] %v4854
          %4863 = vst [vmem:[#allocation3 + $0x8] sm:$0xff] %v4855
        $region108: #{tpu_custom_call.1} parent=99 // pred_fallthru
          _
        // Predicated region
        $region109: #{tpu_custom_call.1} parent=99 // pred_check
          %p4864 = pneg %p545
        $region110: #{tpu_custom_call.1} parent=99 // pred_check_branch
          %4866 = sbr.rel (%p4864) target = $region112
        $region111: #{tpu_custom_call.1} parent=99 // pred_region
          %s4868 = ssub.s32 256, 256
          %4869 = vsyncadd [#allocation4], %s4868
          %s4870 = sshll.u32 [#allocation3], 4
          %s4871 = int_to_ptr.vmem [resolvable:$true] %s4870
          %4876 = dma.vmem_to_hbm [thread:$0]  %s4871, 256, %s20, [#allocation4], 128, 128, 8
        $region112: #{tpu_custom_call.1} parent=99 // pred_fallthru
          _
        // Predicated region
        $region113: #{tpu_custom_call.1} parent=99 // pred_check
          %p4877 = pneg %p545
        $region114: #{tpu_custom_call.1} parent=99 // pred_check_branch
          %4879 = sbr.rel (%p4877) target = $region116
        $region115: #{tpu_custom_call.1} parent=99 // pred_region
          %4880 = dma.done [#allocation4], 256
        $region116: #{tpu_custom_call.1} parent=99 // pred_fallthru
          _
      $region100: #{tpu_custom_call.1} parent=5 // pred_fallthru
        _
      %p4881 = scmp.le.s32.totalorder 2, %s27
      // Predicated region
      $region117: #{tpu_custom_call.1} parent=5 // pred_check
        %p4882 = pneg %p4881
      $region118: #{tpu_custom_call.1} parent=5 // pred_check_branch
        %4884 = sbr.rel (%p4882) target = $region120
      $region119: #{tpu_custom_call.1} parent=5 // pred_region
        %s4885 = ssub.s32 %s27, 2
      $region120: #{tpu_custom_call.1} parent=5 // pred_fallthru
        _
    $region6: #{tpu_custom_call.1} parent=1 // loop_footer
      %s31 = sadd.s32 1, %s27
    $region7: #{tpu_custom_call.1} parent=1 // loop_footer_branch
      %26 = sbr.rel target = $region3
    $region8: #{tpu_custom_call.1} parent=1 // loop_exit
      _
    %4886 = vsyncpa [#allocation4], 1
    %s4887 = scalar_lea.sflag [#allocation4], 1
    %4888 = vsyncpa %s4887, 1

</llo_original>
